<compile_context>
chip_gen: v6e
topology: v6e:2x2x1
jax: 0.10.0
libtpu: 0.0.40
codegen_flags: <defaults>
</compile_context>

<pallas_src>
import functools

import jax
import jax.numpy as jnp
from jax.experimental import pallas as pl
from jax.experimental.pallas import tpu as pltpu

EXPANSION = 4

# Tile maxima: 256-aligned N/K for the v6e/v7x 256x256 MXU; tn<=256 keeps at
# least 2 parallel output tiles for v7x's 2 TensorCores on realistic layers.
_TM_MAX, _TN_MAX, _TK_MAX = 256, 256, 512
# Explicit scoped-VMEM budget: raises v5e's 16 MiB default, matches the 32 MiB
# default on v6e, and leaves headroom on v7x's 64 MiB physical VMEM.
_VMEM_LIMIT_BYTES = 32 * 1024 * 1024


def _round_up(x, m):
    return ((x + m - 1) // m) * m


def _pad2(a, rows, cols):
    r, c = a.shape
    if r == rows and c == cols:
        return a
    return jnp.pad(a, ((0, rows - r), (0, cols - c)))


def _kinv_spec(block_shape, index_map):
    # k-invariant / once-per-output-tile operands: single-buffered to free VMEM
    # for the streaming A/B inputs (falls back to default buffering on older jax).
    if hasattr(pl, "Buffered"):
        return pl.BlockSpec(block_shape, index_map, pipeline_mode=pl.Buffered(1))
    return pl.BlockSpec(block_shape, index_map)


# ---------------------------------------------------------------------------
# Pallas kernel 1: tiled matmul with fused BN scale/shift (+residual) (+ReLU)
# Used for the 1x1 convolutions (conv1, conv3, downsample).
# ---------------------------------------------------------------------------
def _make_mm_kernel(has_res: bool, relu: bool):
    def kernel(*refs):
        if has_res:
            x_ref, w_ref, s_ref, b_ref, r_ref, o_ref, acc_ref = refs
        else:
            x_ref, w_ref, s_ref, b_ref, o_ref, acc_ref = refs
            r_ref = None

        k = pl.program_id(2)

        @pl.when(k == 0)
        def _():
            acc_ref[...] = jnp.zeros_like(acc_ref)

        acc_ref[...] += jnp.dot(x_ref[...], w_ref[...],
                                preferred_element_type=jnp.float32)

        @pl.when(k == pl.num_programs(2) - 1)
        def _():
            out = acc_ref[...] * s_ref[...] + b_ref[...]
            if has_res:
                out = out + r_ref[...].astype(jnp.float32)
            if relu:
                out = jnp.maximum(out, 0.0)
            o_ref[...] = out.astype(o_ref.dtype)

    return kernel


def matmul_bn_act(x, w, scale, shift, residual=None, relu=True,
                  out_dtype=jnp.bfloat16):
    """act((x @ w) * scale + shift [+ residual]) -- bf16 operands, f32 accum."""
    M, K = x.shape
    K2, Nc = w.shape
    assert K == K2

    tm = min(_TM_MAX, _round_up(M, 8))
    tn = min(_TN_MAX, _round_up(Nc, 128))
    if K <= _TK_MAX:
        tk, Kp = K, K                      # single k-step, no K padding waste
    else:
        tk = _TK_MAX
        Kp = _round_up(K, tk)
    Mp = _round_up(M, tm)
    Np = _round_up(Nc, tn)

    xp = _pad2(x.astype(jnp.bfloat16), Mp, Kp)
    wp = _pad2(w.astype(jnp.bfloat16), Kp, Np)
    sp = jnp.pad(scale.astype(jnp.float32), (0, Np - Nc),
                 constant_values=1.0).reshape(1, Np)
    bp = jnp.pad(shift.astype(jnp.float32), (0, Np - Nc)).reshape(1, Np)

    has_res = residual is not None
    args = [xp, wp, sp, bp]
    in_specs = [
        pl.BlockSpec((tm, tk), lambda i, j, k: (i, k)),
        pl.BlockSpec((tk, tn), lambda i, j, k: (k, j)),
        _kinv_spec((1, tn), lambda i, j, k: (0, j)),
        _kinv_spec((1, tn), lambda i, j, k: (0, j)),
    ]
    if has_res:
        args.append(_pad2(residual.astype(jnp.bfloat16), Mp, Np))
        in_specs.append(_kinv_spec((tm, tn), lambda i, j, k: (i, j)))

    out = pl.pallas_call(
        _make_mm_kernel(has_res, relu),
        out_shape=jax.ShapeDtypeStruct((Mp, Np), out_dtype),
        grid_spec=pltpu.PrefetchScalarGridSpec(
            num_scalar_prefetch=0,
            grid=(Mp // tm, Np // tn, Kp // tk),
            in_specs=in_specs,
            out_specs=pl.BlockSpec((tm, tn), lambda i, j, k: (i, j)),
            scratch_shapes=[pltpu.VMEM((tm, tn), jnp.float32)],
        ),
        compiler_params=pltpu.CompilerParams(
            dimension_semantics=("parallel", "parallel", "arbitrary"),
            vmem_limit_bytes=_VMEM_LIMIT_BYTES),
    )(*args)
    return out[:M, :Nc]


# ---------------------------------------------------------------------------
# Pallas kernel 2: direct 3x3 conv + BN + ReLU (no im2col materialization).
# Input is phase-decomposed (space-to-depth by the stride) so in-kernel window
# slicing is plain (unstrided) static slicing of the VMEM-resident tile.
# ---------------------------------------------------------------------------
def _make_conv3x3_kernel(stride, KH, KW, Hout, Wout, Cin, relu):
    HW = Hout * Wout

    def kernel(x_ref, w_ref, s_ref, b_ref, o_ref):
        tn = o_ref.shape[1]
        acc = jnp.zeros((HW, tn), jnp.float32)
        for kh in range(KH):
            for kw in range(KW):
                ph = (kh % stride) * stride + (kw % stride)
                a, b = kh // stride, kw // stride
                win = x_ref[ph, a:a + Hout, b:b + Wout, :]        # (Hout,Wout,Cin)
                win = win.reshape(HW, Cin)
                wmat = w_ref[(kh * KW + kw) * Cin:(kh * KW + kw + 1) * Cin, :]
                acc = acc + jnp.dot(win, wmat,
                                    preferred_element_type=jnp.float32)
        out = acc * s_ref[...] + b_ref[...]
        if relu:
            out = jnp.maximum(out, 0.0)
        o_ref[...] = out.astype(o_ref.dtype)

    return kernel


def conv3x3_bn_act(x_nhwc, p, stride, relu=True, out_dtype=jnp.bfloat16):
    """3x3 conv (pad=1, given stride) + folded BN (+ReLU); NHWC in/out."""
    N, H, W, Cin = x_nhwc.shape
    KH = KW = 3
    pad = 1
    s = stride
    Hout = (H + 2 * pad - KH) // s + 1
    Wout = (W + 2 * pad - KW) // s + 1
    Cout = p['w'].shape[1]

    # Phase decomposition of the padded input (total data ~1x, not 9x im2col).
    Hreq = Hout + (KH - 1) // s
    Wreq = Wout + (KW - 1) // s
    x_pad = jnp.pad(x_nhwc.astype(jnp.bfloat16),
                    ((0, 0), (pad, pad), (pad, pad), (0, 0)))
    phases = []
    for prow in range(s):
        for pcol in range(s):
            t = x_pad[:, prow::s, pcol::s, :]
            t = t[:, :Hreq, :Wreq, :]
            t = jnp.pad(t, ((0, 0), (0, Hreq - t.shape[1]),
                            (0, Wreq - t.shape[2]), (0, 0)))
            phases.append(t)
    x_ph = jnp.stack(phases, axis=1).reshape(N * s * s, Hreq, Wreq, Cin)

    tn = min(_TN_MAX, _round_up(Cout, 128))
    Coutp = _round_up(Cout, tn)
    wp = jnp.pad(p['w'].astype(jnp.bfloat16), ((0, 0), (0, Coutp - Cout)))
    sp = jnp.pad(p['scale'].astype(jnp.float32), (0, Coutp - Cout),
                 constant_values=1.0).reshape(1, Coutp)
    bp = jnp.pad(p['shift'].astype(jnp.float32),
                 (0, Coutp - Cout)).reshape(1, Coutp)

    HW = Hout * Wout
    out = pl.pallas_call(
        _make_conv3x3_kernel(s, KH, KW, Hout, Wout, Cin, relu),
        out_shape=jax.ShapeDtypeStruct((N * HW, Coutp), out_dtype),
        grid_spec=pltpu.PrefetchScalarGridSpec(
            num_scalar_prefetch=0,
            grid=(N, Coutp // tn),
            in_specs=[
                pl.BlockSpec((s * s, Hreq, Wreq, Cin),
                             lambda n, j: (n, 0, 0, 0)),
                pl.BlockSpec((KH * KW * Cin, tn), lambda n, j: (0, j)),
                pl.BlockSpec((1, tn), lambda n, j: (0, j)),
                pl.BlockSpec((1, tn), lambda n, j: (0, j)),
            ],
            out_specs=pl.BlockSpec((HW, tn), lambda n, j: (n, j)),
        ),
        compiler_params=pltpu.CompilerParams(
            dimension_semantics=("parallel", "parallel"),
            vmem_limit_bytes=_VMEM_LIMIT_BYTES),
    )(x_ph, wp, sp, bp)
    out = out[:, :Cout]
    return out.reshape(N, Hout, Wout, Cout)


def conv1x1_bn_act(x_nhwc, p, stride=1, residual=None, relu=True,
                   out_dtype=jnp.bfloat16):
    """1x1 conv (optionally strided) + folded BN (+residual) (+ReLU)."""
    if stride != 1:
        x_nhwc = x_nhwc[:, ::stride, ::stride, :]
    N, H, W, Cin = x_nhwc.shape
    xm = x_nhwc.reshape(N * H * W, Cin)
    rm = None
    if residual is not None:
        rm = residual.reshape(N * H * W, residual.shape[-1])
    out = matmul_bn_act(xm, p['w'], p['scale'], p['shift'],
                        residual=rm, relu=relu, out_dtype=out_dtype)
    return out.reshape(N, H, W, out.shape[-1])


# ---------------------------------------------------------------------------
# Parameter init (deterministic) + one-time prefolding into kernel layout
# ---------------------------------------------------------------------------
def _conv_init(key, cout, cin, kh, kw):
    fan_out = cout * kh * kw
    std = (2.0 / fan_out) ** 0.5
    return std * jax.random.normal(key, (cout, cin, kh, kw), jnp.float32)


def _bn_init(c):
    return dict(gamma=jnp.ones((c,), jnp.float32),
                beta=jnp.zeros((c,), jnp.float32),
                mean=jnp.zeros((c,), jnp.float32),
                var=jnp.ones((c,), jnp.float32))


def _fold_bn(bn, eps=1e-5):
    scale = bn['gamma'] / jnp.sqrt(bn['var'] + eps)
    shift = bn['beta'] - bn['mean'] * scale
    return scale.astype(jnp.float32), shift.astype(jnp.float32)


def init_bottleneck_raw(key, inplanes, planes, stride):
    k1, k2, k3, k4 = jax.random.split(key, 4)
    out_ch = planes * EXPANSION
    raw = {'conv1_w': _conv_init(k1, planes, inplanes, 1, 1), 'bn1': _bn_init(planes),
           'conv2_w': _conv_init(k2, planes, planes, 3, 3), 'bn2': _bn_init(planes),
           'conv3_w': _conv_init(k3, out_ch, planes, 1, 1), 'bn3': _bn_init(out_ch)}
    if stride != 1 or inplanes != out_ch:
        raw['ds_w'] = _conv_init(k4, out_ch, inplanes, 1, 1)
        raw['ds_bn'] = _bn_init(out_ch)
    return raw


def prepare_params(raw):
    """Fold BN, repack weights to (K, Cout) matmul layout, cast to bf16 (once)."""
    def pack1x1(w, bn):
        s, b = _fold_bn(bn)
        return {'w': jnp.transpose(w[:, :, 0, 0], (1, 0)).astype(jnp.bfloat16),
                'scale': s, 'shift': b}

    def pack3x3(w, bn):
        s, b = _fold_bn(bn)
        cout, cin, kh, kw = w.shape
        wm = jnp.transpose(w, (2, 3, 1, 0)).reshape(kh * kw * cin, cout)
        return {'w': wm.astype(jnp.bfloat16), 'scale': s, 'shift': b}

    p = {'conv1': pack1x1(raw['conv1_w'], raw['bn1']),
         'conv2': pack3x3(raw['conv2_w'], raw['bn2']),
         'conv3': pack1x1(raw['conv3_w'], raw['bn3'])}
    if 'ds_w' in raw:
        p['downsample'] = pack1x1(raw['ds_w'], raw['ds_bn'])
    return p


# ---------------------------------------------------------------------------
# Bottleneck forward (jitted; NCHW in / NCHW out, matching PyTorch)
# ---------------------------------------------------------------------------
@functools.partial(jax.jit, static_argnames=("stride",))
def bottleneck_forward(params, x_nchw, *, stride):
    x = jnp.transpose(x_nchw, (0, 2, 3, 1)).astype(jnp.float32)     # NHWC
    # conv1 (1x1) -> bn1 -> relu
    out = conv1x1_bn_act(x, params['conv1'], stride=1, relu=True)
    # conv2 (3x3, stride, pad=1) -> bn2 -> relu
    out = conv3x3_bn_act(out, params['conv2'], stride=stride, relu=True)
    # residual branch
    if 'downsample' in params:
        residual = conv1x1_bn_act(x, params['downsample'], stride=stride,
                                  relu=False)
    else:
        residual = x.astype(jnp.bfloat16)
    # conv3 (1x1) -> bn3 -> (+residual) -> relu, fused in one Pallas epilogue
    out = conv1x1_bn_act(out, params['conv3'], stride=1, residual=residual,
                         relu=True, out_dtype=jnp.float32)
    return jnp.transpose(out, (0, 3, 1, 2))                         # NCHW


# ---------------------------------------------------------------------------
# Pure-JAX reference (same eval-mode BN fold) for correctness checking
# ---------------------------------------------------------------------------
def ref_bottleneck(raw, x_nchw, stride):
    def conv(x, w, s, pad):
        return jax.lax.conv_general_dilated(
            x, w, window_strides=(s, s), padding=[(pad, pad), (pad, pad)],
            dimension_numbers=('NCHW', 'OIHW', 'NCHW'))

    def bn(x, bnp):
        sc, sh = _fold_bn(bnp)
        return x * sc[None, :, None, None] + sh[None, :, None, None]

    out = jax.nn.relu(bn(conv(x_nchw, raw['conv1_w'], 1, 0), raw['bn1']))
    out = jax.nn.relu(bn(conv(out, raw['conv2_w'], stride, 1), raw['bn2']))
    out = bn(conv(out, raw['conv3_w'], 1, 0), raw['bn3'])
    if 'ds_w' in raw:
        residual = bn(conv(x_nchw, raw['ds_w'], stride, 0), raw['ds_bn'])
    else:
        residual = x_nchw
    return jax.nn.relu(out + residual)


if __name__ == "__main__":
    root = jax.random.PRNGKey(0)
    cases = [
        (32, 16, 2),   # stride-2 bottleneck with 1x1 downsample on the residual
        (64, 16, 1),   # identity-residual bottleneck (inplanes == planes*4)
    ]
    for idx, (inplanes, planes, stride) in enumerate(cases):
        kp, kx = jax.random.split(jax.random.fold_in(root, idx))
        raw = init_bottleneck_raw(kp, inplanes, planes, stride)
        params = prepare_params(raw)
        x = jax.random.normal(kx, (2, inplanes, 16, 16), jnp.float32)
        y = bottleneck_forward(params, x, stride=stride)
        y = jax.block_until_ready(y)
        ref = ref_bottleneck(raw, x, stride)
        assert y.shape == ref.shape, (y.shape, ref.shape)
        assert bool(jnp.all(jnp.isfinite(y)))
        err = float(jnp.max(jnp.abs(y - ref)))
        tol = 0.05 * float(jnp.max(jnp.abs(ref))) + 0.1   # bf16 operand tolerance
        assert err <= tol, (idx, err, tol)
    print("KERNEL_OK")
</pallas_src>

<mosaic_0001>
module attributes {stable_mosaic.version = 11 : i64} {
  func.func @kernel(%arg0: i32, %arg1: i32, %arg2: i32, %arg3: memref<256x32xbf16, #tpu.memory_space<vmem>>, %arg4: memref<32x128xbf16, #tpu.memory_space<vmem>>, %arg5: memref<1x128xf32, #tpu.memory_space<vmem>>, %arg6: memref<1x128xf32, #tpu.memory_space<vmem>>, %arg7: memref<256x128xbf16, #tpu.memory_space<vmem>>, %arg8: memref<256x128xf32, #tpu.memory_space<vmem>>) attributes {dimension_semantics = [#tpu.dimension_semantics<parallel>, #tpu.dimension_semantics<parallel>, #tpu.dimension_semantics<arbitrary>], iteration_bounds = array<i64: 2, 1, 1>, scalar_prefetch = 0 : i64, scratch_operands = 1 : i64, tpu.core_type = #tpu.core_type<tc>, window_params = [{transform_indices = @transform_0, window_bounds = array<i64: 256, 32>}, {transform_indices = @transform_1, window_bounds = array<i64: 32, 128>}, {pipeline_mode = #tpu.pipeline_mode<synchronous>, transform_indices = @transform_2, window_bounds = array<i64: 1, 128>}, {pipeline_mode = #tpu.pipeline_mode<synchronous>, transform_indices = @transform_3, window_bounds = array<i64: 1, 128>}, {transform_indices = @transform_4, window_bounds = array<i64: 256, 128>}]} {
    %c0_i32 = arith.constant 0 : i32
    %0 = arith.cmpi eq, %arg2, %c0_i32 : i32
    %1 = arith.extui %0 : i1 to i32
    %c0_i32_0 = arith.constant 0 : i32
    %2 = arith.cmpi ne, %1, %c0_i32_0 : i32
    scf.if %2 {
      %cst_10 = arith.constant 0.000000e+00 : f32
      %12 = vector.broadcast %cst_10 : f32 to vector<256x128xf32>
      %c0_11 = arith.constant 0 : index
      %c0_12 = arith.constant 0 : index
      %13 = vector.load %arg8[%c0_11, %c0_12] : memref<256x128xf32, #tpu.memory_space<vmem>>, vector<256x128xf32>
      tpu.vector_store %arg8[%c0_11, %c0_12], %12 {strides = array<i32>} : memref<256x128xf32, #tpu.memory_space<vmem>>, vector<256x128xf32>,
    } else {
    }
    %c0 = arith.constant 0 : index
    %c0_1 = arith.constant 0 : index
    %3 = vector.load %arg8[%c0, %c0_1] : memref<256x128xf32, #tpu.memory_space<vmem>>, vector<256x128xf32>
    %c0_2 = arith.constant 0 : index
    %c0_3 = arith.constant 0 : index
    %4 = vector.load %arg3[%c0_2, %c0_3] : memref<256x32xbf16, #tpu.memory_space<vmem>>, vector<256x32xbf16>
    %c0_4 = arith.constant 0 : index
    %c0_5 = arith.constant 0 : index
    %5 = vector.load %arg4[%c0_4, %c0_5] : memref<32x128xbf16, #tpu.memory_space<vmem>>, vector<32x128xbf16>
    %cst = arith.constant dense<0.000000e+00> : vector<256x128xf32>
    %6 = tpu.matmul %4, %5, %cst {dimension_numbers = #tpu.dot_dimension_numbers<[1], [0], [0], [1], [0, 0, 1, 1], [], []>} : vector<256x32xbf16>, vector<32x128xbf16>, vector<256x128xf32> -> vector<256x128xf32>
    %7 = arith.addf %3, %6 : vector<256x128xf32>
    %c0_6 = arith.constant 0 : index
    %c0_7 = arith.constant 0 : index
    %8 = vector.load %arg8[%c0_6, %c0_7] : memref<256x128xf32, #tpu.memory_space<vmem>>, vector<256x128xf32>
    tpu.vector_store %arg8[%c0_6, %c0_7], %7 {strides = array<i32>} : memref<256x128xf32, #tpu.memory_space<vmem>>, vector<256x128xf32>,
    %c0_i32_8 = arith.constant 0 : i32
    %9 = arith.cmpi eq, %arg2, %c0_i32_8 : i32
    %10 = arith.extui %9 : i1 to i32
    %c0_i32_9 = arith.constant 0 : i32
    %11 = arith.cmpi ne, %10, %c0_i32_9 : i32
    scf.if %11 {
      %c0_10 = arith.constant 0 : index
      %c0_11 = arith.constant 0 : index
      %12 = vector.load %arg8[%c0_10, %c0_11] : memref<256x128xf32, #tpu.memory_space<vmem>>, vector<256x128xf32>
      %c0_12 = arith.constant 0 : index
      %c0_13 = arith.constant 0 : index
      %13 = vector.load %arg5[%c0_12, %c0_13] : memref<1x128xf32, #tpu.memory_space<vmem>>, vector<1x128xf32>
      %14 = vector.broadcast %13 : vector<1x128xf32> to vector<256x128xf32>
      %15 = arith.mulf %12, %14 : vector<256x128xf32>
      %c0_14 = arith.constant 0 : index
      %c0_15 = arith.constant 0 : index
      %16 = vector.load %arg6[%c0_14, %c0_15] : memref<1x128xf32, #tpu.memory_space<vmem>>, vector<1x128xf32>
      %17 = vector.broadcast %16 : vector<1x128xf32> to vector<256x128xf32>
      %18 = arith.addf %15, %17 : vector<256x128xf32>
      %cst_16 = arith.constant 0.000000e+00 : f32
      %19 = vector.broadcast %cst_16 : f32 to vector<256x128xf32>
      %20 = arith.maximumf %18, %19 : vector<256x128xf32>
      %21 = arith.truncf %20 : vector<256x128xf32> to vector<256x128xbf16>
      %c0_17 = arith.constant 0 : index
      %c0_18 = arith.constant 0 : index
      %22 = vector.load %arg7[%c0_17, %c0_18] : memref<256x128xbf16, #tpu.memory_space<vmem>>, vector<256x128xbf16>
      tpu.vector_store %arg7[%c0_17, %c0_18], %21 {strides = array<i32>} : memref<256x128xbf16, #tpu.memory_space<vmem>>, vector<256x128xbf16>,
    } else {
    }
    return
  }
  func.func @transform_0(%arg0: i32, %arg1: i32, %arg2: i32) -> (i32, i32) {
    %c0_i32 = arith.constant 0 : i32
    return %arg0, %arg2 : i32, i32
  }
  func.func @transform_1(%arg0: i32, %arg1: i32, %arg2: i32) -> (i32, i32) {
    %c0_i32 = arith.constant 0 : i32
    return %arg2, %arg1 : i32, i32
  }
  func.func @transform_2(%arg0: i32, %arg1: i32, %arg2: i32) -> (i32, i32) {
    %c0_i32 = arith.constant 0 : i32
    %c0_i32_0 = arith.constant 0 : i32
    return %c0_i32, %arg1 : i32, i32
  }
  func.func @transform_3(%arg0: i32, %arg1: i32, %arg2: i32) -> (i32, i32) {
    %c0_i32 = arith.constant 0 : i32
    %c0_i32_0 = arith.constant 0 : i32
    return %c0_i32, %arg1 : i32, i32
  }
  func.func @transform_4(%arg0: i32, %arg1: i32, %arg2: i32) -> (i32, i32) {
    %c0_i32 = arith.constant 0 : i32
    return %arg0, %arg1 : i32, i32
  }
}

module attributes {stable_mosaic.version = 11 : i64} {
  func.func @kernel(%arg0: i32, %arg1: i32, %arg2: memref<4x9x9x16xbf16, #tpu.memory_space<vmem>>, %arg3: memref<144x128xbf16, #tpu.memory_space<vmem>>, %arg4: memref<1x128xf32, #tpu.memory_space<vmem>>, %arg5: memref<1x128xf32, #tpu.memory_space<vmem>>, %arg6: memref<64x128xbf16, #tpu.memory_space<vmem>>) attributes {dimension_semantics = [#tpu.dimension_semantics<parallel>, #tpu.dimension_semantics<parallel>], iteration_bounds = array<i64: 2, 1>, scalar_prefetch = 0 : i64, scratch_operands = 0 : i64, tpu.core_type = #tpu.core_type<tc>, window_params = [{transform_indices = @transform_0, window_bounds = array<i64: 4, 9, 9, 16>}, {transform_indices = @transform_1, window_bounds = array<i64: 144, 128>}, {transform_indices = @transform_2, window_bounds = array<i64: 1, 128>}, {transform_indices = @transform_3, window_bounds = array<i64: 1, 128>}, {transform_indices = @transform_4, window_bounds = array<i64: 64, 128>}]} {
    %cst = arith.constant 0.000000e+00 : f32
    %0 = vector.broadcast %cst : f32 to vector<64x128xf32>
    %c0 = arith.constant 0 : index
    %c0_0 = arith.constant 0 : index
    %c0_1 = arith.constant 0 : index
    %c0_2 = arith.constant 0 : index
    %1 = vector.load %arg2[%c0, %c0_0, %c0_1, %c0_2] : memref<4x9x9x16xbf16, #tpu.memory_space<vmem>>, vector<1x8x8x16xbf16>
    %2 = vector.shape_cast %1 : vector<1x8x8x16xbf16> to vector<8x8x16xbf16>
    %3 = vector.shape_cast %2 : vector<8x8x16xbf16> to vector<64x16xbf16>
    %c0_3 = arith.constant 0 : index
    %c0_4 = arith.constant 0 : index
    %4 = vector.load %arg3[%c0_3, %c0_4] : memref<144x128xbf16, #tpu.memory_space<vmem>>, vector<16x128xbf16>
    %cst_5 = arith.constant dense<0.000000e+00> : vector<64x128xf32>
    %5 = tpu.matmul %3, %4, %cst_5 {dimension_numbers = #tpu.dot_dimension_numbers<[1], [0], [0], [1], [0, 0, 1, 1], [], []>} : vector<64x16xbf16>, vector<16x128xbf16>, vector<64x128xf32> -> vector<64x128xf32>
    %6 = arith.addf %0, %5 : vector<64x128xf32>
    %c1 = arith.constant 1 : index
    %c0_6 = arith.constant 0 : index
    %c0_7 = arith.constant 0 : index
    %c0_8 = arith.constant 0 : index
    %7 = vector.load %arg2[%c1, %c0_6, %c0_7, %c0_8] : memref<4x9x9x16xbf16, #tpu.memory_space<vmem>>, vector<1x8x8x16xbf16>
    %8 = vector.shape_cast %7 : vector<1x8x8x16xbf16> to vector<8x8x16xbf16>
    %9 = vector.shape_cast %8 : vector<8x8x16xbf16> to vector<64x16xbf16>
    %c16 = arith.constant 16 : index
    %c0_9 = arith.constant 0 : index
    %10 = vector.load %arg3[%c16, %c0_9] : memref<144x128xbf16, #tpu.memory_space<vmem>>, vector<16x128xbf16>
    %cst_10 = arith.constant dense<0.000000e+00> : vector<64x128xf32>
    %11 = tpu.matmul %9, %10, %cst_10 {dimension_numbers = #tpu.dot_dimension_numbers<[1], [0], [0], [1], [0, 0, 1, 1], [], []>} : vector<64x16xbf16>, vector<16x128xbf16>, vector<64x128xf32> -> vector<64x128xf32>
    %12 = arith.addf %6, %11 : vector<64x128xf32>
    %c0_11 = arith.constant 0 : index
    %c0_12 = arith.constant 0 : index
    %c1_13 = arith.constant 1 : index
    %c0_14 = arith.constant 0 : index
    %13 = vector.load %arg2[%c0_11, %c0_12, %c1_13, %c0_14] : memref<4x9x9x16xbf16, #tpu.memory_space<vmem>>, vector<1x8x8x16xbf16>
    %14 = vector.shape_cast %13 : vector<1x8x8x16xbf16> to vector<8x8x16xbf16>
    %15 = vector.shape_cast %14 : vector<8x8x16xbf16> to vector<64x16xbf16>
    %c32 = arith.constant 32 : index
    %c0_15 = arith.constant 0 : index
    %16 = vector.load %arg3[%c32, %c0_15] : memref<144x128xbf16, #tpu.memory_space<vmem>>, vector<16x128xbf16>
    %cst_16 = arith.constant dense<0.000000e+00> : vector<64x128xf32>
    %17 = tpu.matmul %15, %16, %cst_16 {dimension_numbers = #tpu.dot_dimension_numbers<[1], [0], [0], [1], [0, 0, 1, 1], [], []>} : vector<64x16xbf16>, vector<16x128xbf16>, vector<64x128xf32> -> vector<64x128xf32>
    %18 = arith.addf %12, %17 : vector<64x128xf32>
    %c2 = arith.constant 2 : index
    %c0_17 = arith.constant 0 : index
    %c0_18 = arith.constant 0 : index
    %c0_19 = arith.constant 0 : index
    %19 = vector.load %arg2[%c2, %c0_17, %c0_18, %c0_19] : memref<4x9x9x16xbf16, #tpu.memory_space<vmem>>, vector<1x8x8x16xbf16>
    %20 = vector.shape_cast %19 : vector<1x8x8x16xbf16> to vector<8x8x16xbf16>
    %21 = vector.shape_cast %20 : vector<8x8x16xbf16> to vector<64x16xbf16>
    %c48 = arith.constant 48 : index
    %c0_20 = arith.constant 0 : index
    %22 = vector.load %arg3[%c48, %c0_20] : memref<144x128xbf16, #tpu.memory_space<vmem>>, vector<16x128xbf16>
    %cst_21 = arith.constant dense<0.000000e+00> : vector<64x128xf32>
    %23 = tpu.matmul %21, %22, %cst_21 {dimension_numbers = #tpu.dot_dimension_numbers<[1], [0], [0], [1], [0, 0, 1, 1], [], []>} : vector<64x16xbf16>, vector<16x128xbf16>, vector<64x128xf32> -> vector<64x128xf32>
    %24 = arith.addf %18, %23 : vector<64x128xf32>
    %c3 = arith.constant 3 : index
    %c0_22 = arith.constant 0 : index
    %c0_23 = arith.constant 0 : index
    %c0_24 = arith.constant 0 : index
    %25 = vector.load %arg2[%c3, %c0_22, %c0_23, %c0_24] : memref<4x9x9x16xbf16, #tpu.memory_space<vmem>>, vector<1x8x8x16xbf16>
    %26 = vector.shape_cast %25 : vector<1x8x8x16xbf16> to vector<8x8x16xbf16>
    %27 = vector.shape_cast %26 : vector<8x8x16xbf16> to vector<64x16xbf16>
    %c64 = arith.constant 64 : index
    %c0_25 = arith.constant 0 : index
    %28 = vector.load %arg3[%c64, %c0_25] : memref<144x128xbf16, #tpu.memory_space<vmem>>, vector<16x128xbf16>
    %cst_26 = arith.constant dense<0.000000e+00> : vector<64x128xf32>
    %29 = tpu.matmul %27, %28, %cst_26 {dimension_numbers = #tpu.dot_dimension_numbers<[1], [0], [0], [1], [0, 0, 1, 1], [], []>} : vector<64x16xbf16>, vector<16x128xbf16>, vector<64x128xf32> -> vector<64x128xf32>
    %30 = arith.addf %24, %29 : vector<64x128xf32>
    %c2_27 = arith.constant 2 : index
    %c0_28 = arith.constant 0 : index
    %c1_29 = arith.constant 1 : index
    %c0_30 = arith.constant 0 : index
    %31 = vector.load %arg2[%c2_27, %c0_28, %c1_29, %c0_30] : memref<4x9x9x16xbf16, #tpu.memory_space<vmem>>, vector<1x8x8x16xbf16>
    %32 = vector.shape_cast %31 : vector<1x8x8x16xbf16> to vector<8x8x16xbf16>
    %33 = vector.shape_cast %32 : vector<8x8x16xbf16> to vector<64x16xbf16>
    %c80 = arith.constant 80 : index
    %c0_31 = arith.constant 0 : index
    %34 = vector.load %arg3[%c80, %c0_31] : memref<144x128xbf16, #tpu.memory_space<vmem>>, vector<16x128xbf16>
    %cst_32 = arith.constant dense<0.000000e+00> : vector<64x128xf32>
    %35 = tpu.matmul %33, %34, %cst_32 {dimension_numbers = #tpu.dot_dimension_numbers<[1], [0], [0], [1], [0, 0, 1, 1], [], []>} : vector<64x16xbf16>, vector<16x128xbf16>, vector<64x128xf32> -> vector<64x128xf32>
    %36 = arith.addf %30, %35 : vector<64x128xf32>
    %c0_33 = arith.constant 0 : index
    %c1_34 = arith.constant 1 : index
    %c0_35 = arith.constant 0 : index
    %c0_36 = arith.constant 0 : index
    %37 = vector.load %arg2[%c0_33, %c1_34, %c0_35, %c0_36] : memref<4x9x9x16xbf16, #tpu.memory_space<vmem>>, vector<1x8x8x16xbf16>
    %38 = vector.shape_cast %37 : vector<1x8x8x16xbf16> to vector<8x8x16xbf16>
    %39 = vector.shape_cast %38 : vector<8x8x16xbf16> to vector<64x16xbf16>
    %c96 = arith.constant 96 : index
    %c0_37 = arith.constant 0 : index
    %40 = vector.load %arg3[%c96, %c0_37] : memref<144x128xbf16, #tpu.memory_space<vmem>>, vector<16x128xbf16>
    %cst_38 = arith.constant dense<0.000000e+00> : vector<64x128xf32>
    %41 = tpu.matmul %39, %40, %cst_38 {dimension_numbers = #tpu.dot_dimension_numbers<[1], [0], [0], [1], [0, 0, 1, 1], [], []>} : vector<64x16xbf16>, vector<16x128xbf16>, vector<64x128xf32> -> vector<64x128xf32>
    %42 = arith.addf %36, %41 : vector<64x128xf32>
    %c1_39 = arith.constant 1 : index
    %c1_40 = arith.constant 1 : index
    %c0_41 = arith.constant 0 : index
    %c0_42 = arith.constant 0 : index
    %43 = vector.load %arg2[%c1_39, %c1_40, %c0_41, %c0_42] : memref<4x9x9x16xbf16, #tpu.memory_space<vmem>>, vector<1x8x8x16xbf16>
    %44 = vector.shape_cast %43 : vector<1x8x8x16xbf16> to vector<8x8x16xbf16>
    %45 = vector.shape_cast %44 : vector<8x8x16xbf16> to vector<64x16xbf16>
    %c112 = arith.constant 112 : index
    %c0_43 = arith.constant 0 : index
    %46 = vector.load %arg3[%c112, %c0_43] : memref<144x128xbf16, #tpu.memory_space<vmem>>, vector<16x128xbf16>
    %cst_44 = arith.constant dense<0.000000e+00> : vector<64x128xf32>
    %47 = tpu.matmul %45, %46, %cst_44 {dimension_numbers = #tpu.dot_dimension_numbers<[1], [0], [0], [1], [0, 0, 1, 1], [], []>} : vector<64x16xbf16>, vector<16x128xbf16>, vector<64x128xf32> -> vector<64x128xf32>
    %48 = arith.addf %42, %47 : vector<64x128xf32>
    %c0_45 = arith.constant 0 : index
    %c1_46 = arith.constant 1 : index
    %c1_47 = arith.constant 1 : index
    %c0_48 = arith.constant 0 : index
    %49 = vector.load %arg2[%c0_45, %c1_46, %c1_47, %c0_48] : memref<4x9x9x16xbf16, #tpu.memory_space<vmem>>, vector<1x8x8x16xbf16>
    %50 = vector.shape_cast %49 : vector<1x8x8x16xbf16> to vector<8x8x16xbf16>
    %51 = vector.shape_cast %50 : vector<8x8x16xbf16> to vector<64x16xbf16>
    %c128 = arith.constant 128 : index
    %c0_49 = arith.constant 0 : index
    %52 = vector.load %arg3[%c128, %c0_49] : memref<144x128xbf16, #tpu.memory_space<vmem>>, vector<16x128xbf16>
    %cst_50 = arith.constant dense<0.000000e+00> : vector<64x128xf32>
    %53 = tpu.matmul %51, %52, %cst_50 {dimension_numbers = #tpu.dot_dimension_numbers<[1], [0], [0], [1], [0, 0, 1, 1], [], []>} : vector<64x16xbf16>, vector<16x128xbf16>, vector<64x128xf32> -> vector<64x128xf32>
    %54 = arith.addf %48, %53 : vector<64x128xf32>
    %c0_51 = arith.constant 0 : index
    %c0_52 = arith.constant 0 : index
    %55 = vector.load %arg4[%c0_51, %c0_52] : memref<1x128xf32, #tpu.memory_space<vmem>>, vector<1x128xf32>
    %56 = vector.broadcast %55 : vector<1x128xf32> to vector<64x128xf32>
    %57 = arith.mulf %54, %56 : vector<64x128xf32>
    %c0_53 = arith.constant 0 : index
    %c0_54 = arith.constant 0 : index
    %58 = vector.load %arg5[%c0_53, %c0_54] : memref<1x128xf32, #tpu.memory_space<vmem>>, vector<1x128xf32>
    %59 = vector.broadcast %58 : vector<1x128xf32> to vector<64x128xf32>
    %60 = arith.addf %57, %59 : vector<64x128xf32>
    %cst_55 = arith.constant 0.000000e+00 : f32
    %61 = vector.broadcast %cst_55 : f32 to vector<64x128xf32>
    %62 = arith.maximumf %60, %61 : vector<64x128xf32>
    %63 = arith.truncf %62 : vector<64x128xf32> to vector<64x128xbf16>
    %c0_56 = arith.constant 0 : index
    %c0_57 = arith.constant 0 : index
    %64 = vector.load %arg6[%c0_56, %c0_57] : memref<64x128xbf16, #tpu.memory_space<vmem>>, vector<64x128xbf16>
    tpu.vector_store %arg6[%c0_56, %c0_57], %63 {strides = array<i32>} : memref<64x128xbf16, #tpu.memory_space<vmem>>, vector<64x128xbf16>,
    return
  }
  func.func @transform_0(%arg0: i32, %arg1: i32) -> (i32, i32, i32, i32) {
    %c0_i32 = arith.constant 0 : i32
    %c0_i32_0 = arith.constant 0 : i32
    %c0_i32_1 = arith.constant 0 : i32
    %c0_i32_2 = arith.constant 0 : i32
    return %arg0, %c0_i32, %c0_i32_0, %c0_i32_1 : i32, i32, i32, i32
  }
  func.func @transform_1(%arg0: i32, %arg1: i32) -> (i32, i32) {
    %c0_i32 = arith.constant 0 : i32
    %c0_i32_0 = arith.constant 0 : i32
    return %c0_i32, %arg1 : i32, i32
  }
  func.func @transform_2(%arg0: i32, %arg1: i32) -> (i32, i32) {
    %c0_i32 = arith.constant 0 : i32
    %c0_i32_0 = arith.constant 0 : i32
    return %c0_i32, %arg1 : i32, i32
  }
  func.func @transform_3(%arg0: i32, %arg1: i32) -> (i32, i32) {
    %c0_i32 = arith.constant 0 : i32
    %c0_i32_0 = arith.constant 0 : i32
    return %c0_i32, %arg1 : i32, i32
  }
  func.func @transform_4(%arg0: i32, %arg1: i32) -> (i32, i32) {
    %c0_i32 = arith.constant 0 : i32
    return %arg0, %arg1 : i32, i32
  }
}

module attributes {stable_mosaic.version = 11 : i64} {
  func.func @kernel(%arg0: i32, %arg1: i32, %arg2: i32, %arg3: memref<128x32xbf16, #tpu.memory_space<vmem>>, %arg4: memref<32x128xbf16, #tpu.memory_space<vmem>>, %arg5: memref<1x128xf32, #tpu.memory_space<vmem>>, %arg6: memref<1x128xf32, #tpu.memory_space<vmem>>, %arg7: memref<128x128xbf16, #tpu.memory_space<vmem>>, %arg8: memref<128x128xf32, #tpu.memory_space<vmem>>) attributes {dimension_semantics = [#tpu.dimension_semantics<parallel>, #tpu.dimension_semantics<parallel>, #tpu.dimension_semantics<arbitrary>], iteration_bounds = array<i64: 1, 1, 1>, scalar_prefetch = 0 : i64, scratch_operands = 1 : i64, tpu.core_type = #tpu.core_type<tc>, window_params = [{transform_indices = @transform_0, window_bounds = array<i64: 128, 32>}, {transform_indices = @transform_1, window_bounds = array<i64: 32, 128>}, {pipeline_mode = #tpu.pipeline_mode<synchronous>, transform_indices = @transform_2, window_bounds = array<i64: 1, 128>}, {pipeline_mode = #tpu.pipeline_mode<synchronous>, transform_indices = @transform_3, window_bounds = array<i64: 1, 128>}, {transform_indices = @transform_4, window_bounds = array<i64: 128, 128>}]} {
    %c0_i32 = arith.constant 0 : i32
    %0 = arith.cmpi eq, %arg2, %c0_i32 : i32
    %1 = arith.extui %0 : i1 to i32
    %c0_i32_0 = arith.constant 0 : i32
    %2 = arith.cmpi ne, %1, %c0_i32_0 : i32
    scf.if %2 {
      %cst_10 = arith.constant 0.000000e+00 : f32
      %12 = vector.broadcast %cst_10 : f32 to vector<128x128xf32>
      %c0_11 = arith.constant 0 : index
      %c0_12 = arith.constant 0 : index
      %13 = vector.load %arg8[%c0_11, %c0_12] : memref<128x128xf32, #tpu.memory_space<vmem>>, vector<128x128xf32>
      tpu.vector_store %arg8[%c0_11, %c0_12], %12 {strides = array<i32>} : memref<128x128xf32, #tpu.memory_space<vmem>>, vector<128x128xf32>,
    } else {
    }
    %c0 = arith.constant 0 : index
    %c0_1 = arith.constant 0 : index
    %3 = vector.load %arg8[%c0, %c0_1] : memref<128x128xf32, #tpu.memory_space<vmem>>, vector<128x128xf32>
    %c0_2 = arith.constant 0 : index
    %c0_3 = arith.constant 0 : index
    %4 = vector.load %arg3[%c0_2, %c0_3] : memref<128x32xbf16, #tpu.memory_space<vmem>>, vector<128x32xbf16>
    %c0_4 = arith.constant 0 : index
    %c0_5 = arith.constant 0 : index
    %5 = vector.load %arg4[%c0_4, %c0_5] : memref<32x128xbf16, #tpu.memory_space<vmem>>, vector<32x128xbf16>
    %cst = arith.constant dense<0.000000e+00> : vector<128x128xf32>
    %6 = tpu.matmul %4, %5, %cst {dimension_numbers = #tpu.dot_dimension_numbers<[1], [0], [0], [1], [0, 0, 1, 1], [], []>} : vector<128x32xbf16>, vector<32x128xbf16>, vector<128x128xf32> -> vector<128x128xf32>
    %7 = arith.addf %3, %6 : vector<128x128xf32>
    %c0_6 = arith.constant 0 : index
    %c0_7 = arith.constant 0 : index
    %8 = vector.load %arg8[%c0_6, %c0_7] : memref<128x128xf32, #tpu.memory_space<vmem>>, vector<128x128xf32>
    tpu.vector_store %arg8[%c0_6, %c0_7], %7 {strides = array<i32>} : memref<128x128xf32, #tpu.memory_space<vmem>>, vector<128x128xf32>,
    %c0_i32_8 = arith.constant 0 : i32
    %9 = arith.cmpi eq, %arg2, %c0_i32_8 : i32
    %10 = arith.extui %9 : i1 to i32
    %c0_i32_9 = arith.constant 0 : i32
    %11 = arith.cmpi ne, %10, %c0_i32_9 : i32
    scf.if %11 {
      %c0_10 = arith.constant 0 : index
      %c0_11 = arith.constant 0 : index
      %12 = vector.load %arg8[%c0_10, %c0_11] : memref<128x128xf32, #tpu.memory_space<vmem>>, vector<128x128xf32>
      %c0_12 = arith.constant 0 : index
      %c0_13 = arith.constant 0 : index
      %13 = vector.load %arg5[%c0_12, %c0_13] : memref<1x128xf32, #tpu.memory_space<vmem>>, vector<1x128xf32>
      %14 = vector.broadcast %13 : vector<1x128xf32> to vector<128x128xf32>
      %15 = arith.mulf %12, %14 : vector<128x128xf32>
      %c0_14 = arith.constant 0 : index
      %c0_15 = arith.constant 0 : index
      %16 = vector.load %arg6[%c0_14, %c0_15] : memref<1x128xf32, #tpu.memory_space<vmem>>, vector<1x128xf32>
      %17 = vector.broadcast %16 : vector<1x128xf32> to vector<128x128xf32>
      %18 = arith.addf %15, %17 : vector<128x128xf32>
      %19 = arith.truncf %18 : vector<128x128xf32> to vector<128x128xbf16>
      %c0_16 = arith.constant 0 : index
      %c0_17 = arith.constant 0 : index
      %20 = vector.load %arg7[%c0_16, %c0_17] : memref<128x128xbf16, #tpu.memory_space<vmem>>, vector<128x128xbf16>
      tpu.vector_store %arg7[%c0_16, %c0_17], %19 {strides = array<i32>} : memref<128x128xbf16, #tpu.memory_space<vmem>>, vector<128x128xbf16>,
    } else {
    }
    return
  }
  func.func @transform_0(%arg0: i32, %arg1: i32, %arg2: i32) -> (i32, i32) {
    %c0_i32 = arith.constant 0 : i32
    return %arg0, %arg2 : i32, i32
  }
  func.func @transform_1(%arg0: i32, %arg1: i32, %arg2: i32) -> (i32, i32) {
    %c0_i32 = arith.constant 0 : i32
    return %arg2, %arg1 : i32, i32
  }
  func.func @transform_2(%arg0: i32, %arg1: i32, %arg2: i32) -> (i32, i32) {
    %c0_i32 = arith.constant 0 : i32
    %c0_i32_0 = arith.constant 0 : i32
    return %c0_i32, %arg1 : i32, i32
  }
  func.func @transform_3(%arg0: i32, %arg1: i32, %arg2: i32) -> (i32, i32) {
    %c0_i32 = arith.constant 0 : i32
    %c0_i32_0 = arith.constant 0 : i32
    return %c0_i32, %arg1 : i32, i32
  }
  func.func @transform_4(%arg0: i32, %arg1: i32, %arg2: i32) -> (i32, i32) {
    %c0_i32 = arith.constant 0 : i32
    return %arg0, %arg1 : i32, i32
  }
}

module attributes {stable_mosaic.version = 11 : i64} {
  func.func @kernel(%arg0: i32, %arg1: i32, %arg2: i32, %arg3: memref<128x16xbf16, #tpu.memory_space<vmem>>, %arg4: memref<16x128xbf16, #tpu.memory_space<vmem>>, %arg5: memref<1x128xf32, #tpu.memory_space<vmem>>, %arg6: memref<1x128xf32, #tpu.memory_space<vmem>>, %arg7: memref<128x128xbf16, #tpu.memory_space<vmem>>, %arg8: memref<128x128xf32, #tpu.memory_space<vmem>>, %arg9: memref<128x128xf32, #tpu.memory_space<vmem>>) attributes {dimension_semantics = [#tpu.dimension_semantics<parallel>, #tpu.dimension_semantics<parallel>, #tpu.dimension_semantics<arbitrary>], iteration_bounds = array<i64: 1, 1, 1>, scalar_prefetch = 0 : i64, scratch_operands = 1 : i64, tpu.core_type = #tpu.core_type<tc>, window_params = [{transform_indices = @transform_0, window_bounds = array<i64: 128, 16>}, {transform_indices = @transform_1, window_bounds = array<i64: 16, 128>}, {pipeline_mode = #tpu.pipeline_mode<synchronous>, transform_indices = @transform_2, window_bounds = array<i64: 1, 128>}, {pipeline_mode = #tpu.pipeline_mode<synchronous>, transform_indices = @transform_3, window_bounds = array<i64: 1, 128>}, {pipeline_mode = #tpu.pipeline_mode<synchronous>, transform_indices = @transform_4, window_bounds = array<i64: 128, 128>}, {transform_indices = @transform_5, window_bounds = array<i64: 128, 128>}]} {
    %c0_i32 = arith.constant 0 : i32
    %0 = arith.cmpi eq, %arg2, %c0_i32 : i32
    %1 = arith.extui %0 : i1 to i32
    %c0_i32_0 = arith.constant 0 : i32
    %2 = arith.cmpi ne, %1, %c0_i32_0 : i32
    scf.if %2 {
      %cst_10 = arith.constant 0.000000e+00 : f32
      %12 = vector.broadcast %cst_10 : f32 to vector<128x128xf32>
      %c0_11 = arith.constant 0 : index
      %c0_12 = arith.constant 0 : index
      %13 = vector.load %arg9[%c0_11, %c0_12] : memref<128x128xf32, #tpu.memory_space<vmem>>, vector<128x128xf32>
      tpu.vector_store %arg9[%c0_11, %c0_12], %12 {strides = array<i32>} : memref<128x128xf32, #tpu.memory_space<vmem>>, vector<128x128xf32>,
    } else {
    }
    %c0 = arith.constant 0 : index
    %c0_1 = arith.constant 0 : index
    %3 = vector.load %arg9[%c0, %c0_1] : memref<128x128xf32, #tpu.memory_space<vmem>>, vector<128x128xf32>
    %c0_2 = arith.constant 0 : index
    %c0_3 = arith.constant 0 : index
    %4 = vector.load %arg3[%c0_2, %c0_3] : memref<128x16xbf16, #tpu.memory_space<vmem>>, vector<128x16xbf16>
    %c0_4 = arith.constant 0 : index
    %c0_5 = arith.constant 0 : index
    %5 = vector.load %arg4[%c0_4, %c0_5] : memref<16x128xbf16, #tpu.memory_space<vmem>>, vector<16x128xbf16>
    %cst = arith.constant dense<0.000000e+00> : vector<128x128xf32>
    %6 = tpu.matmul %4, %5, %cst {dimension_numbers = #tpu.dot_dimension_numbers<[1], [0], [0], [1], [0, 0, 1, 1], [], []>} : vector<128x16xbf16>, vector<16x128xbf16>, vector<128x128xf32> -> vector<128x128xf32>
    %7 = arith.addf %3, %6 : vector<128x128xf32>
    %c0_6 = arith.constant 0 : index
    %c0_7 = arith.constant 0 : index
    %8 = vector.load %arg9[%c0_6, %c0_7] : memref<128x128xf32, #tpu.memory_space<vmem>>, vector<128x128xf32>
    tpu.vector_store %arg9[%c0_6, %c0_7], %7 {strides = array<i32>} : memref<128x128xf32, #tpu.memory_space<vmem>>, vector<128x128xf32>,
    %c0_i32_8 = arith.constant 0 : i32
    %9 = arith.cmpi eq, %arg2, %c0_i32_8 : i32
    %10 = arith.extui %9 : i1 to i32
    %c0_i32_9 = arith.constant 0 : i32
    %11 = arith.cmpi ne, %10, %c0_i32_9 : i32
    scf.if %11 {
      %c0_10 = arith.constant 0 : index
      %c0_11 = arith.constant 0 : index
      %12 = vector.load %arg9[%c0_10, %c0_11] : memref<128x128xf32, #tpu.memory_space<vmem>>, vector<128x128xf32>
      %c0_12 = arith.constant 0 : index
      %c0_13 = arith.constant 0 : index
      %13 = vector.load %arg5[%c0_12, %c0_13] : memref<1x128xf32, #tpu.memory_space<vmem>>, vector<1x128xf32>
      %14 = vector.broadcast %13 : vector<1x128xf32> to vector<128x128xf32>
      %15 = arith.mulf %12, %14 : vector<128x128xf32>
      %c0_14 = arith.constant 0 : index
      %c0_15 = arith.constant 0 : index
      %16 = vector.load %arg6[%c0_14, %c0_15] : memref<1x128xf32, #tpu.memory_space<vmem>>, vector<1x128xf32>
      %17 = vector.broadcast %16 : vector<1x128xf32> to vector<128x128xf32>
      %18 = arith.addf %15, %17 : vector<128x128xf32>
      %c0_16 = arith.constant 0 : index
      %c0_17 = arith.constant 0 : index
      %19 = vector.load %arg7[%c0_16, %c0_17] : memref<128x128xbf16, #tpu.memory_space<vmem>>, vector<128x128xbf16>
      %20 = arith.extf %19 : vector<128x128xbf16> to vector<128x128xf32>
      %21 = arith.addf %18, %20 : vector<128x128xf32>
      %cst_18 = arith.constant 0.000000e+00 : f32
      %22 = vector.broadcast %cst_18 : f32 to vector<128x128xf32>
      %23 = arith.maximumf %21, %22 : vector<128x128xf32>
      %c0_19 = arith.constant 0 : index
      %c0_20 = arith.constant 0 : index
      %24 = vector.load %arg8[%c0_19, %c0_20] : memref<128x128xf32, #tpu.memory_space<vmem>>, vector<128x128xf32>
      tpu.vector_store %arg8[%c0_19, %c0_20], %23 {strides = array<i32>} : memref<128x128xf32, #tpu.memory_space<vmem>>, vector<128x128xf32>,
    } else {
    }
    return
  }
  func.func @transform_0(%arg0: i32, %arg1: i32, %arg2: i32) -> (i32, i32) {
    %c0_i32 = arith.constant 0 : i32
    return %arg0, %arg2 : i32, i32
  }
  func.func @transform_1(%arg0: i32, %arg1: i32, %arg2: i32) -> (i32, i32) {
    %c0_i32 = arith.constant 0 : i32
    return %arg2, %arg1 : i32, i32
  }
  func.func @transform_2(%arg0: i32, %arg1: i32, %arg2: i32) -> (i32, i32) {
    %c0_i32 = arith.constant 0 : i32
    %c0_i32_0 = arith.constant 0 : i32
    return %c0_i32, %arg1 : i32, i32
  }
  func.func @transform_3(%arg0: i32, %arg1: i32, %arg2: i32) -> (i32, i32) {
    %c0_i32 = arith.constant 0 : i32
    %c0_i32_0 = arith.constant 0 : i32
    return %c0_i32, %arg1 : i32, i32
  }
  func.func @transform_4(%arg0: i32, %arg1: i32, %arg2: i32) -> (i32, i32) {
    %c0_i32 = arith.constant 0 : i32
    return %arg0, %arg1 : i32, i32
  }
  func.func @transform_5(%arg0: i32, %arg1: i32, %arg2: i32) -> (i32, i32) {
    %c0_i32 = arith.constant 0 : i32
    return %arg0, %arg1 : i32, i32
  }
}

</mosaic_0001>

<llo_original>
// kernel: bottleneck_forward.4
$region0: #{bottleneck_forward.4}
  #allocation0 [shape = 'u32[]', space=smem, size = 0x4, offset = 0x4, fixed_abs, tag = 'smem constant byte address 0x4 - core index']
  #allocation1 [shape = 'u32[144,128]{1,0:T(1,128)}', space=vmem, size = 0x12000, scoped, tag = 'internal scratch']
  #allocation2 [shape = 'f32[256,128]{1,0:T(8,128)}', space=vmem, size = 0x20000, scoped, tag = 'scratch operand']
  %s0 = inlined_call_operand.vmem [shape: bf16[512,32], index: 0, kind: input, shape index: {}]
  %s1 = inlined_call_operand.vmem [shape: bf16[32,128], index: 1, kind: input, shape index: {}]
  %s2 = inlined_call_operand.vmem [shape: f32[1,128], index: 2, kind: input, shape index: {}]
  %s3 = inlined_call_operand.vmem [shape: f32[1,128], index: 3, kind: input, shape index: {}]
  %s4 = inlined_call_operand.vmem [shape: bf16[512,128], index: 4, kind: output, shape index: {}]
  %s5 = sld [smem:[#allocation0]]
  $region57: #{bottleneck_forward.4} parent=0
    _
  %s7 = ssub.s32 1, %s5
  %s8 = scalar_select 0, %s7, %s5
  loop: start=0, step=1, limit=4
  $region2: #{bottleneck_forward.4} parent=0 // loop_pre_header
    _
  $region3: #{bottleneck_forward.4} parent=0 // loop_header
    %s10 = sphi 0, %s14
    %p11 = scmp.ge.s32.totalorder %s10, 4
    %s17 = sphi 0, %s36
    %s18 = sphi 0, %s32
    %s19 = sphi 0, %s28
    %s20 = sphi 0, %s17
    %s21 = sphi 0, %s18
    %s22 = sphi 0, %s19
    %s23 = sphi 0, %s20
    %s24 = sphi 0, %s21
    %s25 = sphi 0, %s22
    %s41 = sphi 0, %s43
    %s44 = sphi 0, %s41
    %s45 = sphi 0, %s44
    %s61 = sphi 0, %s45
    %s69 = sphi 0, %s71
    %s72 = sphi 0, %s69
    %s73 = sphi 0, %s72
    %s89 = sphi 0, %s73
    %s95 = sphi 0, %s97
    %s98 = sphi 0, %s95
    %s99 = sphi 0, %s98
    %s115 = sphi 0, %s99
    %s121 = sphi 0, %s123
    %s124 = sphi 0, %s121
    %s125 = sphi 0, %s124
    %s141 = sphi 0, %s125
    %s149 = sphi 0, %s151
    %s152 = sphi 0, %s149
    %s153 = sphi 0, %s152
    %s169 = sphi 0, %s153
  $region4: #{bottleneck_forward.4} parent=0 // loop_header_branch
    %13 = sbr.rel (%p11) target = $region8
  $region5: #{bottleneck_forward.4} parent=0 // loop_body
    %s15 = ssub.s32 %s10, 1
    %s16 = ssub.s32 %s10, 2
    %s26 = sadd.s32 1, %s19
    %p27 = scmp.ge.s32.totalorder %s26, 1
    %s28 = scalar_select %p27, 0, %s26
    %s29 = sadd.s32 1, %s18
    %s30 = scalar_select %p27, %s29, %s18
    %p31 = scmp.ge.s32.totalorder %s30, 1
    %s32 = scalar_select %p31, 0, %s30
    %s33 = sadd.s32 1, %s17
    %s34 = scalar_select %p31, %s33, %s17
    %p35 = scmp.ge.s32.totalorder %s34, 2
    %s36 = scalar_select %p35, 0, %s34
    %s37 = ssub.s32 %s17, %s36
    %s38 = ssub.s32 %s19, %s28
    %s39 = sor.u32 %s37, %s38
    %p40 = scmp.eq.s32.totalorder %s39, 0
    %s42 = sadd.s32 %s41, 1
    %s43 = scalar_select %p40, %s41, %s42
    %p46 = pneg %p40
    %p47 = scmp.eq.s32.totalorder %s10, 1
    %p48 = por %p46, %p47
    %p49 = scmp.ne.s32.totalorder %s41, %s44
    %p50 = scmp.eq.s32.totalorder %s10, 0
    %p51 = por %p49, %p50
    %p52 = scmp.ne.s32.totalorder %s41, %s44
    %p53 = scmp.eq.s32.totalorder %s15, 1
    %p54 = por %p52, %p53
    %p55 = scmp.ne.s32.totalorder %s44, %s45
    %p56 = scmp.eq.s32.totalorder %s15, 0
    %p57 = por %p55, %p56
    %p58 = scmp.ne.s32.totalorder %s44, %s45
    %p59 = scmp.eq.s32.totalorder %s16, 1
    %p60 = por %p58, %p59
    %p62 = scmp.ne.s32.totalorder %s45, %s61
    %p63 = scmp.eq.s32.totalorder %s16, 0
    %p64 = por %p62, %p63
    %s65 = ssub.s32 %s19, %s28
    %s66 = ssub.s32 %s18, %s32
    %s67 = sor.u32 %s65, %s66
    %p68 = scmp.eq.s32.totalorder %s67, 0
    %s70 = sadd.s32 %s69, 1
    %s71 = scalar_select %p68, %s69, %s70
    %p74 = pneg %p68
    %p75 = scmp.eq.s32.totalorder %s10, 1
    %p76 = por %p74, %p75
    %p77 = scmp.ne.s32.totalorder %s69, %s72
    %p78 = scmp.eq.s32.totalorder %s10, 0
    %p79 = por %p77, %p78
    %p80 = scmp.ne.s32.totalorder %s69, %s72
    %p81 = scmp.eq.s32.totalorder %s15, 1
    %p82 = por %p80, %p81
    %p83 = scmp.ne.s32.totalorder %s72, %s73
    %p84 = scmp.eq.s32.totalorder %s15, 0
    %p85 = por %p83, %p84
    %p86 = scmp.ne.s32.totalorder %s72, %s73
    %p87 = scmp.eq.s32.totalorder %s16, 1
    %p88 = por %p86, %p87
    %p90 = scmp.ne.s32.totalorder %s73, %s89
    %p91 = scmp.eq.s32.totalorder %s16, 0
    %p92 = por %p90, %p91
    %s93 = ssub.s32 %s18, %s32
    %p94 = scmp.eq.s32.totalorder %s93, 0
    %s96 = sadd.s32 %s95, 1
    %s97 = scalar_select %p94, %s95, %s96
    %p100 = pneg %p94
    %p101 = scmp.eq.s32.totalorder %s10, 1
    %p102 = por %p100, %p101
    %p103 = scmp.ne.s32.totalorder %s95, %s98
    %p104 = scmp.eq.s32.totalorder %s10, 0
    %p105 = por %p103, %p104
    %p106 = scmp.ne.s32.totalorder %s95, %s98
    %p107 = scmp.eq.s32.totalorder %s15, 1
    %p108 = por %p106, %p107
    %p109 = scmp.ne.s32.totalorder %s98, %s99
    %p110 = scmp.eq.s32.totalorder %s15, 0
    %p111 = por %p109, %p110
    %p112 = scmp.ne.s32.totalorder %s98, %s99
    %p113 = scmp.eq.s32.totalorder %s16, 1
    %p114 = por %p112, %p113
    %p116 = scmp.ne.s32.totalorder %s99, %s115
    %p117 = scmp.eq.s32.totalorder %s16, 0
    %p118 = por %p116, %p117
    %s119 = ssub.s32 %s18, %s32
    %p120 = scmp.eq.s32.totalorder %s119, 0
    %s122 = sadd.s32 %s121, 1
    %s123 = scalar_select %p120, %s121, %s122
    %p126 = pneg %p120
    %p127 = scmp.eq.s32.totalorder %s10, 1
    %p128 = por %p126, %p127
    %p129 = scmp.ne.s32.totalorder %s121, %s124
    %p130 = scmp.eq.s32.totalorder %s10, 0
    %p131 = por %p129, %p130
    %p132 = scmp.ne.s32.totalorder %s121, %s124
    %p133 = scmp.eq.s32.totalorder %s15, 1
    %p134 = por %p132, %p133
    %p135 = scmp.ne.s32.totalorder %s124, %s125
    %p136 = scmp.eq.s32.totalorder %s15, 0
    %p137 = por %p135, %p136
    %p138 = scmp.ne.s32.totalorder %s124, %s125
    %p139 = scmp.eq.s32.totalorder %s16, 1
    %p140 = por %p138, %p139
    %p142 = scmp.ne.s32.totalorder %s125, %s141
    %p143 = scmp.eq.s32.totalorder %s16, 0
    %p144 = por %p142, %p143
    %s145 = ssub.s32 %s17, %s36
    %s146 = ssub.s32 %s18, %s32
    %s147 = sor.u32 %s145, %s146
    %p148 = scmp.eq.s32.totalorder %s147, 0
    %s150 = sadd.s32 %s149, 1
    %s151 = scalar_select %p148, %s149, %s150
    %p154 = pneg %p148
    %p155 = scmp.eq.s32.totalorder %s10, 1
    %p156 = por %p154, %p155
    %p157 = scmp.ne.s32.totalorder %s149, %s152
    %p158 = scmp.eq.s32.totalorder %s10, 0
    %p159 = por %p157, %p158
    %p160 = scmp.ne.s32.totalorder %s149, %s152
    %p161 = scmp.eq.s32.totalorder %s15, 1
    %p162 = por %p160, %p161
    %p163 = scmp.ne.s32.totalorder %s152, %s153
    %p164 = scmp.eq.s32.totalorder %s15, 0
    %p165 = por %p163, %p164
    %p166 = scmp.ne.s32.totalorder %s152, %s153
    %p167 = scmp.eq.s32.totalorder %s16, 1
    %p168 = por %p166, %p167
    %p170 = scmp.ne.s32.totalorder %s153, %s169
    %p171 = scmp.eq.s32.totalorder %s16, 0
    %p172 = por %p170, %p171
    %p173 = scmp.le.s32.totalorder 1, %s10
    %p174 = scmp.lt.s32.totalorder %s10, 3
    %p175 = pnand %p173, %p174
    %p176 = pneg %p175
    // Predicated region
    $region9: #{bottleneck_forward.4} parent=5 // pred_check
      _
    $region10: #{bottleneck_forward.4} parent=5 // pred_check_branch
      %178 = sbr.rel (%p175) target = $region12
    $region11: #{bottleneck_forward.4} parent=5 // pred_region
      %s179 = ssub.s32 %s10, 1
      // Predicated region
      $region13: #{bottleneck_forward.4} parent=11 // pred_check
        %p180 = pneg %p85
      $region14: #{bottleneck_forward.4} parent=11 // pred_check_branch
        %182 = sbr.rel (%p180) target = $region16
      $region15: #{bottleneck_forward.4} parent=11 // pred_region
        %s183 = smul.u32 4, %s22
        %p184 = scmp.lt.s32.totalorder %s183, 3
        %s185 = scalar_select %p184, %s183, 3
        %p186 = scmp.lt.s32.totalorder %s21, 0
        %s187 = scalar_select %p186, %s21, 0
        %s188 = sadd.s32 %s187, %s185
        %s189 = smul.addr %s188, 4
        %s190 = scalar_lea.vmem %s1, %s189
        %s191 = smul.u32 4, %s22
      $region16: #{bottleneck_forward.4} parent=11 // pred_fallthru
        _
      // Predicated region
      $region17: #{bottleneck_forward.4} parent=11 // pred_check
        %p192 = pneg %p111
      $region18: #{bottleneck_forward.4} parent=11 // pred_check_branch
        %194 = sbr.rel (%p192) target = $region20
      $region19: #{bottleneck_forward.4} parent=11 // pred_region
        %p195 = scmp.lt.s32.totalorder %s21, 0
        %s196 = scalar_select %p195, %s21, 0
        %s197 = scalar_lea.vmem %s2, %s196
      $region20: #{bottleneck_forward.4} parent=11 // pred_fallthru
        _
      // Predicated region
      $region21: #{bottleneck_forward.4} parent=11 // pred_check
        %p198 = pneg %p137
      $region22: #{bottleneck_forward.4} parent=11 // pred_check_branch
        %200 = sbr.rel (%p198) target = $region24
      $region23: #{bottleneck_forward.4} parent=11 // pred_region
        %p201 = scmp.lt.s32.totalorder %s21, 0
        %s202 = scalar_select %p201, %s21, 0
        %s203 = scalar_lea.vmem %s3, %s202
      $region24: #{bottleneck_forward.4} parent=11 // pred_fallthru
        _
    $region12: #{bottleneck_forward.4} parent=5 // pred_fallthru
      _
    %p204 = scmp.lt.s32.totalorder %s10, 2
    // Predicated region
    $region25: #{bottleneck_forward.4} parent=5 // pred_check
      %p205 = pneg %p204
    $region26: #{bottleneck_forward.4} parent=5 // pred_check_branch
      %207 = sbr.rel (%p205) target = $region28
    $region27: #{bottleneck_forward.4} parent=5 // pred_region
      // Predicated region
      $region29: #{bottleneck_forward.4} parent=27 // pred_check
        %p208 = pneg %p51
      $region30: #{bottleneck_forward.4} parent=27 // pred_check_branch
        %210 = sbr.rel (%p208) target = $region32
      $region31: #{bottleneck_forward.4} parent=27 // pred_region
        %s211 = smul.u32 32, %s17
        %p212 = scmp.lt.s32.totalorder %s211, 63
        %s213 = scalar_select %p212, %s211, 63
        %p214 = scmp.lt.s32.totalorder %s19, 0
        %s215 = scalar_select %p214, %s19, 0
        %s216 = sadd.s32 %s215, %s213
        %s217 = smul.addr %s216, 4
        %s218 = scalar_lea.vmem %s0, %s217
        %s219 = smul.u32 32, %s17
      $region32: #{bottleneck_forward.4} parent=27 // pred_fallthru
        _
    $region28: #{bottleneck_forward.4} parent=5 // pred_fallthru
      _
    %p220 = scmp.le.s32.totalorder 1, %s10
    %p221 = scmp.lt.s32.totalorder %s10, 3
    %p222 = pnand %p220, %p221
    %p223 = pneg %p222
    // Predicated region
    $region33: #{bottleneck_forward.4} parent=5 // pred_check
      _
    $region34: #{bottleneck_forward.4} parent=5 // pred_check_branch
      %225 = sbr.rel (%p222) target = $region36
    $region35: #{bottleneck_forward.4} parent=5 // pred_region
      %s226 = ssub.s32 %s10, 1
      %s227 = smul.u32 32, %s20
      %p228 = scmp.lt.s32.totalorder %s227, 63
      %s229 = scalar_select %p228, %s227, 63
      %p230 = scmp.lt.s32.totalorder %s22, 0
      %s231 = scalar_select %p230, %s22, 0
      %s232 = sadd.s32 %s231, %s229
      %s233 = smul.addr %s232, 4
      %s234 = scalar_lea.vmem %s0, %s233
      %p235 = pneg %p57
      %p236 = pneg %p54
      %s237 = smul.u32 4, %s22
      %p238 = scmp.lt.s32.totalorder %s237, 3
      %s239 = scalar_select %p238, %s237, 3
      %p240 = scmp.lt.s32.totalorder %s21, 0
      %s241 = scalar_select %p240, %s21, 0
      %s242 = sadd.s32 %s241, %s239
      %s243 = smul.addr %s242, 4
      %s244 = scalar_lea.vmem %s1, %s243
      %p245 = pneg %p85
      %p246 = pneg %p82
      %p247 = scmp.lt.s32.totalorder %s21, 0
      %s248 = scalar_select %p247, %s21, 0
      %s249 = scalar_lea.vmem %s2, %s248
      %p250 = pneg %p111
      %p251 = pneg %p108
      %p252 = scmp.lt.s32.totalorder %s21, 0
      %s253 = scalar_select %p252, %s21, 0
      %s254 = scalar_lea.vmem %s3, %s253
      %p255 = pneg %p137
      %p256 = pneg %p134
      %p257 = pneg %p165
      %p258 = pneg %p162
      %s259 = smul.u32 32, %s20
      %p260 = scmp.lt.s32.totalorder %s259, 63
      %s261 = scalar_select %p260, %s259, 63
      %p262 = scmp.lt.s32.totalorder %s21, 0
      %s263 = scalar_select %p262, %s21, 0
      %s264 = sadd.s32 %s263, %s261
      %s265 = smul.addr %s264, 4
      %s266 = scalar_lea.vmem %s4, %s265
      %s267 = smul.u32 32, %s20
      %p268 = scmp.lt.s32.totalorder %s267, 63
      %s269 = scalar_select %p268, %s267, 63
      %p270 = scmp.lt.s32.totalorder %s22, 0
      %s271 = scalar_select %p270, %s22, 0
      %s272 = sadd.s32 %s271, %s269
      %s273 = smul.addr %s272, 4
      %s274 = scalar_lea.vmem %s0, %s273
      %s275 = smul.u32 32, %s20
      %s276 = smul.u32 4, %s22
      %p277 = scmp.lt.s32.totalorder %s276, 3
      %s278 = scalar_select %p277, %s276, 3
      %p279 = scmp.lt.s32.totalorder %s21, 0
      %s280 = scalar_select %p279, %s21, 0
      %s281 = sadd.s32 %s280, %s278
      %s282 = smul.addr %s281, 4
      %s283 = scalar_lea.vmem %s1, %s282
      %s284 = smul.u32 4, %s22
      %p285 = scmp.lt.s32.totalorder %s21, 0
      %s286 = scalar_select %p285, %s21, 0
      %s287 = scalar_lea.vmem %s2, %s286
      %p288 = scmp.lt.s32.totalorder %s21, 0
      %s289 = scalar_select %p288, %s21, 0
      %s290 = scalar_lea.vmem %s3, %s289
      %s291 = smul.u32 32, %s20
      %p292 = scmp.lt.s32.totalorder %s291, 63
      %s293 = scalar_select %p292, %s291, 63
      %p294 = scmp.lt.s32.totalorder %s21, 0
      %s295 = scalar_select %p294, %s21, 0
      %s296 = sadd.s32 %s295, %s293
      %s297 = smul.addr %s296, 4
      %s298 = scalar_lea.vmem %s4, %s297
      %s299 = smul.u32 32, %s20
      %p301 = scmp.eq.s32.totalorder %s22, 0
      // Predicated region
      $region37: #{bottleneck_forward.4} parent=35 // pred_check
        %p302 = pneg %p301
      $region38: #{bottleneck_forward.4} parent=35 // pred_check_branch
        %304 = sbr.rel (%p302) target = $region40
      $region39: #{bottleneck_forward.4} parent=35 // pred_region
        %305 = vst [vmem:[#allocation2] sm:$0xff] 0.0
        %306 = vst [vmem:[#allocation2 + $0x8] sm:$0xff] 0.0
        %307 = vst [vmem:[#allocation2 + $0x10] sm:$0xff] 0.0
        %308 = vst [vmem:[#allocation2 + $0x18] sm:$0xff] 0.0
        %309 = vst [vmem:[#allocation2 + $0x20] sm:$0xff] 0.0
        %310 = vst [vmem:[#allocation2 + $0x28] sm:$0xff] 0.0
        %311 = vst [vmem:[#allocation2 + $0x30] sm:$0xff] 0.0
        %312 = vst [vmem:[#allocation2 + $0x38] sm:$0xff] 0.0
        %313 = vst [vmem:[#allocation2 + $0x40] sm:$0xff] 0.0
        %314 = vst [vmem:[#allocation2 + $0x48] sm:$0xff] 0.0
        %315 = vst [vmem:[#allocation2 + $0x50] sm:$0xff] 0.0
        %316 = vst [vmem:[#allocation2 + $0x58] sm:$0xff] 0.0
        %317 = vst [vmem:[#allocation2 + $0x60] sm:$0xff] 0.0
        %318 = vst [vmem:[#allocation2 + $0x68] sm:$0xff] 0.0
        %319 = vst [vmem:[#allocation2 + $0x70] sm:$0xff] 0.0
        %320 = vst [vmem:[#allocation2 + $0x78] sm:$0xff] 0.0
        %321 = vst [vmem:[#allocation2 + $0x80] sm:$0xff] 0.0
        %322 = vst [vmem:[#allocation2 + $0x88] sm:$0xff] 0.0
        %323 = vst [vmem:[#allocation2 + $0x90] sm:$0xff] 0.0
        %324 = vst [vmem:[#allocation2 + $0x98] sm:$0xff] 0.0
        %325 = vst [vmem:[#allocation2 + $0xa0] sm:$0xff] 0.0
        %326 = vst [vmem:[#allocation2 + $0xa8] sm:$0xff] 0.0
        %327 = vst [vmem:[#allocation2 + $0xb0] sm:$0xff] 0.0
        %328 = vst [vmem:[#allocation2 + $0xb8] sm:$0xff] 0.0
        %329 = vst [vmem:[#allocation2 + $0xc0] sm:$0xff] 0.0
        %330 = vst [vmem:[#allocation2 + $0xc8] sm:$0xff] 0.0
        %331 = vst [vmem:[#allocation2 + $0xd0] sm:$0xff] 0.0
        %332 = vst [vmem:[#allocation2 + $0xd8] sm:$0xff] 0.0
        %333 = vst [vmem:[#allocation2 + $0xe0] sm:$0xff] 0.0
        %334 = vst [vmem:[#allocation2 + $0xe8] sm:$0xff] 0.0
        %335 = vst [vmem:[#allocation2 + $0xf0] sm:$0xff] 0.0
        %336 = vst [vmem:[#allocation2 + $0xf8] sm:$0xff] 0.0
      $region40: #{bottleneck_forward.4} parent=35 // pred_fallthru
        _
      %v337 = vld [vmem:[#allocation2] sm:$0xff]
      %v338 = vld [vmem:[#allocation2 + $0x8] sm:$0xff]
      %v339 = vld [vmem:[#allocation2 + $0x10] sm:$0xff]
      %v340 = vld [vmem:[#allocation2 + $0x18] sm:$0xff]
      %v341 = vld [vmem:[#allocation2 + $0x20] sm:$0xff]
      %v342 = vld [vmem:[#allocation2 + $0x28] sm:$0xff]
      %v343 = vld [vmem:[#allocation2 + $0x30] sm:$0xff]
      %v344 = vld [vmem:[#allocation2 + $0x38] sm:$0xff]
      %v345 = vld [vmem:[#allocation2 + $0x40] sm:$0xff]
      %v346 = vld [vmem:[#allocation2 + $0x48] sm:$0xff]
      %v347 = vld [vmem:[#allocation2 + $0x50] sm:$0xff]
      %v348 = vld [vmem:[#allocation2 + $0x58] sm:$0xff]
      %v349 = vld [vmem:[#allocation2 + $0x60] sm:$0xff]
      %v350 = vld [vmem:[#allocation2 + $0x68] sm:$0xff]
      %v351 = vld [vmem:[#allocation2 + $0x70] sm:$0xff]
      %v352 = vld [vmem:[#allocation2 + $0x78] sm:$0xff]
      %v353 = vld [vmem:[#allocation2 + $0x80] sm:$0xff]
      %v354 = vld [vmem:[#allocation2 + $0x88] sm:$0xff]
      %v355 = vld [vmem:[#allocation2 + $0x90] sm:$0xff]
      %v356 = vld [vmem:[#allocation2 + $0x98] sm:$0xff]
      %v357 = vld [vmem:[#allocation2 + $0xa0] sm:$0xff]
      %v358 = vld [vmem:[#allocation2 + $0xa8] sm:$0xff]
      %v359 = vld [vmem:[#allocation2 + $0xb0] sm:$0xff]
      %v360 = vld [vmem:[#allocation2 + $0xb8] sm:$0xff]
      %v361 = vld [vmem:[#allocation2 + $0xc0] sm:$0xff]
      %v362 = vld [vmem:[#allocation2 + $0xc8] sm:$0xff]
      %v363 = vld [vmem:[#allocation2 + $0xd0] sm:$0xff]
      %v364 = vld [vmem:[#allocation2 + $0xd8] sm:$0xff]
      %v365 = vld [vmem:[#allocation2 + $0xe0] sm:$0xff]
      %v366 = vld [vmem:[#allocation2 + $0xe8] sm:$0xff]
      %v367 = vld [vmem:[#allocation2 + $0xf0] sm:$0xff]
      %v368 = vld [vmem:[#allocation2 + $0xf8] sm:$0xff]
      %v369 = vld [vmem:[%s274] sm:$0xf]
      %v370 = vld [vmem:[%s274 + $0x4] sm:$0xf]
      %v371 = vld [vmem:[%s274 + $0x8] sm:$0xf]
      %v372 = vld [vmem:[%s274 + $0xc] sm:$0xf]
      %v373 = vld [vmem:[%s274 + $0x10] sm:$0xf]
      %v374 = vld [vmem:[%s274 + $0x14] sm:$0xf]
      %v375 = vld [vmem:[%s274 + $0x18] sm:$0xf]
      %v376 = vld [vmem:[%s274 + $0x1c] sm:$0xf]
      %v377 = vld [vmem:[%s274 + $0x20] sm:$0xf]
      %v378 = vld [vmem:[%s274 + $0x24] sm:$0xf]
      %v379 = vld [vmem:[%s274 + $0x28] sm:$0xf]
      %v380 = vld [vmem:[%s274 + $0x2c] sm:$0xf]
      %v381 = vld [vmem:[%s274 + $0x30] sm:$0xf]
      %v382 = vld [vmem:[%s274 + $0x34] sm:$0xf]
      %v383 = vld [vmem:[%s274 + $0x38] sm:$0xf]
      %v384 = vld [vmem:[%s274 + $0x3c] sm:$0xf]
      %v385 = vld [vmem:[%s274 + $0x40] sm:$0xf]
      %v386 = vld [vmem:[%s274 + $0x44] sm:$0xf]
      %v387 = vld [vmem:[%s274 + $0x48] sm:$0xf]
      %v388 = vld [vmem:[%s274 + $0x4c] sm:$0xf]
      %v389 = vld [vmem:[%s274 + $0x50] sm:$0xf]
      %v390 = vld [vmem:[%s274 + $0x54] sm:$0xf]
      %v391 = vld [vmem:[%s274 + $0x58] sm:$0xf]
      %v392 = vld [vmem:[%s274 + $0x5c] sm:$0xf]
      %v393 = vld [vmem:[%s274 + $0x60] sm:$0xf]
      %v394 = vld [vmem:[%s274 + $0x64] sm:$0xf]
      %v395 = vld [vmem:[%s274 + $0x68] sm:$0xf]
      %v396 = vld [vmem:[%s274 + $0x6c] sm:$0xf]
      %v397 = vld [vmem:[%s274 + $0x70] sm:$0xf]
      %v398 = vld [vmem:[%s274 + $0x74] sm:$0xf]
      %v399 = vld [vmem:[%s274 + $0x78] sm:$0xf]
      %v400 = vld [vmem:[%s274 + $0x7c] sm:$0xf]
      %v401 = vld [vmem:[%s283] sm:$0xf]
      %v402 = vld [vmem:[%s283 + $0x4] sm:$0xf]
      %v403 = vld [vmem:[%s283 + $0x8] sm:$0xf]
      %v404 = vld [vmem:[%s283 + $0xc] sm:$0xf]
      %v437 = vunpack.c.l.b16 %v369
      %v438 = vunpack.c.l.b16 %v370
      %v439 = vunpack.c.l.b16 %v371
      %v440 = vunpack.c.l.b16 %v372
      %v441 = vunpack.c.l.b16 %v373
      %v442 = vunpack.c.l.b16 %v374
      %v443 = vunpack.c.l.b16 %v375
      %v444 = vunpack.c.l.b16 %v376
      %v445 = vunpack.c.l.b16 %v377
      %v446 = vunpack.c.l.b16 %v378
      %v447 = vunpack.c.l.b16 %v379
      %v448 = vunpack.c.l.b16 %v380
      %v449 = vunpack.c.l.b16 %v381
      %v450 = vunpack.c.l.b16 %v382
      %v451 = vunpack.c.l.b16 %v383
      %v452 = vunpack.c.l.b16 %v384
      %v453 = vunpack.c.l.b16 %v385
      %v454 = vunpack.c.l.b16 %v386
      %v455 = vunpack.c.l.b16 %v387
      %v456 = vunpack.c.l.b16 %v388
      %v457 = vunpack.c.l.b16 %v389
      %v458 = vunpack.c.l.b16 %v390
      %v459 = vunpack.c.l.b16 %v391
      %v460 = vunpack.c.l.b16 %v392
      %v461 = vunpack.c.l.b16 %v393
      %v462 = vunpack.c.l.b16 %v394
      %v463 = vunpack.c.l.b16 %v395
      %v464 = vunpack.c.l.b16 %v396
      %v465 = vunpack.c.l.b16 %v397
      %v466 = vunpack.c.l.b16 %v398
      %v467 = vunpack.c.l.b16 %v399
      %v468 = vunpack.c.l.b16 %v400
      %v469 = vpack.c.b16 %v438, %v437
      %v470 = vpack.c.b16 %v440, %v439
      %v471 = vpack.c.b16 %v442, %v441
      %v472 = vpack.c.b16 %v444, %v443
      %v473 = vpack.c.b16 %v446, %v445
      %v474 = vpack.c.b16 %v448, %v447
      %v475 = vpack.c.b16 %v450, %v449
      %v476 = vpack.c.b16 %v452, %v451
      %v477 = vpack.c.b16 %v454, %v453
      %v478 = vpack.c.b16 %v456, %v455
      %v479 = vpack.c.b16 %v458, %v457
      %v480 = vpack.c.b16 %v460, %v459
      %v481 = vpack.c.b16 %v462, %v461
      %v482 = vpack.c.b16 %v464, %v463
      %v483 = vpack.c.b16 %v466, %v465
      %v484 = vpack.c.b16 %v468, %v467
      %v489 = vunpack.c.l.b16 %v401
      %v490 = vunpack.c.l.b16 %v402
      %v491 = vunpack.c.l.b16 %v403
      %v492 = vunpack.c.l.b16 %v404
      %v493 = vpack.c.b16 %v490, %v489
      %v494 = vpack.c.b16 %v492, %v491
      %vm497 = vcmask 261120
      %v499 = vsel %vm497, %v469, 0
      %v502 = vsel %vm497, %v470, 0
      %v505 = vsel %vm497, %v471, 0
      %v508 = vsel %vm497, %v472, 0
      %v511 = vsel %vm497, %v473, 0
      %v514 = vsel %vm497, %v474, 0
      %v517 = vsel %vm497, %v475, 0
      %v520 = vsel %vm497, %v476, 0
      %v523 = vsel %vm497, %v477, 0
      %v526 = vsel %vm497, %v478, 0
      %v529 = vsel %vm497, %v479, 0
      %v532 = vsel %vm497, %v480, 0
      %v535 = vsel %vm497, %v481, 0
      %v538 = vsel %vm497, %v482, 0
      %v541 = vsel %vm497, %v483, 0
      %v544 = vsel %vm497, %v484, 0
      %546 = vmatprep.subr.bf16.mxu0 0
      %547 = vmatpush1.bf16.msra.mxu0 0
      %548 = vmatprep.subr.bf16.mxu0 0
      %549 = vmatpush1.bf16.msra.mxu0 0
      %550 = vmatprep.subr.bf16.mxu0 0
      %551 = vmatpush1.bf16.msra.mxu0 0
      %552 = vmatprep.subr.bf16.mxu0 0
      %553 = vmatpush1.bf16.msra.mxu0 0
      %554 = vmatprep.subr.bf16.mxu0 0
      %555 = vmatpush1.bf16.msra.mxu0 0
      %556 = vmatprep.subr.bf16.mxu0 0
      %557 = vmatpush1.bf16.msra.mxu0 0
      %558 = vmatprep.subr.bf16.mxu0 0
      %559 = vmatpush1.bf16.msra.mxu0 %v494
      %560 = vmatprep.subr.bf16.mxu0 0
      %561 = vmatpush1.bf16.msra.mxu0 %v493
      %562 = vmatprep.subr.bf16.mxu0 0
      %563 = vmatpush2.bf16.msra.mxu0 0
      %564 = vmatprep.subr.bf16.mxu0 0
      %565 = vmatpush2.bf16.msra.mxu0 0
      %566 = vmatprep.subr.bf16.mxu0 0
      %567 = vmatpush2.bf16.msra.mxu0 0
      %568 = vmatprep.subr.bf16.mxu0 0
      %569 = vmatpush2.bf16.msra.mxu0 0
      %570 = vmatprep.subr.bf16.mxu0 0
      %571 = vmatpush2.bf16.msra.mxu0 0
      %572 = vmatprep.subr.bf16.mxu0 0
      %573 = vmatpush2.bf16.msra.mxu0 0
      %574 = vmatprep.subr.bf16.mxu0 0
      %575 = vmatpush2.bf16.msra.mxu0 0
      %576 = vmatprep.subr.bf16.mxu0 0
      %577 = vmatpush2.bf16.msra.mxu0 0
      %578 = vmatprep.mubr.bf16.mxu0 0
      %579 = vmatmul.mubr.bf16.gmra.mxu0 %v499
      %v580 = vpop.f32.mrf.mxu0
      %v581 = vadd.f32 0.0, %v580
      %v582 = vpop.f32.mrf.mxu0
      %v583 = vpop.f32.mrf.mxu0
      %v584 = vadd.f32 0.0, %v583
      %v585 = vpop.f32.mrf.mxu0
      %586 = vmatprep.mubr.bf16.mxu0 0
      %587 = vmatmul.mubr.bf16.gmra.mxu0 %v502
      %v588 = vpop.f32.mrf.mxu0
      %v589 = vadd.f32 0.0, %v588
      %v590 = vpop.f32.mrf.mxu0
      %v591 = vpop.f32.mrf.mxu0
      %v592 = vadd.f32 0.0, %v591
      %v593 = vpop.f32.mrf.mxu0
      %594 = vmatprep.mubr.bf16.mxu0 0
      %595 = vmatmul.mubr.bf16.gmra.mxu0 %v505
      %v596 = vpop.f32.mrf.mxu0
      %v597 = vadd.f32 0.0, %v596
      %v598 = vpop.f32.mrf.mxu0
      %v599 = vpop.f32.mrf.mxu0
      %v600 = vadd.f32 0.0, %v599
      %v601 = vpop.f32.mrf.mxu0
      %602 = vmatprep.mubr.bf16.mxu0 0
      %603 = vmatmul.mubr.bf16.gmra.mxu0 %v508
      %v604 = vpop.f32.mrf.mxu0
      %v605 = vadd.f32 0.0, %v604
      %v606 = vpop.f32.mrf.mxu0
      %v607 = vpop.f32.mrf.mxu0
      %v608 = vadd.f32 0.0, %v607
      %v609 = vpop.f32.mrf.mxu0
      %610 = vmatprep.mubr.bf16.mxu0 0
      %611 = vmatmul.mubr.bf16.gmra.mxu0 %v511
      %v612 = vpop.f32.mrf.mxu0
      %v613 = vadd.f32 0.0, %v612
      %v614 = vpop.f32.mrf.mxu0
      %v615 = vpop.f32.mrf.mxu0
      %v616 = vadd.f32 0.0, %v615
      %v617 = vpop.f32.mrf.mxu0
      %618 = vmatprep.mubr.bf16.mxu0 0
      %619 = vmatmul.mubr.bf16.gmra.mxu0 %v514
      %v620 = vpop.f32.mrf.mxu0
      %v621 = vadd.f32 0.0, %v620
      %v622 = vpop.f32.mrf.mxu0
      %v623 = vpop.f32.mrf.mxu0
      %v624 = vadd.f32 0.0, %v623
      %v625 = vpop.f32.mrf.mxu0
      %626 = vmatprep.mubr.bf16.mxu0 0
      %627 = vmatmul.mubr.bf16.gmra.mxu0 %v517
      %v628 = vpop.f32.mrf.mxu0
      %v629 = vadd.f32 0.0, %v628
      %v630 = vpop.f32.mrf.mxu0
      %v631 = vpop.f32.mrf.mxu0
      %v632 = vadd.f32 0.0, %v631
      %v633 = vpop.f32.mrf.mxu0
      %634 = vmatprep.mubr.bf16.mxu0 0
      %635 = vmatmul.mubr.bf16.gmra.mxu0 %v520
      %v636 = vpop.f32.mrf.mxu0
      %v637 = vadd.f32 0.0, %v636
      %v638 = vpop.f32.mrf.mxu0
      %v639 = vpop.f32.mrf.mxu0
      %v640 = vadd.f32 0.0, %v639
      %v641 = vpop.f32.mrf.mxu0
      %642 = vmatprep.mubr.bf16.mxu0 0
      %643 = vmatmul.mubr.bf16.gmra.mxu0 %v523
      %v644 = vpop.f32.mrf.mxu0
      %v645 = vadd.f32 0.0, %v644
      %v646 = vpop.f32.mrf.mxu0
      %v647 = vpop.f32.mrf.mxu0
      %v648 = vadd.f32 0.0, %v647
      %v649 = vpop.f32.mrf.mxu0
      %650 = vmatprep.mubr.bf16.mxu0 0
      %651 = vmatmul.mubr.bf16.gmra.mxu0 %v526
      %v652 = vpop.f32.mrf.mxu0
      %v653 = vadd.f32 0.0, %v652
      %v654 = vpop.f32.mrf.mxu0
      %v655 = vpop.f32.mrf.mxu0
      %v656 = vadd.f32 0.0, %v655
      %v657 = vpop.f32.mrf.mxu0
      %658 = vmatprep.mubr.bf16.mxu0 0
      %659 = vmatmul.mubr.bf16.gmra.mxu0 %v529
      %v660 = vpop.f32.mrf.mxu0
      %v661 = vadd.f32 0.0, %v660
      %v662 = vpop.f32.mrf.mxu0
      %v663 = vpop.f32.mrf.mxu0
      %v664 = vadd.f32 0.0, %v663
      %v665 = vpop.f32.mrf.mxu0
      %666 = vmatprep.mubr.bf16.mxu0 0
      %667 = vmatmul.mubr.bf16.gmra.mxu0 %v532
      %v668 = vpop.f32.mrf.mxu0
      %v669 = vadd.f32 0.0, %v668
      %v670 = vpop.f32.mrf.mxu0
      %v671 = vpop.f32.mrf.mxu0
      %v672 = vadd.f32 0.0, %v671
      %v673 = vpop.f32.mrf.mxu0
      %674 = vmatprep.mubr.bf16.mxu0 0
      %675 = vmatmul.mubr.bf16.gmra.mxu0 %v535
      %v676 = vpop.f32.mrf.mxu0
      %v677 = vadd.f32 0.0, %v676
      %v678 = vpop.f32.mrf.mxu0
      %v679 = vpop.f32.mrf.mxu0
      %v680 = vadd.f32 0.0, %v679
      %v681 = vpop.f32.mrf.mxu0
      %682 = vmatprep.mubr.bf16.mxu0 0
      %683 = vmatmul.mubr.bf16.gmra.mxu0 %v538
      %v684 = vpop.f32.mrf.mxu0
      %v685 = vadd.f32 0.0, %v684
      %v686 = vpop.f32.mrf.mxu0
      %v687 = vpop.f32.mrf.mxu0
      %v688 = vadd.f32 0.0, %v687
      %v689 = vpop.f32.mrf.mxu0
      %690 = vmatprep.mubr.bf16.mxu0 0
      %691 = vmatmul.mubr.bf16.gmra.mxu0 %v541
      %v692 = vpop.f32.mrf.mxu0
      %v693 = vadd.f32 0.0, %v692
      %v694 = vpop.f32.mrf.mxu0
      %v695 = vpop.f32.mrf.mxu0
      %v696 = vadd.f32 0.0, %v695
      %v697 = vpop.f32.mrf.mxu0
      %698 = vmatprep.mubr.bf16.mxu0 0
      %699 = vmatmul.mubr.bf16.gmra.mxu0 %v544
      %v700 = vpop.f32.mrf.mxu0
      %v701 = vadd.f32 0.0, %v700
      %v702 = vpop.f32.mrf.mxu0
      %v703 = vpop.f32.mrf.mxu0
      %v704 = vadd.f32 0.0, %v703
      %v705 = vpop.f32.mrf.mxu0
      %706 = vdwg.mxu0
      %v707 = vadd.f32 %v337, %v581
      %v708 = vadd.f32 %v338, %v584
      %v709 = vadd.f32 %v339, %v589
      %v710 = vadd.f32 %v340, %v592
      %v711 = vadd.f32 %v341, %v597
      %v712 = vadd.f32 %v342, %v600
      %v713 = vadd.f32 %v343, %v605
      %v714 = vadd.f32 %v344, %v608
      %v715 = vadd.f32 %v345, %v613
      %v716 = vadd.f32 %v346, %v616
      %v717 = vadd.f32 %v347, %v621
      %v718 = vadd.f32 %v348, %v624
      %v719 = vadd.f32 %v349, %v629
      %v720 = vadd.f32 %v350, %v632
      %v721 = vadd.f32 %v351, %v637
      %v722 = vadd.f32 %v352, %v640
      %v723 = vadd.f32 %v353, %v645
      %v724 = vadd.f32 %v354, %v648
      %v725 = vadd.f32 %v355, %v653
      %v726 = vadd.f32 %v356, %v656
      %v727 = vadd.f32 %v357, %v661
      %v728 = vadd.f32 %v358, %v664
      %v729 = vadd.f32 %v359, %v669
      %v730 = vadd.f32 %v360, %v672
      %v731 = vadd.f32 %v361, %v677
      %v732 = vadd.f32 %v362, %v680
      %v733 = vadd.f32 %v363, %v685
      %v734 = vadd.f32 %v364, %v688
      %v735 = vadd.f32 %v365, %v693
      %v736 = vadd.f32 %v366, %v696
      %v737 = vadd.f32 %v367, %v701
      %v738 = vadd.f32 %v368, %v704
      %739 = vst [vmem:[#allocation2] sm:$0xff] %v707
      %740 = vst [vmem:[#allocation2 + $0x8] sm:$0xff] %v708
      %741 = vst [vmem:[#allocation2 + $0x10] sm:$0xff] %v709
      %742 = vst [vmem:[#allocation2 + $0x18] sm:$0xff] %v710
      %743 = vst [vmem:[#allocation2 + $0x20] sm:$0xff] %v711
      %744 = vst [vmem:[#allocation2 + $0x28] sm:$0xff] %v712
      %745 = vst [vmem:[#allocation2 + $0x30] sm:$0xff] %v713
      %746 = vst [vmem:[#allocation2 + $0x38] sm:$0xff] %v714
      %747 = vst [vmem:[#allocation2 + $0x40] sm:$0xff] %v715
      %748 = vst [vmem:[#allocation2 + $0x48] sm:$0xff] %v716
      %749 = vst [vmem:[#allocation2 + $0x50] sm:$0xff] %v717
      %750 = vst [vmem:[#allocation2 + $0x58] sm:$0xff] %v718
      %751 = vst [vmem:[#allocation2 + $0x60] sm:$0xff] %v719
      %752 = vst [vmem:[#allocation2 + $0x68] sm:$0xff] %v720
      %753 = vst [vmem:[#allocation2 + $0x70] sm:$0xff] %v721
      %754 = vst [vmem:[#allocation2 + $0x78] sm:$0xff] %v722
      %755 = vst [vmem:[#allocation2 + $0x80] sm:$0xff] %v723
      %756 = vst [vmem:[#allocation2 + $0x88] sm:$0xff] %v724
      %757 = vst [vmem:[#allocation2 + $0x90] sm:$0xff] %v725
      %758 = vst [vmem:[#allocation2 + $0x98] sm:$0xff] %v726
      %759 = vst [vmem:[#allocation2 + $0xa0] sm:$0xff] %v727
      %760 = vst [vmem:[#allocation2 + $0xa8] sm:$0xff] %v728
      %761 = vst [vmem:[#allocation2 + $0xb0] sm:$0xff] %v729
      %762 = vst [vmem:[#allocation2 + $0xb8] sm:$0xff] %v730
      %763 = vst [vmem:[#allocation2 + $0xc0] sm:$0xff] %v731
      %764 = vst [vmem:[#allocation2 + $0xc8] sm:$0xff] %v732
      %765 = vst [vmem:[#allocation2 + $0xd0] sm:$0xff] %v733
      %766 = vst [vmem:[#allocation2 + $0xd8] sm:$0xff] %v734
      %767 = vst [vmem:[#allocation2 + $0xe0] sm:$0xff] %v735
      %768 = vst [vmem:[#allocation2 + $0xe8] sm:$0xff] %v736
      %769 = vst [vmem:[#allocation2 + $0xf0] sm:$0xff] %v737
      %770 = vst [vmem:[#allocation2 + $0xf8] sm:$0xff] %v738
      // Predicated region
      $region41: #{bottleneck_forward.4} parent=35 // pred_check
        %p771 = pneg %p301
      $region42: #{bottleneck_forward.4} parent=35 // pred_check_branch
        %773 = sbr.rel (%p771) target = $region44
      $region43: #{bottleneck_forward.4} parent=35 // pred_region
        %v774 = vld [vmem:[#allocation2] sm:$0xff]
        %v775 = vld [vmem:[#allocation2 + $0x8] sm:$0xff]
        %v776 = vld [vmem:[#allocation2 + $0x10] sm:$0xff]
        %v777 = vld [vmem:[#allocation2 + $0x18] sm:$0xff]
        %v778 = vld [vmem:[#allocation2 + $0x20] sm:$0xff]
        %v779 = vld [vmem:[#allocation2 + $0x28] sm:$0xff]
        %v780 = vld [vmem:[#allocation2 + $0x30] sm:$0xff]
        %v781 = vld [vmem:[#allocation2 + $0x38] sm:$0xff]
        %v782 = vld [vmem:[#allocation2 + $0x40] sm:$0xff]
        %v783 = vld [vmem:[#allocation2 + $0x48] sm:$0xff]
        %v784 = vld [vmem:[#allocation2 + $0x50] sm:$0xff]
        %v785 = vld [vmem:[#allocation2 + $0x58] sm:$0xff]
        %v786 = vld [vmem:[#allocation2 + $0x60] sm:$0xff]
        %v787 = vld [vmem:[#allocation2 + $0x68] sm:$0xff]
        %v788 = vld [vmem:[#allocation2 + $0x70] sm:$0xff]
        %v789 = vld [vmem:[#allocation2 + $0x78] sm:$0xff]
        %v790 = vld [vmem:[#allocation2 + $0x80] sm:$0xff]
        %v791 = vld [vmem:[#allocation2 + $0x88] sm:$0xff]
        %v792 = vld [vmem:[#allocation2 + $0x90] sm:$0xff]
        %v793 = vld [vmem:[#allocation2 + $0x98] sm:$0xff]
        %v794 = vld [vmem:[#allocation2 + $0xa0] sm:$0xff]
        %v795 = vld [vmem:[#allocation2 + $0xa8] sm:$0xff]
        %v796 = vld [vmem:[#allocation2 + $0xb0] sm:$0xff]
        %v797 = vld [vmem:[#allocation2 + $0xb8] sm:$0xff]
        %v798 = vld [vmem:[#allocation2 + $0xc0] sm:$0xff]
        %v799 = vld [vmem:[#allocation2 + $0xc8] sm:$0xff]
        %v800 = vld [vmem:[#allocation2 + $0xd0] sm:$0xff]
        %v801 = vld [vmem:[#allocation2 + $0xd8] sm:$0xff]
        %v802 = vld [vmem:[#allocation2 + $0xe0] sm:$0xff]
        %v803 = vld [vmem:[#allocation2 + $0xe8] sm:$0xff]
        %v804 = vld [vmem:[#allocation2 + $0xf0] sm:$0xff]
        %v805 = vld [vmem:[#allocation2 + $0xf8] sm:$0xff]
        %v806 = vld [vmem:[%s287] sm:$0x1]
        %v808 = vlaneseq
        %v809 = vshrl.u32 %v808, 7
        %v810 = vsub.s32 0, %v809
        %v811 = vrot.slane %v806, %v810
        %v813 = vmul.f32 %v774, %v811
        %v814 = vmul.f32 %v775, %v811
        %v815 = vmul.f32 %v776, %v811
        %v816 = vmul.f32 %v777, %v811
        %v817 = vmul.f32 %v778, %v811
        %v818 = vmul.f32 %v779, %v811
        %v819 = vmul.f32 %v780, %v811
        %v820 = vmul.f32 %v781, %v811
        %v821 = vmul.f32 %v782, %v811
        %v822 = vmul.f32 %v783, %v811
        %v823 = vmul.f32 %v784, %v811
        %v824 = vmul.f32 %v785, %v811
        %v825 = vmul.f32 %v786, %v811
        %v826 = vmul.f32 %v787, %v811
        %v827 = vmul.f32 %v788, %v811
        %v828 = vmul.f32 %v789, %v811
        %v829 = vmul.f32 %v790, %v811
        %v830 = vmul.f32 %v791, %v811
        %v831 = vmul.f32 %v792, %v811
        %v832 = vmul.f32 %v793, %v811
        %v833 = vmul.f32 %v794, %v811
        %v834 = vmul.f32 %v795, %v811
        %v835 = vmul.f32 %v796, %v811
        %v836 = vmul.f32 %v797, %v811
        %v837 = vmul.f32 %v798, %v811
        %v838 = vmul.f32 %v799, %v811
        %v839 = vmul.f32 %v800, %v811
        %v840 = vmul.f32 %v801, %v811
        %v841 = vmul.f32 %v802, %v811
        %v842 = vmul.f32 %v803, %v811
        %v843 = vmul.f32 %v804, %v811
        %v844 = vmul.f32 %v805, %v811
        %v845 = vld [vmem:[%s290] sm:$0x1]
        %v847 = vlaneseq
        %v848 = vshrl.u32 %v847, 7
        %v849 = vsub.s32 0, %v848
        %v850 = vrot.slane %v845, %v849
        %v852 = vadd.f32 %v813, %v850
        %v853 = vadd.f32 %v814, %v850
        %v854 = vadd.f32 %v815, %v850
        %v855 = vadd.f32 %v816, %v850
        %v856 = vadd.f32 %v817, %v850
        %v857 = vadd.f32 %v818, %v850
        %v858 = vadd.f32 %v819, %v850
        %v859 = vadd.f32 %v820, %v850
        %v860 = vadd.f32 %v821, %v850
        %v861 = vadd.f32 %v822, %v850
        %v862 = vadd.f32 %v823, %v850
        %v863 = vadd.f32 %v824, %v850
        %v864 = vadd.f32 %v825, %v850
        %v865 = vadd.f32 %v826, %v850
        %v866 = vadd.f32 %v827, %v850
        %v867 = vadd.f32 %v828, %v850
        %v868 = vadd.f32 %v829, %v850
        %v869 = vadd.f32 %v830, %v850
        %v870 = vadd.f32 %v831, %v850
        %v871 = vadd.f32 %v832, %v850
        %v872 = vadd.f32 %v833, %v850
        %v873 = vadd.f32 %v834, %v850
        %v874 = vadd.f32 %v835, %v850
        %v875 = vadd.f32 %v836, %v850
        %v876 = vadd.f32 %v837, %v850
        %v877 = vadd.f32 %v838, %v850
        %v878 = vadd.f32 %v839, %v850
        %v879 = vadd.f32 %v840, %v850
        %v880 = vadd.f32 %v841, %v850
        %v881 = vadd.f32 %v842, %v850
        %v882 = vadd.f32 %v843, %v850
        %v883 = vadd.f32 %v844, %v850
        %v884 = vmax.f32 %v852, 0.0
        %v885 = vmax.f32 %v853, 0.0
        %v886 = vmax.f32 %v854, 0.0
        %v887 = vmax.f32 %v855, 0.0
        %v888 = vmax.f32 %v856, 0.0
        %v889 = vmax.f32 %v857, 0.0
        %v890 = vmax.f32 %v858, 0.0
        %v891 = vmax.f32 %v859, 0.0
        %v892 = vmax.f32 %v860, 0.0
        %v893 = vmax.f32 %v861, 0.0
        %v894 = vmax.f32 %v862, 0.0
        %v895 = vmax.f32 %v863, 0.0
        %v896 = vmax.f32 %v864, 0.0
        %v897 = vmax.f32 %v865, 0.0
        %v898 = vmax.f32 %v866, 0.0
        %v899 = vmax.f32 %v867, 0.0
        %v900 = vmax.f32 %v868, 0.0
        %v901 = vmax.f32 %v869, 0.0
        %v902 = vmax.f32 %v870, 0.0
        %v903 = vmax.f32 %v871, 0.0
        %v904 = vmax.f32 %v872, 0.0
        %v905 = vmax.f32 %v873, 0.0
        %v906 = vmax.f32 %v874, 0.0
        %v907 = vmax.f32 %v875, 0.0
        %v908 = vmax.f32 %v876, 0.0
        %v909 = vmax.f32 %v877, 0.0
        %v910 = vmax.f32 %v878, 0.0
        %v911 = vmax.f32 %v879, 0.0
        %v912 = vmax.f32 %v880, 0.0
        %v913 = vmax.f32 %v881, 0.0
        %v914 = vmax.f32 %v882, 0.0
        %v915 = vmax.f32 %v883, 0.0
        %v916 = vpack.c.bf16 %v885, %v884
        %v917 = vpack.c.bf16 %v887, %v886
        %v918 = vpack.c.bf16 %v889, %v888
        %v919 = vpack.c.bf16 %v891, %v890
        %v920 = vpack.c.bf16 %v893, %v892
        %v921 = vpack.c.bf16 %v895, %v894
        %v922 = vpack.c.bf16 %v897, %v896
        %v923 = vpack.c.bf16 %v899, %v898
        %v924 = vpack.c.bf16 %v901, %v900
        %v925 = vpack.c.bf16 %v903, %v902
        %v926 = vpack.c.bf16 %v905, %v904
        %v927 = vpack.c.bf16 %v907, %v906
        %v928 = vpack.c.bf16 %v909, %v908
        %v929 = vpack.c.bf16 %v911, %v910
        %v930 = vpack.c.bf16 %v913, %v912
        %v931 = vpack.c.bf16 %v915, %v914
        %v948 = vunpack.c.l.b16 %v916
        %v949 = vunpack.c.h.b16 %v916
        %v950 = vunpack.c.l.b16 %v917
        %v951 = vunpack.c.h.b16 %v917
        %v952 = vunpack.c.l.b16 %v918
        %v953 = vunpack.c.h.b16 %v918
        %v954 = vunpack.c.l.b16 %v919
        %v955 = vunpack.c.h.b16 %v919
        %v956 = vunpack.c.l.b16 %v920
        %v957 = vunpack.c.h.b16 %v920
        %v958 = vunpack.c.l.b16 %v921
        %v959 = vunpack.c.h.b16 %v921
        %v960 = vunpack.c.l.b16 %v922
        %v961 = vunpack.c.h.b16 %v922
        %v962 = vunpack.c.l.b16 %v923
        %v963 = vunpack.c.h.b16 %v923
        %v964 = vunpack.c.l.b16 %v924
        %v965 = vunpack.c.h.b16 %v924
        %v966 = vunpack.c.l.b16 %v925
        %v967 = vunpack.c.h.b16 %v925
        %v968 = vunpack.c.l.b16 %v926
        %v969 = vunpack.c.h.b16 %v926
        %v970 = vunpack.c.l.b16 %v927
        %v971 = vunpack.c.h.b16 %v927
        %v972 = vunpack.c.l.b16 %v928
        %v973 = vunpack.c.h.b16 %v928
        %v974 = vunpack.c.l.b16 %v929
        %v975 = vunpack.c.h.b16 %v929
        %v976 = vunpack.c.l.b16 %v930
        %v977 = vunpack.c.h.b16 %v930
        %v978 = vunpack.c.l.b16 %v931
        %v979 = vunpack.c.h.b16 %v931
        %v980 = vpack.c.b16 %v948, %v948
        %v981 = vpack.c.b16 %v949, %v949
        %v982 = vpack.c.b16 %v950, %v950
        %v983 = vpack.c.b16 %v951, %v951
        %v984 = vpack.c.b16 %v952, %v952
        %v985 = vpack.c.b16 %v953, %v953
        %v986 = vpack.c.b16 %v954, %v954
        %v987 = vpack.c.b16 %v955, %v955
        %v988 = vpack.c.b16 %v956, %v956
        %v989 = vpack.c.b16 %v957, %v957
        %v990 = vpack.c.b16 %v958, %v958
        %v991 = vpack.c.b16 %v959, %v959
        %v992 = vpack.c.b16 %v960, %v960
        %v993 = vpack.c.b16 %v961, %v961
        %v994 = vpack.c.b16 %v962, %v962
        %v995 = vpack.c.b16 %v963, %v963
        %v996 = vpack.c.b16 %v964, %v964
        %v997 = vpack.c.b16 %v965, %v965
        %v998 = vpack.c.b16 %v966, %v966
        %v999 = vpack.c.b16 %v967, %v967
        %v1000 = vpack.c.b16 %v968, %v968
        %v1001 = vpack.c.b16 %v969, %v969
        %v1002 = vpack.c.b16 %v970, %v970
        %v1003 = vpack.c.b16 %v971, %v971
        %v1004 = vpack.c.b16 %v972, %v972
        %v1005 = vpack.c.b16 %v973, %v973
        %v1006 = vpack.c.b16 %v974, %v974
        %v1007 = vpack.c.b16 %v975, %v975
        %v1008 = vpack.c.b16 %v976, %v976
        %v1009 = vpack.c.b16 %v977, %v977
        %v1010 = vpack.c.b16 %v978, %v978
        %v1011 = vpack.c.b16 %v979, %v979
        %1044 = vst [vmem:[%s298] sm:$0xf] %v980
        %1045 = vst [vmem:[%s298 + $0x4] sm:$0xf] %v981
        %1046 = vst [vmem:[%s298 + $0x8] sm:$0xf] %v982
        %1047 = vst [vmem:[%s298 + $0xc] sm:$0xf] %v983
        %1048 = vst [vmem:[%s298 + $0x10] sm:$0xf] %v984
        %1049 = vst [vmem:[%s298 + $0x14] sm:$0xf] %v985
        %1050 = vst [vmem:[%s298 + $0x18] sm:$0xf] %v986
        %1051 = vst [vmem:[%s298 + $0x1c] sm:$0xf] %v987
        %1052 = vst [vmem:[%s298 + $0x20] sm:$0xf] %v988
        %1053 = vst [vmem:[%s298 + $0x24] sm:$0xf] %v989
        %1054 = vst [vmem:[%s298 + $0x28] sm:$0xf] %v990
        %1055 = vst [vmem:[%s298 + $0x2c] sm:$0xf] %v991
        %1056 = vst [vmem:[%s298 + $0x30] sm:$0xf] %v992
        %1057 = vst [vmem:[%s298 + $0x34] sm:$0xf] %v993
        %1058 = vst [vmem:[%s298 + $0x38] sm:$0xf] %v994
        %1059 = vst [vmem:[%s298 + $0x3c] sm:$0xf] %v995
        %1060 = vst [vmem:[%s298 + $0x40] sm:$0xf] %v996
        %1061 = vst [vmem:[%s298 + $0x44] sm:$0xf] %v997
        %1062 = vst [vmem:[%s298 + $0x48] sm:$0xf] %v998
        %1063 = vst [vmem:[%s298 + $0x4c] sm:$0xf] %v999
        %1064 = vst [vmem:[%s298 + $0x50] sm:$0xf] %v1000
        %1065 = vst [vmem:[%s298 + $0x54] sm:$0xf] %v1001
        %1066 = vst [vmem:[%s298 + $0x58] sm:$0xf] %v1002
        %1067 = vst [vmem:[%s298 + $0x5c] sm:$0xf] %v1003
        %1068 = vst [vmem:[%s298 + $0x60] sm:$0xf] %v1004
        %1069 = vst [vmem:[%s298 + $0x64] sm:$0xf] %v1005
        %1070 = vst [vmem:[%s298 + $0x68] sm:$0xf] %v1006
        %1071 = vst [vmem:[%s298 + $0x6c] sm:$0xf] %v1007
        %1072 = vst [vmem:[%s298 + $0x70] sm:$0xf] %v1008
        %1073 = vst [vmem:[%s298 + $0x74] sm:$0xf] %v1009
        %1074 = vst [vmem:[%s298 + $0x78] sm:$0xf] %v1010
        %1075 = vst [vmem:[%s298 + $0x7c] sm:$0xf] %v1011
      $region44: #{bottleneck_forward.4} parent=35 // pred_fallthru
        _
      %s1076 = smul.u32 32, %s20
      %p1077 = scmp.lt.s32.totalorder %s1076, 63
      %s1078 = scalar_select %p1077, %s1076, 63
      %p1079 = scmp.lt.s32.totalorder %s21, 0
      %s1080 = scalar_select %p1079, %s21, 0
      %s1081 = sadd.s32 %s1080, %s1078
      %s1082 = smul.addr %s1081, 4
      %s1083 = scalar_lea.vmem %s4, %s1082
      // Predicated region
      $region45: #{bottleneck_forward.4} parent=35 // pred_check
        %p1084 = pneg %p162
      $region46: #{bottleneck_forward.4} parent=35 // pred_check_branch
        %1086 = sbr.rel (%p1084) target = $region48
      $region47: #{bottleneck_forward.4} parent=35 // pred_region
        %s1087 = smul.u32 32, %s20
      $region48: #{bottleneck_forward.4} parent=35 // pred_fallthru
        _
    $region36: #{bottleneck_forward.4} parent=5 // pred_fallthru
      _
    %p1088 = scmp.le.s32.totalorder 2, %s10
    // Predicated region
    $region49: #{bottleneck_forward.4} parent=5 // pred_check
      %p1089 = pneg %p1088
    $region50: #{bottleneck_forward.4} parent=5 // pred_check_branch
      %1091 = sbr.rel (%p1089) target = $region52
    $region51: #{bottleneck_forward.4} parent=5 // pred_region
      %s1092 = ssub.s32 %s10, 2
      // Predicated region
      $region53: #{bottleneck_forward.4} parent=51 // pred_check
        %p1093 = pneg %p168
      $region54: #{bottleneck_forward.4} parent=51 // pred_check_branch
        %1095 = sbr.rel (%p1093) target = $region56
      $region55: #{bottleneck_forward.4} parent=51 // pred_region
        %s1096 = smul.u32 32, %s23
        %p1097 = scmp.lt.s32.totalorder %s1096, 63
        %s1098 = scalar_select %p1097, %s1096, 63
        %p1099 = scmp.lt.s32.totalorder %s24, 0
        %s1100 = scalar_select %p1099, %s24, 0
        %s1101 = sadd.s32 %s1100, %s1098
        %s1102 = smul.addr %s1101, 4
        %s1103 = scalar_lea.vmem %s4, %s1102
      $region56: #{bottleneck_forward.4} parent=51 // pred_fallthru
        _
    $region52: #{bottleneck_forward.4} parent=5 // pred_fallthru
      _
  $region6: #{bottleneck_forward.4} parent=0 // loop_footer
    %s14 = sadd.s32 1, %s10
  $region7: #{bottleneck_forward.4} parent=0 // loop_footer_branch
    %9 = sbr.rel target = $region3
  $region8: #{bottleneck_forward.4} parent=0 // loop_exit
    _

// kernel: bottleneck_forward.5
$region0: #{bottleneck_forward.5}
  #allocation0 [shape = 'u32[]', space=smem, size = 0x4, offset = 0x4, fixed_abs, tag = 'smem constant byte address 0x4 - core index']
  #allocation1 [shape = 'u32[144,128]{1,0:T(1,128)}', space=vmem, size = 0x12000, scoped, tag = 'internal scratch']
  %s0 = inlined_call_operand.vmem [shape: bf16[8,9,9,16], index: 0, kind: input, shape index: {}]
  %s1 = inlined_call_operand.vmem [shape: bf16[144,128], index: 1, kind: input, shape index: {}]
  %s2 = inlined_call_operand.vmem [shape: f32[1,128], index: 2, kind: input, shape index: {}]
  %s3 = inlined_call_operand.vmem [shape: f32[1,128], index: 3, kind: input, shape index: {}]
  %s4 = inlined_call_operand.vmem [shape: bf16[128,128], index: 4, kind: output, shape index: {}]
  %s5 = sld [smem:[#allocation0]]
  $region49: #{bottleneck_forward.5} parent=0
    _
  %s7 = ssub.s32 1, %s5
  %s8 = scalar_select 0, %s7, %s5
  loop: start=0, step=1, limit=4
  $region2: #{bottleneck_forward.5} parent=0 // loop_pre_header
    _
  $region3: #{bottleneck_forward.5} parent=0 // loop_header
    %s10 = sphi 0, %s14
    %p11 = scmp.ge.s32.totalorder %s10, 4
    %s17 = sphi 0, %s29
    %s18 = sphi 0, %s25
    %s19 = sphi 0, %s17
    %s20 = sphi 0, %s18
    %s21 = sphi 0, %s19
    %s22 = sphi 0, %s20
    %s32 = sphi 0, %s34
    %s35 = sphi 0, %s32
    %s36 = sphi 0, %s35
    %s52 = sphi 0, %s36
    %s58 = sphi 0, %s60
    %s61 = sphi 0, %s58
    %s62 = sphi 0, %s61
    %s78 = sphi 0, %s62
    %s84 = sphi 0, %s86
    %s87 = sphi 0, %s84
    %s88 = sphi 0, %s87
    %s104 = sphi 0, %s88
    %s110 = sphi 0, %s112
    %s113 = sphi 0, %s110
    %s114 = sphi 0, %s113
    %s130 = sphi 0, %s114
    %s138 = sphi 0, %s140
    %s141 = sphi 0, %s138
    %s142 = sphi 0, %s141
    %s158 = sphi 0, %s142
  $region4: #{bottleneck_forward.5} parent=0 // loop_header_branch
    %13 = sbr.rel (%p11) target = $region8
  $region5: #{bottleneck_forward.5} parent=0 // loop_body
    %s15 = ssub.s32 %s10, 1
    %s16 = ssub.s32 %s10, 2
    %s23 = sadd.s32 1, %s18
    %p24 = scmp.ge.s32.totalorder %s23, 1
    %s25 = scalar_select %p24, 0, %s23
    %s26 = sadd.s32 1, %s17
    %s27 = scalar_select %p24, %s26, %s17
    %p28 = scmp.ge.s32.totalorder %s27, 2
    %s29 = scalar_select %p28, 0, %s27
    %s30 = ssub.s32 %s17, %s29
    %p31 = scmp.eq.s32.totalorder %s30, 0
    %s33 = sadd.s32 %s32, 1
    %s34 = scalar_select %p31, %s32, %s33
    %p37 = pneg %p31
    %p38 = scmp.eq.s32.totalorder %s10, 1
    %p39 = por %p37, %p38
    %p40 = scmp.ne.s32.totalorder %s32, %s35
    %p41 = scmp.eq.s32.totalorder %s10, 0
    %p42 = por %p40, %p41
    %p43 = scmp.ne.s32.totalorder %s32, %s35
    %p44 = scmp.eq.s32.totalorder %s15, 1
    %p45 = por %p43, %p44
    %p46 = scmp.ne.s32.totalorder %s35, %s36
    %p47 = scmp.eq.s32.totalorder %s15, 0
    %p48 = por %p46, %p47
    %p49 = scmp.ne.s32.totalorder %s35, %s36
    %p50 = scmp.eq.s32.totalorder %s16, 1
    %p51 = por %p49, %p50
    %p53 = scmp.ne.s32.totalorder %s36, %s52
    %p54 = scmp.eq.s32.totalorder %s16, 0
    %p55 = por %p53, %p54
    %s56 = ssub.s32 %s18, %s25
    %p57 = scmp.eq.s32.totalorder %s56, 0
    %s59 = sadd.s32 %s58, 1
    %s60 = scalar_select %p57, %s58, %s59
    %p63 = pneg %p57
    %p64 = scmp.eq.s32.totalorder %s10, 1
    %p65 = por %p63, %p64
    %p66 = scmp.ne.s32.totalorder %s58, %s61
    %p67 = scmp.eq.s32.totalorder %s10, 0
    %p68 = por %p66, %p67
    %p69 = scmp.ne.s32.totalorder %s58, %s61
    %p70 = scmp.eq.s32.totalorder %s15, 1
    %p71 = por %p69, %p70
    %p72 = scmp.ne.s32.totalorder %s61, %s62
    %p73 = scmp.eq.s32.totalorder %s15, 0
    %p74 = por %p72, %p73
    %p75 = scmp.ne.s32.totalorder %s61, %s62
    %p76 = scmp.eq.s32.totalorder %s16, 1
    %p77 = por %p75, %p76
    %p79 = scmp.ne.s32.totalorder %s62, %s78
    %p80 = scmp.eq.s32.totalorder %s16, 0
    %p81 = por %p79, %p80
    %s82 = ssub.s32 %s18, %s25
    %p83 = scmp.eq.s32.totalorder %s82, 0
    %s85 = sadd.s32 %s84, 1
    %s86 = scalar_select %p83, %s84, %s85
    %p89 = pneg %p83
    %p90 = scmp.eq.s32.totalorder %s10, 1
    %p91 = por %p89, %p90
    %p92 = scmp.ne.s32.totalorder %s84, %s87
    %p93 = scmp.eq.s32.totalorder %s10, 0
    %p94 = por %p92, %p93
    %p95 = scmp.ne.s32.totalorder %s84, %s87
    %p96 = scmp.eq.s32.totalorder %s15, 1
    %p97 = por %p95, %p96
    %p98 = scmp.ne.s32.totalorder %s87, %s88
    %p99 = scmp.eq.s32.totalorder %s15, 0
    %p100 = por %p98, %p99
    %p101 = scmp.ne.s32.totalorder %s87, %s88
    %p102 = scmp.eq.s32.totalorder %s16, 1
    %p103 = por %p101, %p102
    %p105 = scmp.ne.s32.totalorder %s88, %s104
    %p106 = scmp.eq.s32.totalorder %s16, 0
    %p107 = por %p105, %p106
    %s108 = ssub.s32 %s18, %s25
    %p109 = scmp.eq.s32.totalorder %s108, 0
    %s111 = sadd.s32 %s110, 1
    %s112 = scalar_select %p109, %s110, %s111
    %p115 = pneg %p109
    %p116 = scmp.eq.s32.totalorder %s10, 1
    %p117 = por %p115, %p116
    %p118 = scmp.ne.s32.totalorder %s110, %s113
    %p119 = scmp.eq.s32.totalorder %s10, 0
    %p120 = por %p118, %p119
    %p121 = scmp.ne.s32.totalorder %s110, %s113
    %p122 = scmp.eq.s32.totalorder %s15, 1
    %p123 = por %p121, %p122
    %p124 = scmp.ne.s32.totalorder %s113, %s114
    %p125 = scmp.eq.s32.totalorder %s15, 0
    %p126 = por %p124, %p125
    %p127 = scmp.ne.s32.totalorder %s113, %s114
    %p128 = scmp.eq.s32.totalorder %s16, 1
    %p129 = por %p127, %p128
    %p131 = scmp.ne.s32.totalorder %s114, %s130
    %p132 = scmp.eq.s32.totalorder %s16, 0
    %p133 = por %p131, %p132
    %s134 = ssub.s32 %s17, %s29
    %s135 = ssub.s32 %s18, %s25
    %s136 = sor.u32 %s134, %s135
    %p137 = scmp.eq.s32.totalorder %s136, 0
    %s139 = sadd.s32 %s138, 1
    %s140 = scalar_select %p137, %s138, %s139
    %p143 = pneg %p137
    %p144 = scmp.eq.s32.totalorder %s10, 1
    %p145 = por %p143, %p144
    %p146 = scmp.ne.s32.totalorder %s138, %s141
    %p147 = scmp.eq.s32.totalorder %s10, 0
    %p148 = por %p146, %p147
    %p149 = scmp.ne.s32.totalorder %s138, %s141
    %p150 = scmp.eq.s32.totalorder %s15, 1
    %p151 = por %p149, %p150
    %p152 = scmp.ne.s32.totalorder %s141, %s142
    %p153 = scmp.eq.s32.totalorder %s15, 0
    %p154 = por %p152, %p153
    %p155 = scmp.ne.s32.totalorder %s141, %s142
    %p156 = scmp.eq.s32.totalorder %s16, 1
    %p157 = por %p155, %p156
    %p159 = scmp.ne.s32.totalorder %s142, %s158
    %p160 = scmp.eq.s32.totalorder %s16, 0
    %p161 = por %p159, %p160
    %p162 = scmp.le.s32.totalorder 1, %s10
    %p163 = scmp.lt.s32.totalorder %s10, 3
    %p164 = pnand %p162, %p163
    %p165 = pneg %p164
    // Predicated region
    $region9: #{bottleneck_forward.5} parent=5 // pred_check
      _
    $region10: #{bottleneck_forward.5} parent=5 // pred_check_branch
      %167 = sbr.rel (%p164) target = $region12
    $region11: #{bottleneck_forward.5} parent=5 // pred_region
      %s168 = ssub.s32 %s10, 1
      // Predicated region
      $region13: #{bottleneck_forward.5} parent=11 // pred_check
        %p169 = pneg %p74
      $region14: #{bottleneck_forward.5} parent=11 // pred_check_branch
        %171 = sbr.rel (%p169) target = $region16
      $region15: #{bottleneck_forward.5} parent=11 // pred_region
        %p172 = scmp.lt.s32.totalorder %s20, 0
        %s173 = scalar_select %p172, %s20, 0
        %s174 = smul.addr %s173, 4
        %s175 = scalar_lea.vmem %s1, %s174
      $region16: #{bottleneck_forward.5} parent=11 // pred_fallthru
        _
      // Predicated region
      $region17: #{bottleneck_forward.5} parent=11 // pred_check
        %p176 = pneg %p100
      $region18: #{bottleneck_forward.5} parent=11 // pred_check_branch
        %178 = sbr.rel (%p176) target = $region20
      $region19: #{bottleneck_forward.5} parent=11 // pred_region
        %p179 = scmp.lt.s32.totalorder %s20, 0
        %s180 = scalar_select %p179, %s20, 0
        %s181 = scalar_lea.vmem %s2, %s180
      $region20: #{bottleneck_forward.5} parent=11 // pred_fallthru
        _
      // Predicated region
      $region21: #{bottleneck_forward.5} parent=11 // pred_check
        %p182 = pneg %p126
      $region22: #{bottleneck_forward.5} parent=11 // pred_check_branch
        %184 = sbr.rel (%p182) target = $region24
      $region23: #{bottleneck_forward.5} parent=11 // pred_region
        %p185 = scmp.lt.s32.totalorder %s20, 0
        %s186 = scalar_select %p185, %s20, 0
        %s187 = scalar_lea.vmem %s3, %s186
      $region24: #{bottleneck_forward.5} parent=11 // pred_fallthru
        _
    $region12: #{bottleneck_forward.5} parent=5 // pred_fallthru
      _
    %p188 = scmp.lt.s32.totalorder %s10, 2
    // Predicated region
    $region25: #{bottleneck_forward.5} parent=5 // pred_check
      %p189 = pneg %p188
    $region26: #{bottleneck_forward.5} parent=5 // pred_check_branch
      %191 = sbr.rel (%p189) target = $region28
    $region27: #{bottleneck_forward.5} parent=5 // pred_region
      // Predicated region
      $region29: #{bottleneck_forward.5} parent=27 // pred_check
        %p192 = pneg %p42
      $region30: #{bottleneck_forward.5} parent=27 // pred_check_branch
        %194 = sbr.rel (%p192) target = $region32
      $region31: #{bottleneck_forward.5} parent=27 // pred_region
        %s195 = smul.u32 4, %s17
        %p196 = scmp.lt.s32.totalorder %s195, 7
        %s197 = scalar_select %p196, %s195, 7
        %s198 = smul.addr %s197, 18
        %s199 = smul.addr %s198, 4
        %s200 = scalar_lea.vmem %s0, %s199
        %s201 = smul.u32 4, %s17
      $region32: #{bottleneck_forward.5} parent=27 // pred_fallthru
        _
    $region28: #{bottleneck_forward.5} parent=5 // pred_fallthru
      _
    %p202 = scmp.le.s32.totalorder 1, %s10
    %p203 = scmp.lt.s32.totalorder %s10, 3
    %p204 = pnand %p202, %p203
    %p205 = pneg %p204
    // Predicated region
    $region33: #{bottleneck_forward.5} parent=5 // pred_check
      _
    $region34: #{bottleneck_forward.5} parent=5 // pred_check_branch
      %207 = sbr.rel (%p204) target = $region36
    $region35: #{bottleneck_forward.5} parent=5 // pred_region
      %s208 = ssub.s32 %s10, 1
      %s209 = smul.u32 4, %s19
      %p210 = scmp.lt.s32.totalorder %s209, 7
      %s211 = scalar_select %p210, %s209, 7
      %s212 = smul.addr %s211, 18
      %s213 = smul.addr %s212, 4
      %s214 = scalar_lea.vmem %s0, %s213
      %p215 = pneg %p48
      %p216 = pneg %p45
      %p217 = scmp.lt.s32.totalorder %s20, 0
      %s218 = scalar_select %p217, %s20, 0
      %s219 = smul.addr %s218, 4
      %s220 = scalar_lea.vmem %s1, %s219
      %p221 = pneg %p74
      %p222 = pneg %p71
      %p223 = scmp.lt.s32.totalorder %s20, 0
      %s224 = scalar_select %p223, %s20, 0
      %s225 = scalar_lea.vmem %s2, %s224
      %p226 = pneg %p100
      %p227 = pneg %p97
      %p228 = scmp.lt.s32.totalorder %s20, 0
      %s229 = scalar_select %p228, %s20, 0
      %s230 = scalar_lea.vmem %s3, %s229
      %p231 = pneg %p126
      %p232 = pneg %p123
      %p233 = pneg %p154
      %p234 = pneg %p151
      %s235 = smul.u32 8, %s19
      %p236 = scmp.lt.s32.totalorder %s235, 15
      %s237 = scalar_select %p236, %s235, 15
      %p238 = scmp.lt.s32.totalorder %s20, 0
      %s239 = scalar_select %p238, %s20, 0
      %s240 = sadd.s32 %s239, %s237
      %s241 = smul.addr %s240, 4
      %s242 = scalar_lea.vmem %s4, %s241
      %s243 = smul.u32 4, %s19
      %p244 = scmp.lt.s32.totalorder %s243, 7
      %s245 = scalar_select %p244, %s243, 7
      %s246 = smul.addr %s245, 18
      %s247 = smul.addr %s246, 4
      %s248 = scalar_lea.vmem %s0, %s247
      %s249 = smul.u32 4, %s19
      %p250 = scmp.lt.s32.totalorder %s20, 0
      %s251 = scalar_select %p250, %s20, 0
      %s252 = smul.addr %s251, 4
      %s253 = scalar_lea.vmem %s1, %s252
      %p254 = scmp.lt.s32.totalorder %s20, 0
      %s255 = scalar_select %p254, %s20, 0
      %s256 = scalar_lea.vmem %s2, %s255
      %p257 = scmp.lt.s32.totalorder %s20, 0
      %s258 = scalar_select %p257, %s20, 0
      %s259 = scalar_lea.vmem %s3, %s258
      %s260 = smul.u32 8, %s19
      %p261 = scmp.lt.s32.totalorder %s260, 15
      %s262 = scalar_select %p261, %s260, 15
      %p263 = scmp.lt.s32.totalorder %s20, 0
      %s264 = scalar_select %p263, %s20, 0
      %s265 = sadd.s32 %s264, %s262
      %s266 = smul.addr %s265, 4
      %s267 = scalar_lea.vmem %s4, %s266
      %s268 = smul.u32 8, %s19
      %v270 = vld [vmem:[%s248] sm:$0xf]
      %v271 = vld [vmem:[%s248 + $0x8] sm:$0xf]
      %v272 = vld [vmem:[%s248 + $0x10] sm:$0xf]
      %v273 = vld [vmem:[%s248 + $0x18] sm:$0xf]
      %v274 = vld [vmem:[%s248 + $0x20] sm:$0xf]
      %v275 = vld [vmem:[%s248 + $0x28] sm:$0xf]
      %v276 = vld [vmem:[%s248 + $0x30] sm:$0xf]
      %v277 = vld [vmem:[%s248 + $0x38] sm:$0xf]
      %v278 = vld [vmem:[%s253] sm:$0xf]
      %v279 = vld [vmem:[%s253 + $0x4] sm:$0xf]
      %s280 = scalar_lea.vmem %s248, 72
      %v281 = vld [vmem:[%s280] sm:$0xf]
      %v282 = vld [vmem:[%s280 + $0x8] sm:$0xf]
      %v283 = vld [vmem:[%s280 + $0x10] sm:$0xf]
      %v284 = vld [vmem:[%s280 + $0x18] sm:$0xf]
      %v285 = vld [vmem:[%s280 + $0x20] sm:$0xf]
      %v286 = vld [vmem:[%s280 + $0x28] sm:$0xf]
      %v287 = vld [vmem:[%s280 + $0x30] sm:$0xf]
      %v288 = vld [vmem:[%s280 + $0x38] sm:$0xf]
      %v289 = vld [vmem:[%s253 + $0x8] sm:$0xf]
      %v290 = vld [vmem:[%s253 + $0xc] sm:$0xf]
      %v299 = vunpack.c.l.b16 %v281
      %v300 = vunpack.c.l.b16 %v282
      %v301 = vunpack.c.l.b16 %v283
      %v302 = vunpack.c.l.b16 %v284
      %v303 = vunpack.c.l.b16 %v285
      %v304 = vunpack.c.l.b16 %v286
      %v305 = vunpack.c.l.b16 %v287
      %v306 = vunpack.c.l.b16 %v288
      %v307 = vpack.c.b16 %v300, %v299
      %v308 = vpack.c.b16 %v302, %v301
      %v309 = vpack.c.b16 %v304, %v303
      %v310 = vpack.c.b16 %v306, %v305
      %v313 = vunpack.c.l.b16 %v289
      %v314 = vunpack.c.l.b16 %v290
      %v315 = vpack.c.b16 %v314, %v313
      %vm317 = vcmask 130048
      %v319 = vsel %vm317, %v307, 0
      %v322 = vsel %vm317, %v308, 0
      %v325 = vsel %vm317, %v309, 0
      %v328 = vsel %vm317, %v310, 0
      %330 = vmatprep.subr.bf16.mxu0 0
      %331 = vmatpush1.bf16.msra.mxu0 0
      %332 = vmatprep.subr.bf16.mxu0 0
      %333 = vmatpush1.bf16.msra.mxu0 0
      %334 = vmatprep.subr.bf16.mxu0 0
      %335 = vmatpush1.bf16.msra.mxu0 0
      %336 = vmatprep.subr.bf16.mxu0 0
      %337 = vmatpush1.bf16.msra.mxu0 0
      %338 = vmatprep.subr.bf16.mxu0 0
      %339 = vmatpush1.bf16.msra.mxu0 0
      %340 = vmatprep.subr.bf16.mxu0 0
      %341 = vmatpush1.bf16.msra.mxu0 0
      %342 = vmatprep.subr.bf16.mxu0 0
      %343 = vmatpush1.bf16.msra.mxu0 0
      %344 = vmatprep.subr.bf16.mxu0 0
      %345 = vmatpush1.bf16.msra.mxu0 %v315
      %346 = vmatprep.subr.bf16.mxu0 0
      %347 = vmatpush2.bf16.msra.mxu0 0
      %348 = vmatprep.subr.bf16.mxu0 0
      %349 = vmatpush2.bf16.msra.mxu0 0
      %350 = vmatprep.subr.bf16.mxu0 0
      %351 = vmatpush2.bf16.msra.mxu0 0
      %352 = vmatprep.subr.bf16.mxu0 0
      %353 = vmatpush2.bf16.msra.mxu0 0
      %354 = vmatprep.subr.bf16.mxu0 0
      %355 = vmatpush2.bf16.msra.mxu0 0
      %356 = vmatprep.subr.bf16.mxu0 0
      %357 = vmatpush2.bf16.msra.mxu0 0
      %358 = vmatprep.subr.bf16.mxu0 0
      %359 = vmatpush2.bf16.msra.mxu0 0
      %360 = vmatprep.subr.bf16.mxu0 0
      %361 = vmatpush2.bf16.msra.mxu0 0
      %362 = vmatprep.mubr.bf16.mxu0 0
      %363 = vmatmul.mubr.bf16.gmra.mxu0 %v319
      %v364 = vpop.f32.mrf.mxu0
      %v365 = vadd.f32 0.0, %v364
      %v366 = vpop.f32.mrf.mxu0
      %v367 = vpop.f32.mrf.mxu0
      %v368 = vadd.f32 0.0, %v367
      %v369 = vpop.f32.mrf.mxu0
      %370 = vmatprep.mubr.bf16.mxu0 0
      %371 = vmatmul.mubr.bf16.gmra.mxu0 %v322
      %v372 = vpop.f32.mrf.mxu0
      %v373 = vadd.f32 0.0, %v372
      %v374 = vpop.f32.mrf.mxu0
      %v375 = vpop.f32.mrf.mxu0
      %v376 = vadd.f32 0.0, %v375
      %v377 = vpop.f32.mrf.mxu0
      %378 = vmatprep.mubr.bf16.mxu0 0
      %379 = vmatmul.mubr.bf16.gmra.mxu0 %v325
      %v380 = vpop.f32.mrf.mxu0
      %v381 = vadd.f32 0.0, %v380
      %v382 = vpop.f32.mrf.mxu0
      %v383 = vpop.f32.mrf.mxu0
      %v384 = vadd.f32 0.0, %v383
      %v385 = vpop.f32.mrf.mxu0
      %386 = vmatprep.mubr.bf16.mxu0 0
      %387 = vmatmul.mubr.bf16.gmra.mxu0 %v328
      %v388 = vpop.f32.mrf.mxu0
      %v389 = vadd.f32 0.0, %v388
      %v390 = vpop.f32.mrf.mxu0
      %v391 = vpop.f32.mrf.mxu0
      %v392 = vadd.f32 0.0, %v391
      %v393 = vpop.f32.mrf.mxu0
      %394 = vdwg.mxu0
      %v403 = vunpack.c.l.b16 %v270
      %v404 = vunpack.c.l.b16 %v271
      %v405 = vunpack.c.l.b16 %v272
      %v406 = vunpack.c.l.b16 %v273
      %v407 = vunpack.c.l.b16 %v274
      %v408 = vunpack.c.l.b16 %v275
      %v409 = vunpack.c.l.b16 %v276
      %v410 = vunpack.c.l.b16 %v277
      %v411 = vpack.c.b16 %v404, %v403
      %v412 = vpack.c.b16 %v406, %v405
      %v413 = vpack.c.b16 %v408, %v407
      %v414 = vpack.c.b16 %v410, %v409
      %v417 = vunpack.c.l.b16 %v278
      %v418 = vunpack.c.l.b16 %v279
      %v419 = vpack.c.b16 %v418, %v417
      %v422 = vsel %vm317, %v411, 0
      %v425 = vsel %vm317, %v412, 0
      %v428 = vsel %vm317, %v413, 0
      %v431 = vsel %vm317, %v414, 0
      %433 = vmatprep.subr.bf16.mxu0 0
      %434 = vmatpush1.bf16.msra.mxu0 0
      %435 = vmatprep.subr.bf16.mxu0 0
      %436 = vmatpush1.bf16.msra.mxu0 0
      %437 = vmatprep.subr.bf16.mxu0 0
      %438 = vmatpush1.bf16.msra.mxu0 0
      %439 = vmatprep.subr.bf16.mxu0 0
      %440 = vmatpush1.bf16.msra.mxu0 0
      %441 = vmatprep.subr.bf16.mxu0 0
      %442 = vmatpush1.bf16.msra.mxu0 0
      %443 = vmatprep.subr.bf16.mxu0 0
      %444 = vmatpush1.bf16.msra.mxu0 0
      %445 = vmatprep.subr.bf16.mxu0 0
      %446 = vmatpush1.bf16.msra.mxu0 0
      %447 = vmatprep.subr.bf16.mxu0 0
      %448 = vmatpush1.bf16.msra.mxu0 %v419
      %449 = vmatprep.subr.bf16.mxu0 0
      %450 = vmatpush2.bf16.msra.mxu0 0
      %451 = vmatprep.subr.bf16.mxu0 0
      %452 = vmatpush2.bf16.msra.mxu0 0
      %453 = vmatprep.subr.bf16.mxu0 0
      %454 = vmatpush2.bf16.msra.mxu0 0
      %455 = vmatprep.subr.bf16.mxu0 0
      %456 = vmatpush2.bf16.msra.mxu0 0
      %457 = vmatprep.subr.bf16.mxu0 0
      %458 = vmatpush2.bf16.msra.mxu0 0
      %459 = vmatprep.subr.bf16.mxu0 0
      %460 = vmatpush2.bf16.msra.mxu0 0
      %461 = vmatprep.subr.bf16.mxu0 0
      %462 = vmatpush2.bf16.msra.mxu0 0
      %463 = vmatprep.subr.bf16.mxu0 0
      %464 = vmatpush2.bf16.msra.mxu0 0
      %465 = vmatprep.mubr.bf16.mxu0 0
      %466 = vmatmul.mubr.bf16.gmra.mxu0 %v422
      %v467 = vpop.f32.mrf.mxu0
      %v468 = vadd.f32 %v365, %v467
      %v469 = vpop.f32.mrf.mxu0
      %v470 = vpop.f32.mrf.mxu0
      %v471 = vadd.f32 %v368, %v470
      %v472 = vpop.f32.mrf.mxu0
      %473 = vmatprep.mubr.bf16.mxu0 0
      %474 = vmatmul.mubr.bf16.gmra.mxu0 %v425
      %v475 = vpop.f32.mrf.mxu0
      %v476 = vadd.f32 %v373, %v475
      %v477 = vpop.f32.mrf.mxu0
      %v478 = vpop.f32.mrf.mxu0
      %v479 = vadd.f32 %v376, %v478
      %v480 = vpop.f32.mrf.mxu0
      %481 = vmatprep.mubr.bf16.mxu0 0
      %482 = vmatmul.mubr.bf16.gmra.mxu0 %v428
      %v483 = vpop.f32.mrf.mxu0
      %v484 = vadd.f32 %v381, %v483
      %v485 = vpop.f32.mrf.mxu0
      %v486 = vpop.f32.mrf.mxu0
      %v487 = vadd.f32 %v384, %v486
      %v488 = vpop.f32.mrf.mxu0
      %489 = vmatprep.mubr.bf16.mxu0 0
      %490 = vmatmul.mubr.bf16.gmra.mxu0 %v431
      %v491 = vpop.f32.mrf.mxu0
      %v492 = vadd.f32 %v389, %v491
      %v493 = vpop.f32.mrf.mxu0
      %v494 = vpop.f32.mrf.mxu0
      %v495 = vadd.f32 %v392, %v494
      %v496 = vpop.f32.mrf.mxu0
      %497 = vdwg.mxu0
      %v498 = vld [vmem:[%s248] sm:$0xf]
      %v499 = vld [vmem:[%s248 + $0x4] sm:$0x1]
      %v500 = vld [vmem:[%s248 + $0x8] sm:$0xf]
      %v501 = vld [vmem:[%s248 + $0xc] sm:$0x1]
      %v502 = vld [vmem:[%s248 + $0x10] sm:$0xf]
      %v503 = vld [vmem:[%s248 + $0x14] sm:$0x1]
      %v504 = vld [vmem:[%s248 + $0x18] sm:$0xf]
      %v505 = vld [vmem:[%s248 + $0x1c] sm:$0x1]
      %v506 = vld [vmem:[%s248 + $0x20] sm:$0xf]
      %v507 = vld [vmem:[%s248 + $0x24] sm:$0x1]
      %v508 = vld [vmem:[%s248 + $0x28] sm:$0xf]
      %v509 = vld [vmem:[%s248 + $0x2c] sm:$0x1]
      %v510 = vld [vmem:[%s248 + $0x30] sm:$0xf]
      %v511 = vld [vmem:[%s248 + $0x34] sm:$0x1]
      %v512 = vld [vmem:[%s248 + $0x38] sm:$0xf]
      %v513 = vld [vmem:[%s248 + $0x3c] sm:$0x1]
      %vm514 = vsmask.f32 3328
      %vm515 = vsmask.f32 7440
      %vm516 = vmor %vm514, %vm515
      %v518 = vshrl.u32 %v498, 16
      %v520 = vrot.slane %v518, 4
      %v521 = vshll.u32 %v498, 16
      %v523 = vrot.slane %v521, 5
      %v524 = vor.u32 %v520, %v523
      %v525 = vrot.slane %v524, 4
      %v527 = vshll.u32 %v499, 16
      %v529 = vrot.slane %v527, 5
      %v530 = vsel %vm516, %v525, %v529
      %v532 = vshrl.u32 %v500, 16
      %v534 = vrot.slane %v532, 4
      %v535 = vshll.u32 %v500, 16
      %v537 = vrot.slane %v535, 5
      %v538 = vor.u32 %v534, %v537
      %v539 = vrot.slane %v538, 4
      %v541 = vshll.u32 %v501, 16
      %v543 = vrot.slane %v541, 5
      %v544 = vsel %vm516, %v539, %v543
      %v546 = vshrl.u32 %v502, 16
      %v548 = vrot.slane %v546, 4
      %v549 = vshll.u32 %v502, 16
      %v551 = vrot.slane %v549, 5
      %v552 = vor.u32 %v548, %v551
      %v553 = vrot.slane %v552, 4
      %v555 = vshll.u32 %v503, 16
      %v557 = vrot.slane %v555, 5
      %v558 = vsel %vm516, %v553, %v557
      %v560 = vshrl.u32 %v504, 16
      %v562 = vrot.slane %v560, 4
      %v563 = vshll.u32 %v504, 16
      %v565 = vrot.slane %v563, 5
      %v566 = vor.u32 %v562, %v565
      %v567 = vrot.slane %v566, 4
      %v569 = vshll.u32 %v505, 16
      %v571 = vrot.slane %v569, 5
      %v572 = vsel %vm516, %v567, %v571
      %v574 = vshrl.u32 %v506, 16
      %v576 = vrot.slane %v574, 4
      %v577 = vshll.u32 %v506, 16
      %v579 = vrot.slane %v577, 5
      %v580 = vor.u32 %v576, %v579
      %v581 = vrot.slane %v580, 4
      %v583 = vshll.u32 %v507, 16
      %v585 = vrot.slane %v583, 5
      %v586 = vsel %vm516, %v581, %v585
      %v588 = vshrl.u32 %v508, 16
      %v590 = vrot.slane %v588, 4
      %v591 = vshll.u32 %v508, 16
      %v593 = vrot.slane %v591, 5
      %v594 = vor.u32 %v590, %v593
      %v595 = vrot.slane %v594, 4
      %v597 = vshll.u32 %v509, 16
      %v599 = vrot.slane %v597, 5
      %v600 = vsel %vm516, %v595, %v599
      %v602 = vshrl.u32 %v510, 16
      %v604 = vrot.slane %v602, 4
      %v605 = vshll.u32 %v510, 16
      %v607 = vrot.slane %v605, 5
      %v608 = vor.u32 %v604, %v607
      %v609 = vrot.slane %v608, 4
      %v611 = vshll.u32 %v511, 16
      %v613 = vrot.slane %v611, 5
      %v614 = vsel %vm516, %v609, %v613
      %v616 = vshrl.u32 %v512, 16
      %v618 = vrot.slane %v616, 4
      %v619 = vshll.u32 %v512, 16
      %v621 = vrot.slane %v619, 5
      %v622 = vor.u32 %v618, %v621
      %v623 = vrot.slane %v622, 4
      %v625 = vshll.u32 %v513, 16
      %v627 = vrot.slane %v625, 5
      %v628 = vsel %vm516, %v623, %v627
      %v629 = vld [vmem:[%s253 + $0x10] sm:$0xf]
      %v630 = vld [vmem:[%s253 + $0x14] sm:$0xf]
      %v631 = vunpack.c.l.b16 %v530
      %v632 = vunpack.c.l.b16 %v544
      %v633 = vunpack.c.l.b16 %v558
      %v634 = vunpack.c.l.b16 %v572
      %v635 = vunpack.c.l.b16 %v586
      %v636 = vunpack.c.l.b16 %v600
      %v637 = vunpack.c.l.b16 %v614
      %v638 = vunpack.c.l.b16 %v628
      %v639 = vpack.c.b16 %v632, %v631
      %v640 = vpack.c.b16 %v634, %v633
      %v641 = vpack.c.b16 %v636, %v635
      %v642 = vpack.c.b16 %v638, %v637
      %v645 = vunpack.c.l.b16 %v629
      %v646 = vunpack.c.l.b16 %v630
      %v647 = vpack.c.b16 %v646, %v645
      %v650 = vsel %vm317, %v639, 0
      %v653 = vsel %vm317, %v640, 0
      %v656 = vsel %vm317, %v641, 0
      %v659 = vsel %vm317, %v642, 0
      %661 = vmatprep.subr.bf16.mxu0 0
      %662 = vmatpush1.bf16.msra.mxu0 0
      %663 = vmatprep.subr.bf16.mxu0 0
      %664 = vmatpush1.bf16.msra.mxu0 0
      %665 = vmatprep.subr.bf16.mxu0 0
      %666 = vmatpush1.bf16.msra.mxu0 0
      %667 = vmatprep.subr.bf16.mxu0 0
      %668 = vmatpush1.bf16.msra.mxu0 0
      %669 = vmatprep.subr.bf16.mxu0 0
      %670 = vmatpush1.bf16.msra.mxu0 0
      %671 = vmatprep.subr.bf16.mxu0 0
      %672 = vmatpush1.bf16.msra.mxu0 0
      %673 = vmatprep.subr.bf16.mxu0 0
      %674 = vmatpush1.bf16.msra.mxu0 0
      %675 = vmatprep.subr.bf16.mxu0 0
      %676 = vmatpush1.bf16.msra.mxu0 %v647
      %677 = vmatprep.subr.bf16.mxu0 0
      %678 = vmatpush2.bf16.msra.mxu0 0
      %679 = vmatprep.subr.bf16.mxu0 0
      %680 = vmatpush2.bf16.msra.mxu0 0
      %681 = vmatprep.subr.bf16.mxu0 0
      %682 = vmatpush2.bf16.msra.mxu0 0
      %683 = vmatprep.subr.bf16.mxu0 0
      %684 = vmatpush2.bf16.msra.mxu0 0
      %685 = vmatprep.subr.bf16.mxu0 0
      %686 = vmatpush2.bf16.msra.mxu0 0
      %687 = vmatprep.subr.bf16.mxu0 0
      %688 = vmatpush2.bf16.msra.mxu0 0
      %689 = vmatprep.subr.bf16.mxu0 0
      %690 = vmatpush2.bf16.msra.mxu0 0
      %691 = vmatprep.subr.bf16.mxu0 0
      %692 = vmatpush2.bf16.msra.mxu0 0
      %693 = vmatprep.mubr.bf16.mxu0 0
      %694 = vmatmul.mubr.bf16.gmra.mxu0 %v650
      %v695 = vpop.f32.mrf.mxu0
      %v696 = vadd.f32 0.0, %v695
      %v697 = vpop.f32.mrf.mxu0
      %v698 = vpop.f32.mrf.mxu0
      %v699 = vadd.f32 0.0, %v698
      %v700 = vpop.f32.mrf.mxu0
      %701 = vmatprep.mubr.bf16.mxu0 0
      %702 = vmatmul.mubr.bf16.gmra.mxu0 %v653
      %v703 = vpop.f32.mrf.mxu0
      %v704 = vadd.f32 0.0, %v703
      %v705 = vpop.f32.mrf.mxu0
      %v706 = vpop.f32.mrf.mxu0
      %v707 = vadd.f32 0.0, %v706
      %v708 = vpop.f32.mrf.mxu0
      %709 = vmatprep.mubr.bf16.mxu0 0
      %710 = vmatmul.mubr.bf16.gmra.mxu0 %v656
      %v711 = vpop.f32.mrf.mxu0
      %v712 = vadd.f32 0.0, %v711
      %v713 = vpop.f32.mrf.mxu0
      %v714 = vpop.f32.mrf.mxu0
      %v715 = vadd.f32 0.0, %v714
      %v716 = vpop.f32.mrf.mxu0
      %717 = vmatprep.mubr.bf16.mxu0 0
      %718 = vmatmul.mubr.bf16.gmra.mxu0 %v659
      %v719 = vpop.f32.mrf.mxu0
      %v720 = vadd.f32 0.0, %v719
      %v721 = vpop.f32.mrf.mxu0
      %v722 = vpop.f32.mrf.mxu0
      %v723 = vadd.f32 0.0, %v722
      %v724 = vpop.f32.mrf.mxu0
      %725 = vdwg.mxu0
      %v726 = vadd.f32 %v468, %v696
      %v727 = vadd.f32 %v471, %v699
      %v728 = vadd.f32 %v476, %v704
      %v729 = vadd.f32 %v479, %v707
      %v730 = vadd.f32 %v484, %v712
      %v731 = vadd.f32 %v487, %v715
      %v732 = vadd.f32 %v492, %v720
      %v733 = vadd.f32 %v495, %v723
      %s734 = scalar_lea.vmem %s248, 144
      %v735 = vld [vmem:[%s734] sm:$0xf]
      %v736 = vld [vmem:[%s734 + $0x8] sm:$0xf]
      %v737 = vld [vmem:[%s734 + $0x10] sm:$0xf]
      %v738 = vld [vmem:[%s734 + $0x18] sm:$0xf]
      %v739 = vld [vmem:[%s734 + $0x20] sm:$0xf]
      %v740 = vld [vmem:[%s734 + $0x28] sm:$0xf]
      %v741 = vld [vmem:[%s734 + $0x30] sm:$0xf]
      %v742 = vld [vmem:[%s734 + $0x38] sm:$0xf]
      %v743 = vld [vmem:[%s253 + $0x18] sm:$0xf]
      %v744 = vld [vmem:[%s253 + $0x1c] sm:$0xf]
      %v753 = vunpack.c.l.b16 %v735
      %v754 = vunpack.c.l.b16 %v736
      %v755 = vunpack.c.l.b16 %v737
      %v756 = vunpack.c.l.b16 %v738
      %v757 = vunpack.c.l.b16 %v739
      %v758 = vunpack.c.l.b16 %v740
      %v759 = vunpack.c.l.b16 %v741
      %v760 = vunpack.c.l.b16 %v742
      %v761 = vpack.c.b16 %v754, %v753
      %v762 = vpack.c.b16 %v756, %v755
      %v763 = vpack.c.b16 %v758, %v757
      %v764 = vpack.c.b16 %v760, %v759
      %v767 = vunpack.c.l.b16 %v743
      %v768 = vunpack.c.l.b16 %v744
      %v769 = vpack.c.b16 %v768, %v767
      %v772 = vsel %vm317, %v761, 0
      %v775 = vsel %vm317, %v762, 0
      %v778 = vsel %vm317, %v763, 0
      %v781 = vsel %vm317, %v764, 0
      %783 = vmatprep.subr.bf16.mxu0 0
      %784 = vmatpush1.bf16.msra.mxu0 0
      %785 = vmatprep.subr.bf16.mxu0 0
      %786 = vmatpush1.bf16.msra.mxu0 0
      %787 = vmatprep.subr.bf16.mxu0 0
      %788 = vmatpush1.bf16.msra.mxu0 0
      %789 = vmatprep.subr.bf16.mxu0 0
      %790 = vmatpush1.bf16.msra.mxu0 0
      %791 = vmatprep.subr.bf16.mxu0 0
      %792 = vmatpush1.bf16.msra.mxu0 0
      %793 = vmatprep.subr.bf16.mxu0 0
      %794 = vmatpush1.bf16.msra.mxu0 0
      %795 = vmatprep.subr.bf16.mxu0 0
      %796 = vmatpush1.bf16.msra.mxu0 0
      %797 = vmatprep.subr.bf16.mxu0 0
      %798 = vmatpush1.bf16.msra.mxu0 %v769
      %799 = vmatprep.subr.bf16.mxu0 0
      %800 = vmatpush2.bf16.msra.mxu0 0
      %801 = vmatprep.subr.bf16.mxu0 0
      %802 = vmatpush2.bf16.msra.mxu0 0
      %803 = vmatprep.subr.bf16.mxu0 0
      %804 = vmatpush2.bf16.msra.mxu0 0
      %805 = vmatprep.subr.bf16.mxu0 0
      %806 = vmatpush2.bf16.msra.mxu0 0
      %807 = vmatprep.subr.bf16.mxu0 0
      %808 = vmatpush2.bf16.msra.mxu0 0
      %809 = vmatprep.subr.bf16.mxu0 0
      %810 = vmatpush2.bf16.msra.mxu0 0
      %811 = vmatprep.subr.bf16.mxu0 0
      %812 = vmatpush2.bf16.msra.mxu0 0
      %813 = vmatprep.subr.bf16.mxu0 0
      %814 = vmatpush2.bf16.msra.mxu0 0
      %815 = vmatprep.mubr.bf16.mxu0 0
      %816 = vmatmul.mubr.bf16.gmra.mxu0 %v772
      %v817 = vpop.f32.mrf.mxu0
      %v818 = vadd.f32 0.0, %v817
      %v819 = vpop.f32.mrf.mxu0
      %v820 = vpop.f32.mrf.mxu0
      %v821 = vadd.f32 0.0, %v820
      %v822 = vpop.f32.mrf.mxu0
      %823 = vmatprep.mubr.bf16.mxu0 0
      %824 = vmatmul.mubr.bf16.gmra.mxu0 %v775
      %v825 = vpop.f32.mrf.mxu0
      %v826 = vadd.f32 0.0, %v825
      %v827 = vpop.f32.mrf.mxu0
      %v828 = vpop.f32.mrf.mxu0
      %v829 = vadd.f32 0.0, %v828
      %v830 = vpop.f32.mrf.mxu0
      %831 = vmatprep.mubr.bf16.mxu0 0
      %832 = vmatmul.mubr.bf16.gmra.mxu0 %v778
      %v833 = vpop.f32.mrf.mxu0
      %v834 = vadd.f32 0.0, %v833
      %v835 = vpop.f32.mrf.mxu0
      %v836 = vpop.f32.mrf.mxu0
      %v837 = vadd.f32 0.0, %v836
      %v838 = vpop.f32.mrf.mxu0
      %839 = vmatprep.mubr.bf16.mxu0 0
      %840 = vmatmul.mubr.bf16.gmra.mxu0 %v781
      %v841 = vpop.f32.mrf.mxu0
      %v842 = vadd.f32 0.0, %v841
      %v843 = vpop.f32.mrf.mxu0
      %v844 = vpop.f32.mrf.mxu0
      %v845 = vadd.f32 0.0, %v844
      %v846 = vpop.f32.mrf.mxu0
      %847 = vdwg.mxu0
      %v848 = vadd.f32 %v726, %v818
      %v849 = vadd.f32 %v727, %v821
      %v850 = vadd.f32 %v728, %v826
      %v851 = vadd.f32 %v729, %v829
      %v852 = vadd.f32 %v730, %v834
      %v853 = vadd.f32 %v731, %v837
      %v854 = vadd.f32 %v732, %v842
      %v855 = vadd.f32 %v733, %v845
      %s856 = scalar_lea.vmem %s248, 216
      %v857 = vld [vmem:[%s856] sm:$0xf]
      %v858 = vld [vmem:[%s856 + $0x8] sm:$0xf]
      %v859 = vld [vmem:[%s856 + $0x10] sm:$0xf]
      %v860 = vld [vmem:[%s856 + $0x18] sm:$0xf]
      %v861 = vld [vmem:[%s856 + $0x20] sm:$0xf]
      %v862 = vld [vmem:[%s856 + $0x28] sm:$0xf]
      %v863 = vld [vmem:[%s856 + $0x30] sm:$0xf]
      %v864 = vld [vmem:[%s856 + $0x38] sm:$0xf]
      %v865 = vld [vmem:[%s253 + $0x20] sm:$0xf]
      %v866 = vld [vmem:[%s253 + $0x24] sm:$0xf]
      %v875 = vunpack.c.l.b16 %v857
      %v876 = vunpack.c.l.b16 %v858
      %v877 = vunpack.c.l.b16 %v859
      %v878 = vunpack.c.l.b16 %v860
      %v879 = vunpack.c.l.b16 %v861
      %v880 = vunpack.c.l.b16 %v862
      %v881 = vunpack.c.l.b16 %v863
      %v882 = vunpack.c.l.b16 %v864
      %v883 = vpack.c.b16 %v876, %v875
      %v884 = vpack.c.b16 %v878, %v877
      %v885 = vpack.c.b16 %v880, %v879
      %v886 = vpack.c.b16 %v882, %v881
      %v889 = vunpack.c.l.b16 %v865
      %v890 = vunpack.c.l.b16 %v866
      %v891 = vpack.c.b16 %v890, %v889
      %v894 = vsel %vm317, %v883, 0
      %v897 = vsel %vm317, %v884, 0
      %v900 = vsel %vm317, %v885, 0
      %v903 = vsel %vm317, %v886, 0
      %905 = vmatprep.subr.bf16.mxu0 0
      %906 = vmatpush1.bf16.msra.mxu0 0
      %907 = vmatprep.subr.bf16.mxu0 0
      %908 = vmatpush1.bf16.msra.mxu0 0
      %909 = vmatprep.subr.bf16.mxu0 0
      %910 = vmatpush1.bf16.msra.mxu0 0
      %911 = vmatprep.subr.bf16.mxu0 0
      %912 = vmatpush1.bf16.msra.mxu0 0
      %913 = vmatprep.subr.bf16.mxu0 0
      %914 = vmatpush1.bf16.msra.mxu0 0
      %915 = vmatprep.subr.bf16.mxu0 0
      %916 = vmatpush1.bf16.msra.mxu0 0
      %917 = vmatprep.subr.bf16.mxu0 0
      %918 = vmatpush1.bf16.msra.mxu0 0
      %919 = vmatprep.subr.bf16.mxu0 0
      %920 = vmatpush1.bf16.msra.mxu0 %v891
      %921 = vmatprep.subr.bf16.mxu0 0
      %922 = vmatpush2.bf16.msra.mxu0 0
      %923 = vmatprep.subr.bf16.mxu0 0
      %924 = vmatpush2.bf16.msra.mxu0 0
      %925 = vmatprep.subr.bf16.mxu0 0
      %926 = vmatpush2.bf16.msra.mxu0 0
      %927 = vmatprep.subr.bf16.mxu0 0
      %928 = vmatpush2.bf16.msra.mxu0 0
      %929 = vmatprep.subr.bf16.mxu0 0
      %930 = vmatpush2.bf16.msra.mxu0 0
      %931 = vmatprep.subr.bf16.mxu0 0
      %932 = vmatpush2.bf16.msra.mxu0 0
      %933 = vmatprep.subr.bf16.mxu0 0
      %934 = vmatpush2.bf16.msra.mxu0 0
      %935 = vmatprep.subr.bf16.mxu0 0
      %936 = vmatpush2.bf16.msra.mxu0 0
      %937 = vmatprep.mubr.bf16.mxu0 0
      %938 = vmatmul.mubr.bf16.gmra.mxu0 %v894
      %v939 = vpop.f32.mrf.mxu0
      %v940 = vadd.f32 0.0, %v939
      %v941 = vpop.f32.mrf.mxu0
      %v942 = vpop.f32.mrf.mxu0
      %v943 = vadd.f32 0.0, %v942
      %v944 = vpop.f32.mrf.mxu0
      %945 = vmatprep.mubr.bf16.mxu0 0
      %946 = vmatmul.mubr.bf16.gmra.mxu0 %v897
      %v947 = vpop.f32.mrf.mxu0
      %v948 = vadd.f32 0.0, %v947
      %v949 = vpop.f32.mrf.mxu0
      %v950 = vpop.f32.mrf.mxu0
      %v951 = vadd.f32 0.0, %v950
      %v952 = vpop.f32.mrf.mxu0
      %953 = vmatprep.mubr.bf16.mxu0 0
      %954 = vmatmul.mubr.bf16.gmra.mxu0 %v900
      %v955 = vpop.f32.mrf.mxu0
      %v956 = vadd.f32 0.0, %v955
      %v957 = vpop.f32.mrf.mxu0
      %v958 = vpop.f32.mrf.mxu0
      %v959 = vadd.f32 0.0, %v958
      %v960 = vpop.f32.mrf.mxu0
      %961 = vmatprep.mubr.bf16.mxu0 0
      %962 = vmatmul.mubr.bf16.gmra.mxu0 %v903
      %v963 = vpop.f32.mrf.mxu0
      %v964 = vadd.f32 0.0, %v963
      %v965 = vpop.f32.mrf.mxu0
      %v966 = vpop.f32.mrf.mxu0
      %v967 = vadd.f32 0.0, %v966
      %v968 = vpop.f32.mrf.mxu0
      %969 = vdwg.mxu0
      %v970 = vadd.f32 %v848, %v940
      %v971 = vadd.f32 %v849, %v943
      %v972 = vadd.f32 %v850, %v948
      %v973 = vadd.f32 %v851, %v951
      %v974 = vadd.f32 %v852, %v956
      %v975 = vadd.f32 %v853, %v959
      %v976 = vadd.f32 %v854, %v964
      %v977 = vadd.f32 %v855, %v967
      %v978 = vld [vmem:[%s734] sm:$0xf]
      %v979 = vld [vmem:[%s734 + $0x4] sm:$0x1]
      %v980 = vld [vmem:[%s734 + $0x8] sm:$0xf]
      %v981 = vld [vmem:[%s734 + $0xc] sm:$0x1]
      %v982 = vld [vmem:[%s734 + $0x10] sm:$0xf]
      %v983 = vld [vmem:[%s734 + $0x14] sm:$0x1]
      %v984 = vld [vmem:[%s734 + $0x18] sm:$0xf]
      %v985 = vld [vmem:[%s734 + $0x1c] sm:$0x1]
      %v986 = vld [vmem:[%s734 + $0x20] sm:$0xf]
      %v987 = vld [vmem:[%s734 + $0x24] sm:$0x1]
      %v988 = vld [vmem:[%s734 + $0x28] sm:$0xf]
      %v989 = vld [vmem:[%s734 + $0x2c] sm:$0x1]
      %v990 = vld [vmem:[%s734 + $0x30] sm:$0xf]
      %v991 = vld [vmem:[%s734 + $0x34] sm:$0x1]
      %v992 = vld [vmem:[%s734 + $0x38] sm:$0xf]
      %v993 = vld [vmem:[%s734 + $0x3c] sm:$0x1]
      %v995 = vshrl.u32 %v978, 16
      %v997 = vrot.slane %v995, 4
      %v998 = vshll.u32 %v978, 16
      %v1000 = vrot.slane %v998, 5
      %v1001 = vor.u32 %v997, %v1000
      %v1002 = vrot.slane %v1001, 4
      %v1004 = vshll.u32 %v979, 16
      %v1006 = vrot.slane %v1004, 5
      %v1007 = vsel %vm516, %v1002, %v1006
      %v1009 = vshrl.u32 %v980, 16
      %v1011 = vrot.slane %v1009, 4
      %v1012 = vshll.u32 %v980, 16
      %v1014 = vrot.slane %v1012, 5
      %v1015 = vor.u32 %v1011, %v1014
      %v1016 = vrot.slane %v1015, 4
      %v1018 = vshll.u32 %v981, 16
      %v1020 = vrot.slane %v1018, 5
      %v1021 = vsel %vm516, %v1016, %v1020
      %v1023 = vshrl.u32 %v982, 16
      %v1025 = vrot.slane %v1023, 4
      %v1026 = vshll.u32 %v982, 16
      %v1028 = vrot.slane %v1026, 5
      %v1029 = vor.u32 %v1025, %v1028
      %v1030 = vrot.slane %v1029, 4
      %v1032 = vshll.u32 %v983, 16
      %v1034 = vrot.slane %v1032, 5
      %v1035 = vsel %vm516, %v1030, %v1034
      %v1037 = vshrl.u32 %v984, 16
      %v1039 = vrot.slane %v1037, 4
      %v1040 = vshll.u32 %v984, 16
      %v1042 = vrot.slane %v1040, 5
      %v1043 = vor.u32 %v1039, %v1042
      %v1044 = vrot.slane %v1043, 4
      %v1046 = vshll.u32 %v985, 16
      %v1048 = vrot.slane %v1046, 5
      %v1049 = vsel %vm516, %v1044, %v1048
      %v1051 = vshrl.u32 %v986, 16
      %v1053 = vrot.slane %v1051, 4
      %v1054 = vshll.u32 %v986, 16
      %v1056 = vrot.slane %v1054, 5
      %v1057 = vor.u32 %v1053, %v1056
      %v1058 = vrot.slane %v1057, 4
      %v1060 = vshll.u32 %v987, 16
      %v1062 = vrot.slane %v1060, 5
      %v1063 = vsel %vm516, %v1058, %v1062
      %v1065 = vshrl.u32 %v988, 16
      %v1067 = vrot.slane %v1065, 4
      %v1068 = vshll.u32 %v988, 16
      %v1070 = vrot.slane %v1068, 5
      %v1071 = vor.u32 %v1067, %v1070
      %v1072 = vrot.slane %v1071, 4
      %v1074 = vshll.u32 %v989, 16
      %v1076 = vrot.slane %v1074, 5
      %v1077 = vsel %vm516, %v1072, %v1076
      %v1079 = vshrl.u32 %v990, 16
      %v1081 = vrot.slane %v1079, 4
      %v1082 = vshll.u32 %v990, 16
      %v1084 = vrot.slane %v1082, 5
      %v1085 = vor.u32 %v1081, %v1084
      %v1086 = vrot.slane %v1085, 4
      %v1088 = vshll.u32 %v991, 16
      %v1090 = vrot.slane %v1088, 5
      %v1091 = vsel %vm516, %v1086, %v1090
      %v1093 = vshrl.u32 %v992, 16
      %v1095 = vrot.slane %v1093, 4
      %v1096 = vshll.u32 %v992, 16
      %v1098 = vrot.slane %v1096, 5
      %v1099 = vor.u32 %v1095, %v1098
      %v1100 = vrot.slane %v1099, 4
      %v1102 = vshll.u32 %v993, 16
      %v1104 = vrot.slane %v1102, 5
      %v1105 = vsel %vm516, %v1100, %v1104
      %v1106 = vld [vmem:[%s253 + $0x28] sm:$0xf]
      %v1107 = vld [vmem:[%s253 + $0x2c] sm:$0xf]
      %v1108 = vunpack.c.l.b16 %v1007
      %v1109 = vunpack.c.l.b16 %v1021
      %v1110 = vunpack.c.l.b16 %v1035
      %v1111 = vunpack.c.l.b16 %v1049
      %v1112 = vunpack.c.l.b16 %v1063
      %v1113 = vunpack.c.l.b16 %v1077
      %v1114 = vunpack.c.l.b16 %v1091
      %v1115 = vunpack.c.l.b16 %v1105
      %v1116 = vpack.c.b16 %v1109, %v1108
      %v1117 = vpack.c.b16 %v1111, %v1110
      %v1118 = vpack.c.b16 %v1113, %v1112
      %v1119 = vpack.c.b16 %v1115, %v1114
      %v1122 = vunpack.c.l.b16 %v1106
      %v1123 = vunpack.c.l.b16 %v1107
      %v1124 = vpack.c.b16 %v1123, %v1122
      %v1127 = vsel %vm317, %v1116, 0
      %v1130 = vsel %vm317, %v1117, 0
      %v1133 = vsel %vm317, %v1118, 0
      %v1136 = vsel %vm317, %v1119, 0
      %1138 = vmatprep.subr.bf16.mxu0 0
      %1139 = vmatpush1.bf16.msra.mxu0 0
      %1140 = vmatprep.subr.bf16.mxu0 0
      %1141 = vmatpush1.bf16.msra.mxu0 0
      %1142 = vmatprep.subr.bf16.mxu0 0
      %1143 = vmatpush1.bf16.msra.mxu0 0
      %1144 = vmatprep.subr.bf16.mxu0 0
      %1145 = vmatpush1.bf16.msra.mxu0 0
      %1146 = vmatprep.subr.bf16.mxu0 0
      %1147 = vmatpush1.bf16.msra.mxu0 0
      %1148 = vmatprep.subr.bf16.mxu0 0
      %1149 = vmatpush1.bf16.msra.mxu0 0
      %1150 = vmatprep.subr.bf16.mxu0 0
      %1151 = vmatpush1.bf16.msra.mxu0 0
      %1152 = vmatprep.subr.bf16.mxu0 0
      %1153 = vmatpush1.bf16.msra.mxu0 %v1124
      %1154 = vmatprep.subr.bf16.mxu0 0
      %1155 = vmatpush2.bf16.msra.mxu0 0
      %1156 = vmatprep.subr.bf16.mxu0 0
      %1157 = vmatpush2.bf16.msra.mxu0 0
      %1158 = vmatprep.subr.bf16.mxu0 0
      %1159 = vmatpush2.bf16.msra.mxu0 0
      %1160 = vmatprep.subr.bf16.mxu0 0
      %1161 = vmatpush2.bf16.msra.mxu0 0
      %1162 = vmatprep.subr.bf16.mxu0 0
      %1163 = vmatpush2.bf16.msra.mxu0 0
      %1164 = vmatprep.subr.bf16.mxu0 0
      %1165 = vmatpush2.bf16.msra.mxu0 0
      %1166 = vmatprep.subr.bf16.mxu0 0
      %1167 = vmatpush2.bf16.msra.mxu0 0
      %1168 = vmatprep.subr.bf16.mxu0 0
      %1169 = vmatpush2.bf16.msra.mxu0 0
      %1170 = vmatprep.mubr.bf16.mxu0 0
      %1171 = vmatmul.mubr.bf16.gmra.mxu0 %v1127
      %v1172 = vpop.f32.mrf.mxu0
      %v1173 = vadd.f32 0.0, %v1172
      %v1174 = vpop.f32.mrf.mxu0
      %v1175 = vpop.f32.mrf.mxu0
      %v1176 = vadd.f32 0.0, %v1175
      %v1177 = vpop.f32.mrf.mxu0
      %1178 = vmatprep.mubr.bf16.mxu0 0
      %1179 = vmatmul.mubr.bf16.gmra.mxu0 %v1130
      %v1180 = vpop.f32.mrf.mxu0
      %v1181 = vadd.f32 0.0, %v1180
      %v1182 = vpop.f32.mrf.mxu0
      %v1183 = vpop.f32.mrf.mxu0
      %v1184 = vadd.f32 0.0, %v1183
      %v1185 = vpop.f32.mrf.mxu0
      %1186 = vmatprep.mubr.bf16.mxu0 0
      %1187 = vmatmul.mubr.bf16.gmra.mxu0 %v1133
      %v1188 = vpop.f32.mrf.mxu0
      %v1189 = vadd.f32 0.0, %v1188
      %v1190 = vpop.f32.mrf.mxu0
      %v1191 = vpop.f32.mrf.mxu0
      %v1192 = vadd.f32 0.0, %v1191
      %v1193 = vpop.f32.mrf.mxu0
      %1194 = vmatprep.mubr.bf16.mxu0 0
      %1195 = vmatmul.mubr.bf16.gmra.mxu0 %v1136
      %v1196 = vpop.f32.mrf.mxu0
      %v1197 = vadd.f32 0.0, %v1196
      %v1198 = vpop.f32.mrf.mxu0
      %v1199 = vpop.f32.mrf.mxu0
      %v1200 = vadd.f32 0.0, %v1199
      %v1201 = vpop.f32.mrf.mxu0
      %1202 = vdwg.mxu0
      %v1203 = vadd.f32 %v970, %v1173
      %v1204 = vadd.f32 %v971, %v1176
      %v1205 = vadd.f32 %v972, %v1181
      %v1206 = vadd.f32 %v973, %v1184
      %v1207 = vadd.f32 %v974, %v1189
      %v1208 = vadd.f32 %v975, %v1192
      %v1209 = vadd.f32 %v976, %v1197
      %v1210 = vadd.f32 %v977, %v1200
      %s1211 = scalar_lea.vmem %s248, 8
      %v1212 = vld [vmem:[%s1211] sm:$0xf]
      %v1213 = vld [vmem:[%s1211 + $0x8] sm:$0xf]
      %v1214 = vld [vmem:[%s1211 + $0x10] sm:$0xf]
      %v1215 = vld [vmem:[%s1211 + $0x18] sm:$0xf]
      %v1216 = vld [vmem:[%s1211 + $0x20] sm:$0xf]
      %v1217 = vld [vmem:[%s1211 + $0x28] sm:$0xf]
      %v1218 = vld [vmem:[%s1211 + $0x30] sm:$0xf]
      %v1219 = vld [vmem:[%s1211 + $0x38] sm:$0xf]
      %v1220 = vld [vmem:[%s253 + $0x30] sm:$0xf]
      %v1221 = vld [vmem:[%s253 + $0x34] sm:$0xf]
      %v1230 = vunpack.c.l.b16 %v1212
      %v1231 = vunpack.c.l.b16 %v1213
      %v1232 = vunpack.c.l.b16 %v1214
      %v1233 = vunpack.c.l.b16 %v1215
      %v1234 = vunpack.c.l.b16 %v1216
      %v1235 = vunpack.c.l.b16 %v1217
      %v1236 = vunpack.c.l.b16 %v1218
      %v1237 = vunpack.c.l.b16 %v1219
      %v1238 = vpack.c.b16 %v1231, %v1230
      %v1239 = vpack.c.b16 %v1233, %v1232
      %v1240 = vpack.c.b16 %v1235, %v1234
      %v1241 = vpack.c.b16 %v1237, %v1236
      %v1244 = vunpack.c.l.b16 %v1220
      %v1245 = vunpack.c.l.b16 %v1221
      %v1246 = vpack.c.b16 %v1245, %v1244
      %v1249 = vsel %vm317, %v1238, 0
      %v1252 = vsel %vm317, %v1239, 0
      %v1255 = vsel %vm317, %v1240, 0
      %v1258 = vsel %vm317, %v1241, 0
      %1260 = vmatprep.subr.bf16.mxu0 0
      %1261 = vmatpush1.bf16.msra.mxu0 0
      %1262 = vmatprep.subr.bf16.mxu0 0
      %1263 = vmatpush1.bf16.msra.mxu0 0
      %1264 = vmatprep.subr.bf16.mxu0 0
      %1265 = vmatpush1.bf16.msra.mxu0 0
      %1266 = vmatprep.subr.bf16.mxu0 0
      %1267 = vmatpush1.bf16.msra.mxu0 0
      %1268 = vmatprep.subr.bf16.mxu0 0
      %1269 = vmatpush1.bf16.msra.mxu0 0
      %1270 = vmatprep.subr.bf16.mxu0 0
      %1271 = vmatpush1.bf16.msra.mxu0 0
      %1272 = vmatprep.subr.bf16.mxu0 0
      %1273 = vmatpush1.bf16.msra.mxu0 0
      %1274 = vmatprep.subr.bf16.mxu0 0
      %1275 = vmatpush1.bf16.msra.mxu0 %v1246
      %1276 = vmatprep.subr.bf16.mxu0 0
      %1277 = vmatpush2.bf16.msra.mxu0 0
      %1278 = vmatprep.subr.bf16.mxu0 0
      %1279 = vmatpush2.bf16.msra.mxu0 0
      %1280 = vmatprep.subr.bf16.mxu0 0
      %1281 = vmatpush2.bf16.msra.mxu0 0
      %1282 = vmatprep.subr.bf16.mxu0 0
      %1283 = vmatpush2.bf16.msra.mxu0 0
      %1284 = vmatprep.subr.bf16.mxu0 0
      %1285 = vmatpush2.bf16.msra.mxu0 0
      %1286 = vmatprep.subr.bf16.mxu0 0
      %1287 = vmatpush2.bf16.msra.mxu0 0
      %1288 = vmatprep.subr.bf16.mxu0 0
      %1289 = vmatpush2.bf16.msra.mxu0 0
      %1290 = vmatprep.subr.bf16.mxu0 0
      %1291 = vmatpush2.bf16.msra.mxu0 0
      %1292 = vmatprep.mubr.bf16.mxu0 0
      %1293 = vmatmul.mubr.bf16.gmra.mxu0 %v1249
      %v1294 = vpop.f32.mrf.mxu0
      %v1295 = vadd.f32 0.0, %v1294
      %v1296 = vpop.f32.mrf.mxu0
      %v1297 = vpop.f32.mrf.mxu0
      %v1298 = vadd.f32 0.0, %v1297
      %v1299 = vpop.f32.mrf.mxu0
      %1300 = vmatprep.mubr.bf16.mxu0 0
      %1301 = vmatmul.mubr.bf16.gmra.mxu0 %v1252
      %v1302 = vpop.f32.mrf.mxu0
      %v1303 = vadd.f32 0.0, %v1302
      %v1304 = vpop.f32.mrf.mxu0
      %v1305 = vpop.f32.mrf.mxu0
      %v1306 = vadd.f32 0.0, %v1305
      %v1307 = vpop.f32.mrf.mxu0
      %1308 = vmatprep.mubr.bf16.mxu0 0
      %1309 = vmatmul.mubr.bf16.gmra.mxu0 %v1255
      %v1310 = vpop.f32.mrf.mxu0
      %v1311 = vadd.f32 0.0, %v1310
      %v1312 = vpop.f32.mrf.mxu0
      %v1313 = vpop.f32.mrf.mxu0
      %v1314 = vadd.f32 0.0, %v1313
      %v1315 = vpop.f32.mrf.mxu0
      %1316 = vmatprep.mubr.bf16.mxu0 0
      %1317 = vmatmul.mubr.bf16.gmra.mxu0 %v1258
      %v1318 = vpop.f32.mrf.mxu0
      %v1319 = vadd.f32 0.0, %v1318
      %v1320 = vpop.f32.mrf.mxu0
      %v1321 = vpop.f32.mrf.mxu0
      %v1322 = vadd.f32 0.0, %v1321
      %v1323 = vpop.f32.mrf.mxu0
      %1324 = vdwg.mxu0
      %v1325 = vadd.f32 %v1203, %v1295
      %v1326 = vadd.f32 %v1204, %v1298
      %v1327 = vadd.f32 %v1205, %v1303
      %v1328 = vadd.f32 %v1206, %v1306
      %v1329 = vadd.f32 %v1207, %v1311
      %v1330 = vadd.f32 %v1208, %v1314
      %v1331 = vadd.f32 %v1209, %v1319
      %v1332 = vadd.f32 %v1210, %v1322
      %s1333 = scalar_lea.vmem %s248, 80
      %v1334 = vld [vmem:[%s1333] sm:$0xf]
      %v1335 = vld [vmem:[%s1333 + $0x8] sm:$0xf]
      %v1336 = vld [vmem:[%s1333 + $0x10] sm:$0xf]
      %v1337 = vld [vmem:[%s1333 + $0x18] sm:$0xf]
      %v1338 = vld [vmem:[%s1333 + $0x20] sm:$0xf]
      %v1339 = vld [vmem:[%s1333 + $0x28] sm:$0xf]
      %v1340 = vld [vmem:[%s1333 + $0x30] sm:$0xf]
      %v1341 = vld [vmem:[%s1333 + $0x38] sm:$0xf]
      %v1342 = vld [vmem:[%s253 + $0x38] sm:$0xf]
      %v1343 = vld [vmem:[%s253 + $0x3c] sm:$0xf]
      %v1352 = vunpack.c.l.b16 %v1334
      %v1353 = vunpack.c.l.b16 %v1335
      %v1354 = vunpack.c.l.b16 %v1336
      %v1355 = vunpack.c.l.b16 %v1337
      %v1356 = vunpack.c.l.b16 %v1338
      %v1357 = vunpack.c.l.b16 %v1339
      %v1358 = vunpack.c.l.b16 %v1340
      %v1359 = vunpack.c.l.b16 %v1341
      %v1360 = vpack.c.b16 %v1353, %v1352
      %v1361 = vpack.c.b16 %v1355, %v1354
      %v1362 = vpack.c.b16 %v1357, %v1356
      %v1363 = vpack.c.b16 %v1359, %v1358
      %v1366 = vunpack.c.l.b16 %v1342
      %v1367 = vunpack.c.l.b16 %v1343
      %v1368 = vpack.c.b16 %v1367, %v1366
      %v1371 = vsel %vm317, %v1360, 0
      %v1374 = vsel %vm317, %v1361, 0
      %v1377 = vsel %vm317, %v1362, 0
      %v1380 = vsel %vm317, %v1363, 0
      %1382 = vmatprep.subr.bf16.mxu0 0
      %1383 = vmatpush1.bf16.msra.mxu0 0
      %1384 = vmatprep.subr.bf16.mxu0 0
      %1385 = vmatpush1.bf16.msra.mxu0 0
      %1386 = vmatprep.subr.bf16.mxu0 0
      %1387 = vmatpush1.bf16.msra.mxu0 0
      %1388 = vmatprep.subr.bf16.mxu0 0
      %1389 = vmatpush1.bf16.msra.mxu0 0
      %1390 = vmatprep.subr.bf16.mxu0 0
      %1391 = vmatpush1.bf16.msra.mxu0 0
      %1392 = vmatprep.subr.bf16.mxu0 0
      %1393 = vmatpush1.bf16.msra.mxu0 0
      %1394 = vmatprep.subr.bf16.mxu0 0
      %1395 = vmatpush1.bf16.msra.mxu0 0
      %1396 = vmatprep.subr.bf16.mxu0 0
      %1397 = vmatpush1.bf16.msra.mxu0 %v1368
      %1398 = vmatprep.subr.bf16.mxu0 0
      %1399 = vmatpush2.bf16.msra.mxu0 0
      %1400 = vmatprep.subr.bf16.mxu0 0
      %1401 = vmatpush2.bf16.msra.mxu0 0
      %1402 = vmatprep.subr.bf16.mxu0 0
      %1403 = vmatpush2.bf16.msra.mxu0 0
      %1404 = vmatprep.subr.bf16.mxu0 0
      %1405 = vmatpush2.bf16.msra.mxu0 0
      %1406 = vmatprep.subr.bf16.mxu0 0
      %1407 = vmatpush2.bf16.msra.mxu0 0
      %1408 = vmatprep.subr.bf16.mxu0 0
      %1409 = vmatpush2.bf16.msra.mxu0 0
      %1410 = vmatprep.subr.bf16.mxu0 0
      %1411 = vmatpush2.bf16.msra.mxu0 0
      %1412 = vmatprep.subr.bf16.mxu0 0
      %1413 = vmatpush2.bf16.msra.mxu0 0
      %1414 = vmatprep.mubr.bf16.mxu0 0
      %1415 = vmatmul.mubr.bf16.gmra.mxu0 %v1371
      %v1416 = vpop.f32.mrf.mxu0
      %v1417 = vadd.f32 0.0, %v1416
      %v1418 = vpop.f32.mrf.mxu0
      %v1419 = vpop.f32.mrf.mxu0
      %v1420 = vadd.f32 0.0, %v1419
      %v1421 = vpop.f32.mrf.mxu0
      %1422 = vmatprep.mubr.bf16.mxu0 0
      %1423 = vmatmul.mubr.bf16.gmra.mxu0 %v1374
      %v1424 = vpop.f32.mrf.mxu0
      %v1425 = vadd.f32 0.0, %v1424
      %v1426 = vpop.f32.mrf.mxu0
      %v1427 = vpop.f32.mrf.mxu0
      %v1428 = vadd.f32 0.0, %v1427
      %v1429 = vpop.f32.mrf.mxu0
      %1430 = vmatprep.mubr.bf16.mxu0 0
      %1431 = vmatmul.mubr.bf16.gmra.mxu0 %v1377
      %v1432 = vpop.f32.mrf.mxu0
      %v1433 = vadd.f32 0.0, %v1432
      %v1434 = vpop.f32.mrf.mxu0
      %v1435 = vpop.f32.mrf.mxu0
      %v1436 = vadd.f32 0.0, %v1435
      %v1437 = vpop.f32.mrf.mxu0
      %1438 = vmatprep.mubr.bf16.mxu0 0
      %1439 = vmatmul.mubr.bf16.gmra.mxu0 %v1380
      %v1440 = vpop.f32.mrf.mxu0
      %v1441 = vadd.f32 0.0, %v1440
      %v1442 = vpop.f32.mrf.mxu0
      %v1443 = vpop.f32.mrf.mxu0
      %v1444 = vadd.f32 0.0, %v1443
      %v1445 = vpop.f32.mrf.mxu0
      %1446 = vdwg.mxu0
      %v1447 = vadd.f32 %v1325, %v1417
      %v1448 = vadd.f32 %v1326, %v1420
      %v1449 = vadd.f32 %v1327, %v1425
      %v1450 = vadd.f32 %v1328, %v1428
      %v1451 = vadd.f32 %v1329, %v1433
      %v1452 = vadd.f32 %v1330, %v1436
      %v1453 = vadd.f32 %v1331, %v1441
      %v1454 = vadd.f32 %v1332, %v1444
      %v1455 = vld [vmem:[%s1211] sm:$0xf]
      %v1456 = vld [vmem:[%s1211 + $0x4] sm:$0x1]
      %v1457 = vld [vmem:[%s1211 + $0x8] sm:$0xf]
      %v1458 = vld [vmem:[%s1211 + $0xc] sm:$0x1]
      %v1459 = vld [vmem:[%s1211 + $0x10] sm:$0xf]
      %v1460 = vld [vmem:[%s1211 + $0x14] sm:$0x1]
      %v1461 = vld [vmem:[%s1211 + $0x18] sm:$0xf]
      %v1462 = vld [vmem:[%s1211 + $0x1c] sm:$0x1]
      %v1463 = vld [vmem:[%s1211 + $0x20] sm:$0xf]
      %v1464 = vld [vmem:[%s1211 + $0x24] sm:$0x1]
      %v1465 = vld [vmem:[%s1211 + $0x28] sm:$0xf]
      %v1466 = vld [vmem:[%s1211 + $0x2c] sm:$0x1]
      %v1467 = vld [vmem:[%s1211 + $0x30] sm:$0xf]
      %v1468 = vld [vmem:[%s1211 + $0x34] sm:$0x1]
      %v1469 = vld [vmem:[%s1211 + $0x38] sm:$0xf]
      %v1470 = vld [vmem:[%s1211 + $0x3c] sm:$0x1]
      %v1472 = vshrl.u32 %v1455, 16
      %v1474 = vrot.slane %v1472, 4
      %v1475 = vshll.u32 %v1455, 16
      %v1477 = vrot.slane %v1475, 5
      %v1478 = vor.u32 %v1474, %v1477
      %v1479 = vrot.slane %v1478, 4
      %v1481 = vshll.u32 %v1456, 16
      %v1483 = vrot.slane %v1481, 5
      %v1484 = vsel %vm516, %v1479, %v1483
      %v1486 = vshrl.u32 %v1457, 16
      %v1488 = vrot.slane %v1486, 4
      %v1489 = vshll.u32 %v1457, 16
      %v1491 = vrot.slane %v1489, 5
      %v1492 = vor.u32 %v1488, %v1491
      %v1493 = vrot.slane %v1492, 4
      %v1495 = vshll.u32 %v1458, 16
      %v1497 = vrot.slane %v1495, 5
      %v1498 = vsel %vm516, %v1493, %v1497
      %v1500 = vshrl.u32 %v1459, 16
      %v1502 = vrot.slane %v1500, 4
      %v1503 = vshll.u32 %v1459, 16
      %v1505 = vrot.slane %v1503, 5
      %v1506 = vor.u32 %v1502, %v1505
      %v1507 = vrot.slane %v1506, 4
      %v1509 = vshll.u32 %v1460, 16
      %v1511 = vrot.slane %v1509, 5
      %v1512 = vsel %vm516, %v1507, %v1511
      %v1514 = vshrl.u32 %v1461, 16
      %v1516 = vrot.slane %v1514, 4
      %v1517 = vshll.u32 %v1461, 16
      %v1519 = vrot.slane %v1517, 5
      %v1520 = vor.u32 %v1516, %v1519
      %v1521 = vrot.slane %v1520, 4
      %v1523 = vshll.u32 %v1462, 16
      %v1525 = vrot.slane %v1523, 5
      %v1526 = vsel %vm516, %v1521, %v1525
      %v1528 = vshrl.u32 %v1463, 16
      %v1530 = vrot.slane %v1528, 4
      %v1531 = vshll.u32 %v1463, 16
      %v1533 = vrot.slane %v1531, 5
      %v1534 = vor.u32 %v1530, %v1533
      %v1535 = vrot.slane %v1534, 4
      %v1537 = vshll.u32 %v1464, 16
      %v1539 = vrot.slane %v1537, 5
      %v1540 = vsel %vm516, %v1535, %v1539
      %v1542 = vshrl.u32 %v1465, 16
      %v1544 = vrot.slane %v1542, 4
      %v1545 = vshll.u32 %v1465, 16
      %v1547 = vrot.slane %v1545, 5
      %v1548 = vor.u32 %v1544, %v1547
      %v1549 = vrot.slane %v1548, 4
      %v1551 = vshll.u32 %v1466, 16
      %v1553 = vrot.slane %v1551, 5
      %v1554 = vsel %vm516, %v1549, %v1553
      %v1556 = vshrl.u32 %v1467, 16
      %v1558 = vrot.slane %v1556, 4
      %v1559 = vshll.u32 %v1467, 16
      %v1561 = vrot.slane %v1559, 5
      %v1562 = vor.u32 %v1558, %v1561
      %v1563 = vrot.slane %v1562, 4
      %v1565 = vshll.u32 %v1468, 16
      %v1567 = vrot.slane %v1565, 5
      %v1568 = vsel %vm516, %v1563, %v1567
      %v1570 = vshrl.u32 %v1469, 16
      %v1572 = vrot.slane %v1570, 4
      %v1573 = vshll.u32 %v1469, 16
      %v1575 = vrot.slane %v1573, 5
      %v1576 = vor.u32 %v1572, %v1575
      %v1577 = vrot.slane %v1576, 4
      %v1579 = vshll.u32 %v1470, 16
      %v1581 = vrot.slane %v1579, 5
      %v1582 = vsel %vm516, %v1577, %v1581
      %v1583 = vld [vmem:[%s253 + $0x40] sm:$0xf]
      %v1584 = vld [vmem:[%s253 + $0x44] sm:$0xf]
      %v1585 = vunpack.c.l.b16 %v1484
      %v1586 = vunpack.c.l.b16 %v1498
      %v1587 = vunpack.c.l.b16 %v1512
      %v1588 = vunpack.c.l.b16 %v1526
      %v1589 = vunpack.c.l.b16 %v1540
      %v1590 = vunpack.c.l.b16 %v1554
      %v1591 = vunpack.c.l.b16 %v1568
      %v1592 = vunpack.c.l.b16 %v1582
      %v1593 = vpack.c.b16 %v1586, %v1585
      %v1594 = vpack.c.b16 %v1588, %v1587
      %v1595 = vpack.c.b16 %v1590, %v1589
      %v1596 = vpack.c.b16 %v1592, %v1591
      %v1599 = vunpack.c.l.b16 %v1583
      %v1600 = vunpack.c.l.b16 %v1584
      %v1601 = vpack.c.b16 %v1600, %v1599
      %v1604 = vsel %vm317, %v1593, 0
      %v1607 = vsel %vm317, %v1594, 0
      %v1610 = vsel %vm317, %v1595, 0
      %v1613 = vsel %vm317, %v1596, 0
      %1615 = vmatprep.subr.bf16.mxu0 0
      %1616 = vmatpush1.bf16.msra.mxu0 0
      %1617 = vmatprep.subr.bf16.mxu0 0
      %1618 = vmatpush1.bf16.msra.mxu0 0
      %1619 = vmatprep.subr.bf16.mxu0 0
      %1620 = vmatpush1.bf16.msra.mxu0 0
      %1621 = vmatprep.subr.bf16.mxu0 0
      %1622 = vmatpush1.bf16.msra.mxu0 0
      %1623 = vmatprep.subr.bf16.mxu0 0
      %1624 = vmatpush1.bf16.msra.mxu0 0
      %1625 = vmatprep.subr.bf16.mxu0 0
      %1626 = vmatpush1.bf16.msra.mxu0 0
      %1627 = vmatprep.subr.bf16.mxu0 0
      %1628 = vmatpush1.bf16.msra.mxu0 0
      %1629 = vmatprep.subr.bf16.mxu0 0
      %1630 = vmatpush1.bf16.msra.mxu0 %v1601
      %1631 = vmatprep.subr.bf16.mxu0 0
      %1632 = vmatpush2.bf16.msra.mxu0 0
      %1633 = vmatprep.subr.bf16.mxu0 0
      %1634 = vmatpush2.bf16.msra.mxu0 0
      %1635 = vmatprep.subr.bf16.mxu0 0
      %1636 = vmatpush2.bf16.msra.mxu0 0
      %1637 = vmatprep.subr.bf16.mxu0 0
      %1638 = vmatpush2.bf16.msra.mxu0 0
      %1639 = vmatprep.subr.bf16.mxu0 0
      %1640 = vmatpush2.bf16.msra.mxu0 0
      %1641 = vmatprep.subr.bf16.mxu0 0
      %1642 = vmatpush2.bf16.msra.mxu0 0
      %1643 = vmatprep.subr.bf16.mxu0 0
      %1644 = vmatpush2.bf16.msra.mxu0 0
      %1645 = vmatprep.subr.bf16.mxu0 0
      %1646 = vmatpush2.bf16.msra.mxu0 0
      %1647 = vmatprep.mubr.bf16.mxu0 0
      %1648 = vmatmul.mubr.bf16.gmra.mxu0 %v1604
      %v1649 = vpop.f32.mrf.mxu0
      %v1650 = vadd.f32 0.0, %v1649
      %v1651 = vpop.f32.mrf.mxu0
      %v1652 = vpop.f32.mrf.mxu0
      %v1653 = vadd.f32 0.0, %v1652
      %v1654 = vpop.f32.mrf.mxu0
      %1655 = vmatprep.mubr.bf16.mxu0 0
      %1656 = vmatmul.mubr.bf16.gmra.mxu0 %v1607
      %v1657 = vpop.f32.mrf.mxu0
      %v1658 = vadd.f32 0.0, %v1657
      %v1659 = vpop.f32.mrf.mxu0
      %v1660 = vpop.f32.mrf.mxu0
      %v1661 = vadd.f32 0.0, %v1660
      %v1662 = vpop.f32.mrf.mxu0
      %1663 = vmatprep.mubr.bf16.mxu0 0
      %1664 = vmatmul.mubr.bf16.gmra.mxu0 %v1610
      %v1665 = vpop.f32.mrf.mxu0
      %v1666 = vadd.f32 0.0, %v1665
      %v1667 = vpop.f32.mrf.mxu0
      %v1668 = vpop.f32.mrf.mxu0
      %v1669 = vadd.f32 0.0, %v1668
      %v1670 = vpop.f32.mrf.mxu0
      %1671 = vmatprep.mubr.bf16.mxu0 0
      %1672 = vmatmul.mubr.bf16.gmra.mxu0 %v1613
      %v1673 = vpop.f32.mrf.mxu0
      %v1674 = vadd.f32 0.0, %v1673
      %v1675 = vpop.f32.mrf.mxu0
      %v1676 = vpop.f32.mrf.mxu0
      %v1677 = vadd.f32 0.0, %v1676
      %v1678 = vpop.f32.mrf.mxu0
      %1679 = vdwg.mxu0
      %v1680 = vadd.f32 %v1447, %v1650
      %v1681 = vadd.f32 %v1448, %v1653
      %v1682 = vadd.f32 %v1449, %v1658
      %v1683 = vadd.f32 %v1450, %v1661
      %v1684 = vadd.f32 %v1451, %v1666
      %v1685 = vadd.f32 %v1452, %v1669
      %v1686 = vadd.f32 %v1453, %v1674
      %v1687 = vadd.f32 %v1454, %v1677
      %v1688 = vld [vmem:[%s256] sm:$0x1]
      %v1690 = vlaneseq
      %v1691 = vshrl.u32 %v1690, 7
      %v1692 = vsub.s32 0, %v1691
      %v1693 = vrot.slane %v1688, %v1692
      %v1695 = vmul.f32 %v1680, %v1693
      %v1696 = vmul.f32 %v1681, %v1693
      %v1697 = vmul.f32 %v1682, %v1693
      %v1698 = vmul.f32 %v1683, %v1693
      %v1699 = vmul.f32 %v1684, %v1693
      %v1700 = vmul.f32 %v1685, %v1693
      %v1701 = vmul.f32 %v1686, %v1693
      %v1702 = vmul.f32 %v1687, %v1693
      %v1703 = vld [vmem:[%s259] sm:$0x1]
      %v1705 = vlaneseq
      %v1706 = vshrl.u32 %v1705, 7
      %v1707 = vsub.s32 0, %v1706
      %v1708 = vrot.slane %v1703, %v1707
      %v1710 = vadd.f32 %v1695, %v1708
      %v1711 = vadd.f32 %v1696, %v1708
      %v1712 = vadd.f32 %v1697, %v1708
      %v1713 = vadd.f32 %v1698, %v1708
      %v1714 = vadd.f32 %v1699, %v1708
      %v1715 = vadd.f32 %v1700, %v1708
      %v1716 = vadd.f32 %v1701, %v1708
      %v1717 = vadd.f32 %v1702, %v1708
      %v1718 = vmax.f32 %v1710, 0.0
      %v1719 = vmax.f32 %v1711, 0.0
      %v1720 = vmax.f32 %v1712, 0.0
      %v1721 = vmax.f32 %v1713, 0.0
      %v1722 = vmax.f32 %v1714, 0.0
      %v1723 = vmax.f32 %v1715, 0.0
      %v1724 = vmax.f32 %v1716, 0.0
      %v1725 = vmax.f32 %v1717, 0.0
      %v1726 = vpack.c.bf16 %v1719, %v1718
      %v1727 = vpack.c.bf16 %v1721, %v1720
      %v1728 = vpack.c.bf16 %v1723, %v1722
      %v1729 = vpack.c.bf16 %v1725, %v1724
      %v1734 = vunpack.c.l.b16 %v1726
      %v1735 = vunpack.c.h.b16 %v1726
      %v1736 = vunpack.c.l.b16 %v1727
      %v1737 = vunpack.c.h.b16 %v1727
      %v1738 = vunpack.c.l.b16 %v1728
      %v1739 = vunpack.c.h.b16 %v1728
      %v1740 = vunpack.c.l.b16 %v1729
      %v1741 = vunpack.c.h.b16 %v1729
      %v1742 = vpack.c.b16 %v1734, %v1734
      %v1743 = vpack.c.b16 %v1735, %v1735
      %v1744 = vpack.c.b16 %v1736, %v1736
      %v1745 = vpack.c.b16 %v1737, %v1737
      %v1746 = vpack.c.b16 %v1738, %v1738
      %v1747 = vpack.c.b16 %v1739, %v1739
      %v1748 = vpack.c.b16 %v1740, %v1740
      %v1749 = vpack.c.b16 %v1741, %v1741
      %1758 = vst [vmem:[%s267] sm:$0xf] %v1742
      %1759 = vst [vmem:[%s267 + $0x4] sm:$0xf] %v1743
      %1760 = vst [vmem:[%s267 + $0x8] sm:$0xf] %v1744
      %1761 = vst [vmem:[%s267 + $0xc] sm:$0xf] %v1745
      %1762 = vst [vmem:[%s267 + $0x10] sm:$0xf] %v1746
      %1763 = vst [vmem:[%s267 + $0x14] sm:$0xf] %v1747
      %1764 = vst [vmem:[%s267 + $0x18] sm:$0xf] %v1748
      %1765 = vst [vmem:[%s267 + $0x1c] sm:$0xf] %v1749
      %s1766 = smul.u32 8, %s19
      %p1767 = scmp.lt.s32.totalorder %s1766, 15
      %s1768 = scalar_select %p1767, %s1766, 15
      %p1769 = scmp.lt.s32.totalorder %s20, 0
      %s1770 = scalar_select %p1769, %s20, 0
      %s1771 = sadd.s32 %s1770, %s1768
      %s1772 = smul.addr %s1771, 4
      %s1773 = scalar_lea.vmem %s4, %s1772
      // Predicated region
      $region37: #{bottleneck_forward.5} parent=35 // pred_check
        %p1774 = pneg %p151
      $region38: #{bottleneck_forward.5} parent=35 // pred_check_branch
        %1776 = sbr.rel (%p1774) target = $region40
      $region39: #{bottleneck_forward.5} parent=35 // pred_region
        %s1777 = smul.u32 8, %s19
      $region40: #{bottleneck_forward.5} parent=35 // pred_fallthru
        _
    $region36: #{bottleneck_forward.5} parent=5 // pred_fallthru
      _
    %p1778 = scmp.le.s32.totalorder 2, %s10
    // Predicated region
    $region41: #{bottleneck_forward.5} parent=5 // pred_check
      %p1779 = pneg %p1778
    $region42: #{bottleneck_forward.5} parent=5 // pred_check_branch
      %1781 = sbr.rel (%p1779) target = $region44
    $region43: #{bottleneck_forward.5} parent=5 // pred_region
      %s1782 = ssub.s32 %s10, 2
      // Predicated region
      $region45: #{bottleneck_forward.5} parent=43 // pred_check
        %p1783 = pneg %p157
      $region46: #{bottleneck_forward.5} parent=43 // pred_check_branch
        %1785 = sbr.rel (%p1783) target = $region48
      $region47: #{bottleneck_forward.5} parent=43 // pred_region
        %s1786 = smul.u32 8, %s21
        %p1787 = scmp.lt.s32.totalorder %s1786, 15
        %s1788 = scalar_select %p1787, %s1786, 15
        %p1789 = scmp.lt.s32.totalorder %s22, 0
        %s1790 = scalar_select %p1789, %s22, 0
        %s1791 = sadd.s32 %s1790, %s1788
        %s1792 = smul.addr %s1791, 4
        %s1793 = scalar_lea.vmem %s4, %s1792
      $region48: #{bottleneck_forward.5} parent=43 // pred_fallthru
        _
    $region44: #{bottleneck_forward.5} parent=5 // pred_fallthru
      _
  $region6: #{bottleneck_forward.5} parent=0 // loop_footer
    %s14 = sadd.s32 1, %s10
  $region7: #{bottleneck_forward.5} parent=0 // loop_footer_branch
    %9 = sbr.rel target = $region3
  $region8: #{bottleneck_forward.5} parent=0 // loop_exit
    _

// kernel: bottleneck_forward.6
$region0: #{bottleneck_forward.6}
  #allocation0 [shape = 'u32[]', space=smem, size = 0x4, offset = 0x4, fixed_abs, tag = 'smem constant byte address 0x4 - core index']
  #allocation1 [shape = 'u32[144,128]{1,0:T(1,128)}', space=vmem, size = 0x12000, scoped, tag = 'internal scratch']
  #allocation2 [shape = 'f32[128,128]{1,0:T(8,128)}', space=vmem, size = 0x10000, scoped, tag = 'scratch operand']
  %s0 = inlined_call_operand.vmem [shape: bf16[128,32], index: 0, kind: input, shape index: {}]
  %s1 = inlined_call_operand.vmem [shape: bf16[32,128], index: 1, kind: input, shape index: {}]
  %s2 = inlined_call_operand.vmem [shape: f32[1,128], index: 2, kind: input, shape index: {}]
  %s3 = inlined_call_operand.vmem [shape: f32[1,128], index: 3, kind: input, shape index: {}]
  %s4 = inlined_call_operand.vmem [shape: bf16[128,128], index: 4, kind: output, shape index: {}]
  %s5 = sld [smem:[#allocation0]]
  $region34: #{bottleneck_forward.6} parent=0
    _
  %s7 = ssub.s32 1, %s5
  %s8 = scalar_select 0, %s7, %s5
  // Predicated region
  $region2: #{bottleneck_forward.6} parent=0 // pred_check
    _
  $region3: #{bottleneck_forward.6} parent=0 // pred_check_branch
    %10 = sbr.rel (0) target = $region5
  $region4: #{bottleneck_forward.6} parent=0 // pred_region
    _
  $region5: #{bottleneck_forward.6} parent=0 // pred_fallthru
    _
  // Predicated region
  $region6: #{bottleneck_forward.6} parent=0 // pred_check
    _
  $region7: #{bottleneck_forward.6} parent=0 // pred_check_branch
    %12 = sbr.rel (0) target = $region9
  $region8: #{bottleneck_forward.6} parent=0 // pred_region
    _
  $region9: #{bottleneck_forward.6} parent=0 // pred_fallthru
    _
  // Predicated region
  $region10: #{bottleneck_forward.6} parent=0 // pred_check
    _
  $region11: #{bottleneck_forward.6} parent=0 // pred_check_branch
    %14 = sbr.rel (0) target = $region13
  $region12: #{bottleneck_forward.6} parent=0 // pred_region
    _
  $region13: #{bottleneck_forward.6} parent=0 // pred_fallthru
    _
  // Predicated region
  $region14: #{bottleneck_forward.6} parent=0 // pred_check
    _
  $region15: #{bottleneck_forward.6} parent=0 // pred_check_branch
    %16 = sbr.rel (0) target = $region17
  $region16: #{bottleneck_forward.6} parent=0 // pred_region
    _
  $region17: #{bottleneck_forward.6} parent=0 // pred_fallthru
    _
  %p18 = scmp.eq.s32.totalorder 0, 0
  // Predicated region
  $region18: #{bottleneck_forward.6} parent=0 // pred_check
    %p19 = pneg %p18
  $region19: #{bottleneck_forward.6} parent=0 // pred_check_branch
    %21 = sbr.rel (%p19) target = $region21
  $region20: #{bottleneck_forward.6} parent=0 // pred_region
    %22 = vst [vmem:[#allocation2] sm:$0xff] 0.0
    %23 = vst [vmem:[#allocation2 + $0x8] sm:$0xff] 0.0
    %24 = vst [vmem:[#allocation2 + $0x10] sm:$0xff] 0.0
    %25 = vst [vmem:[#allocation2 + $0x18] sm:$0xff] 0.0
    %26 = vst [vmem:[#allocation2 + $0x20] sm:$0xff] 0.0
    %27 = vst [vmem:[#allocation2 + $0x28] sm:$0xff] 0.0
    %28 = vst [vmem:[#allocation2 + $0x30] sm:$0xff] 0.0
    %29 = vst [vmem:[#allocation2 + $0x38] sm:$0xff] 0.0
    %30 = vst [vmem:[#allocation2 + $0x40] sm:$0xff] 0.0
    %31 = vst [vmem:[#allocation2 + $0x48] sm:$0xff] 0.0
    %32 = vst [vmem:[#allocation2 + $0x50] sm:$0xff] 0.0
    %33 = vst [vmem:[#allocation2 + $0x58] sm:$0xff] 0.0
    %34 = vst [vmem:[#allocation2 + $0x60] sm:$0xff] 0.0
    %35 = vst [vmem:[#allocation2 + $0x68] sm:$0xff] 0.0
    %36 = vst [vmem:[#allocation2 + $0x70] sm:$0xff] 0.0
    %37 = vst [vmem:[#allocation2 + $0x78] sm:$0xff] 0.0
  $region21: #{bottleneck_forward.6} parent=0 // pred_fallthru
    _
  %v38 = vld [vmem:[#allocation2] sm:$0xff]
  %v39 = vld [vmem:[#allocation2 + $0x8] sm:$0xff]
  %v40 = vld [vmem:[#allocation2 + $0x10] sm:$0xff]
  %v41 = vld [vmem:[#allocation2 + $0x18] sm:$0xff]
  %v42 = vld [vmem:[#allocation2 + $0x20] sm:$0xff]
  %v43 = vld [vmem:[#allocation2 + $0x28] sm:$0xff]
  %v44 = vld [vmem:[#allocation2 + $0x30] sm:$0xff]
  %v45 = vld [vmem:[#allocation2 + $0x38] sm:$0xff]
  %v46 = vld [vmem:[#allocation2 + $0x40] sm:$0xff]
  %v47 = vld [vmem:[#allocation2 + $0x48] sm:$0xff]
  %v48 = vld [vmem:[#allocation2 + $0x50] sm:$0xff]
  %v49 = vld [vmem:[#allocation2 + $0x58] sm:$0xff]
  %v50 = vld [vmem:[#allocation2 + $0x60] sm:$0xff]
  %v51 = vld [vmem:[#allocation2 + $0x68] sm:$0xff]
  %v52 = vld [vmem:[#allocation2 + $0x70] sm:$0xff]
  %v53 = vld [vmem:[#allocation2 + $0x78] sm:$0xff]
  %v54 = vld [vmem:[%s0] sm:$0xf]
  %v55 = vld [vmem:[%s0 + $0x4] sm:$0xf]
  %v56 = vld [vmem:[%s0 + $0x8] sm:$0xf]
  %v57 = vld [vmem:[%s0 + $0xc] sm:$0xf]
  %v58 = vld [vmem:[%s0 + $0x10] sm:$0xf]
  %v59 = vld [vmem:[%s0 + $0x14] sm:$0xf]
  %v60 = vld [vmem:[%s0 + $0x18] sm:$0xf]
  %v61 = vld [vmem:[%s0 + $0x1c] sm:$0xf]
  %v62 = vld [vmem:[%s0 + $0x20] sm:$0xf]
  %v63 = vld [vmem:[%s0 + $0x24] sm:$0xf]
  %v64 = vld [vmem:[%s0 + $0x28] sm:$0xf]
  %v65 = vld [vmem:[%s0 + $0x2c] sm:$0xf]
  %v66 = vld [vmem:[%s0 + $0x30] sm:$0xf]
  %v67 = vld [vmem:[%s0 + $0x34] sm:$0xf]
  %v68 = vld [vmem:[%s0 + $0x38] sm:$0xf]
  %v69 = vld [vmem:[%s0 + $0x3c] sm:$0xf]
  %v70 = vld [vmem:[%s1] sm:$0xf]
  %v71 = vld [vmem:[%s1 + $0x4] sm:$0xf]
  %v72 = vld [vmem:[%s1 + $0x8] sm:$0xf]
  %v73 = vld [vmem:[%s1 + $0xc] sm:$0xf]
  %v90 = vunpack.c.l.b16 %v54
  %v91 = vunpack.c.l.b16 %v55
  %v92 = vunpack.c.l.b16 %v56
  %v93 = vunpack.c.l.b16 %v57
  %v94 = vunpack.c.l.b16 %v58
  %v95 = vunpack.c.l.b16 %v59
  %v96 = vunpack.c.l.b16 %v60
  %v97 = vunpack.c.l.b16 %v61
  %v98 = vunpack.c.l.b16 %v62
  %v99 = vunpack.c.l.b16 %v63
  %v100 = vunpack.c.l.b16 %v64
  %v101 = vunpack.c.l.b16 %v65
  %v102 = vunpack.c.l.b16 %v66
  %v103 = vunpack.c.l.b16 %v67
  %v104 = vunpack.c.l.b16 %v68
  %v105 = vunpack.c.l.b16 %v69
  %v106 = vpack.c.b16 %v91, %v90
  %v107 = vpack.c.b16 %v93, %v92
  %v108 = vpack.c.b16 %v95, %v94
  %v109 = vpack.c.b16 %v97, %v96
  %v110 = vpack.c.b16 %v99, %v98
  %v111 = vpack.c.b16 %v101, %v100
  %v112 = vpack.c.b16 %v103, %v102
  %v113 = vpack.c.b16 %v105, %v104
  %v118 = vunpack.c.l.b16 %v70
  %v119 = vunpack.c.l.b16 %v71
  %v120 = vunpack.c.l.b16 %v72
  %v121 = vunpack.c.l.b16 %v73
  %v122 = vpack.c.b16 %v119, %v118
  %v123 = vpack.c.b16 %v121, %v120
  %vm126 = vcmask 261120
  %v128 = vsel %vm126, %v106, 0
  %v131 = vsel %vm126, %v107, 0
  %v134 = vsel %vm126, %v108, 0
  %v137 = vsel %vm126, %v109, 0
  %v140 = vsel %vm126, %v110, 0
  %v143 = vsel %vm126, %v111, 0
  %v146 = vsel %vm126, %v112, 0
  %v149 = vsel %vm126, %v113, 0
  %151 = vmatprep.subr.bf16.mxu0 0
  %152 = vmatpush1.bf16.msra.mxu0 0
  %153 = vmatprep.subr.bf16.mxu0 0
  %154 = vmatpush1.bf16.msra.mxu0 0
  %155 = vmatprep.subr.bf16.mxu0 0
  %156 = vmatpush1.bf16.msra.mxu0 0
  %157 = vmatprep.subr.bf16.mxu0 0
  %158 = vmatpush1.bf16.msra.mxu0 0
  %159 = vmatprep.subr.bf16.mxu0 0
  %160 = vmatpush1.bf16.msra.mxu0 0
  %161 = vmatprep.subr.bf16.mxu0 0
  %162 = vmatpush1.bf16.msra.mxu0 0
  %163 = vmatprep.subr.bf16.mxu0 0
  %164 = vmatpush1.bf16.msra.mxu0 %v123
  %165 = vmatprep.subr.bf16.mxu0 0
  %166 = vmatpush1.bf16.msra.mxu0 %v122
  %167 = vmatprep.subr.bf16.mxu0 0
  %168 = vmatpush2.bf16.msra.mxu0 0
  %169 = vmatprep.subr.bf16.mxu0 0
  %170 = vmatpush2.bf16.msra.mxu0 0
  %171 = vmatprep.subr.bf16.mxu0 0
  %172 = vmatpush2.bf16.msra.mxu0 0
  %173 = vmatprep.subr.bf16.mxu0 0
  %174 = vmatpush2.bf16.msra.mxu0 0
  %175 = vmatprep.subr.bf16.mxu0 0
  %176 = vmatpush2.bf16.msra.mxu0 0
  %177 = vmatprep.subr.bf16.mxu0 0
  %178 = vmatpush2.bf16.msra.mxu0 0
  %179 = vmatprep.subr.bf16.mxu0 0
  %180 = vmatpush2.bf16.msra.mxu0 0
  %181 = vmatprep.subr.bf16.mxu0 0
  %182 = vmatpush2.bf16.msra.mxu0 0
  %183 = vmatprep.mubr.bf16.mxu0 0
  %184 = vmatmul.mubr.bf16.gmra.mxu0 %v128
  %v185 = vpop.f32.mrf.mxu0
  %v186 = vadd.f32 0.0, %v185
  %v187 = vpop.f32.mrf.mxu0
  %v188 = vpop.f32.mrf.mxu0
  %v189 = vadd.f32 0.0, %v188
  %v190 = vpop.f32.mrf.mxu0
  %191 = vmatprep.mubr.bf16.mxu0 0
  %192 = vmatmul.mubr.bf16.gmra.mxu0 %v131
  %v193 = vpop.f32.mrf.mxu0
  %v194 = vadd.f32 0.0, %v193
  %v195 = vpop.f32.mrf.mxu0
  %v196 = vpop.f32.mrf.mxu0
  %v197 = vadd.f32 0.0, %v196
  %v198 = vpop.f32.mrf.mxu0
  %199 = vmatprep.mubr.bf16.mxu0 0
  %200 = vmatmul.mubr.bf16.gmra.mxu0 %v134
  %v201 = vpop.f32.mrf.mxu0
  %v202 = vadd.f32 0.0, %v201
  %v203 = vpop.f32.mrf.mxu0
  %v204 = vpop.f32.mrf.mxu0
  %v205 = vadd.f32 0.0, %v204
  %v206 = vpop.f32.mrf.mxu0
  %207 = vmatprep.mubr.bf16.mxu0 0
  %208 = vmatmul.mubr.bf16.gmra.mxu0 %v137
  %v209 = vpop.f32.mrf.mxu0
  %v210 = vadd.f32 0.0, %v209
  %v211 = vpop.f32.mrf.mxu0
  %v212 = vpop.f32.mrf.mxu0
  %v213 = vadd.f32 0.0, %v212
  %v214 = vpop.f32.mrf.mxu0
  %215 = vmatprep.mubr.bf16.mxu0 0
  %216 = vmatmul.mubr.bf16.gmra.mxu0 %v140
  %v217 = vpop.f32.mrf.mxu0
  %v218 = vadd.f32 0.0, %v217
  %v219 = vpop.f32.mrf.mxu0
  %v220 = vpop.f32.mrf.mxu0
  %v221 = vadd.f32 0.0, %v220
  %v222 = vpop.f32.mrf.mxu0
  %223 = vmatprep.mubr.bf16.mxu0 0
  %224 = vmatmul.mubr.bf16.gmra.mxu0 %v143
  %v225 = vpop.f32.mrf.mxu0
  %v226 = vadd.f32 0.0, %v225
  %v227 = vpop.f32.mrf.mxu0
  %v228 = vpop.f32.mrf.mxu0
  %v229 = vadd.f32 0.0, %v228
  %v230 = vpop.f32.mrf.mxu0
  %231 = vmatprep.mubr.bf16.mxu0 0
  %232 = vmatmul.mubr.bf16.gmra.mxu0 %v146
  %v233 = vpop.f32.mrf.mxu0
  %v234 = vadd.f32 0.0, %v233
  %v235 = vpop.f32.mrf.mxu0
  %v236 = vpop.f32.mrf.mxu0
  %v237 = vadd.f32 0.0, %v236
  %v238 = vpop.f32.mrf.mxu0
  %239 = vmatprep.mubr.bf16.mxu0 0
  %240 = vmatmul.mubr.bf16.gmra.mxu0 %v149
  %v241 = vpop.f32.mrf.mxu0
  %v242 = vadd.f32 0.0, %v241
  %v243 = vpop.f32.mrf.mxu0
  %v244 = vpop.f32.mrf.mxu0
  %v245 = vadd.f32 0.0, %v244
  %v246 = vpop.f32.mrf.mxu0
  %247 = vdwg.mxu0
  %v248 = vadd.f32 %v38, %v186
  %v249 = vadd.f32 %v39, %v189
  %v250 = vadd.f32 %v40, %v194
  %v251 = vadd.f32 %v41, %v197
  %v252 = vadd.f32 %v42, %v202
  %v253 = vadd.f32 %v43, %v205
  %v254 = vadd.f32 %v44, %v210
  %v255 = vadd.f32 %v45, %v213
  %v256 = vadd.f32 %v46, %v218
  %v257 = vadd.f32 %v47, %v221
  %v258 = vadd.f32 %v48, %v226
  %v259 = vadd.f32 %v49, %v229
  %v260 = vadd.f32 %v50, %v234
  %v261 = vadd.f32 %v51, %v237
  %v262 = vadd.f32 %v52, %v242
  %v263 = vadd.f32 %v53, %v245
  %264 = vst [vmem:[#allocation2] sm:$0xff] %v248
  %265 = vst [vmem:[#allocation2 + $0x8] sm:$0xff] %v249
  %266 = vst [vmem:[#allocation2 + $0x10] sm:$0xff] %v250
  %267 = vst [vmem:[#allocation2 + $0x18] sm:$0xff] %v251
  %268 = vst [vmem:[#allocation2 + $0x20] sm:$0xff] %v252
  %269 = vst [vmem:[#allocation2 + $0x28] sm:$0xff] %v253
  %270 = vst [vmem:[#allocation2 + $0x30] sm:$0xff] %v254
  %271 = vst [vmem:[#allocation2 + $0x38] sm:$0xff] %v255
  %272 = vst [vmem:[#allocation2 + $0x40] sm:$0xff] %v256
  %273 = vst [vmem:[#allocation2 + $0x48] sm:$0xff] %v257
  %274 = vst [vmem:[#allocation2 + $0x50] sm:$0xff] %v258
  %275 = vst [vmem:[#allocation2 + $0x58] sm:$0xff] %v259
  %276 = vst [vmem:[#allocation2 + $0x60] sm:$0xff] %v260
  %277 = vst [vmem:[#allocation2 + $0x68] sm:$0xff] %v261
  %278 = vst [vmem:[#allocation2 + $0x70] sm:$0xff] %v262
  %279 = vst [vmem:[#allocation2 + $0x78] sm:$0xff] %v263
  // Predicated region
  $region22: #{bottleneck_forward.6} parent=0 // pred_check
    %p280 = pneg %p18
  $region23: #{bottleneck_forward.6} parent=0 // pred_check_branch
    %282 = sbr.rel (%p280) target = $region25
  $region24: #{bottleneck_forward.6} parent=0 // pred_region
    %v283 = vld [vmem:[#allocation2] sm:$0xff]
    %v284 = vld [vmem:[#allocation2 + $0x8] sm:$0xff]
    %v285 = vld [vmem:[#allocation2 + $0x10] sm:$0xff]
    %v286 = vld [vmem:[#allocation2 + $0x18] sm:$0xff]
    %v287 = vld [vmem:[#allocation2 + $0x20] sm:$0xff]
    %v288 = vld [vmem:[#allocation2 + $0x28] sm:$0xff]
    %v289 = vld [vmem:[#allocation2 + $0x30] sm:$0xff]
    %v290 = vld [vmem:[#allocation2 + $0x38] sm:$0xff]
    %v291 = vld [vmem:[#allocation2 + $0x40] sm:$0xff]
    %v292 = vld [vmem:[#allocation2 + $0x48] sm:$0xff]
    %v293 = vld [vmem:[#allocation2 + $0x50] sm:$0xff]
    %v294 = vld [vmem:[#allocation2 + $0x58] sm:$0xff]
    %v295 = vld [vmem:[#allocation2 + $0x60] sm:$0xff]
    %v296 = vld [vmem:[#allocation2 + $0x68] sm:$0xff]
    %v297 = vld [vmem:[#allocation2 + $0x70] sm:$0xff]
    %v298 = vld [vmem:[#allocation2 + $0x78] sm:$0xff]
    %v299 = vld [vmem:[%s2] sm:$0x1]
    %v301 = vlaneseq
    %v302 = vshrl.u32 %v301, 7
    %v303 = vsub.s32 0, %v302
    %v304 = vrot.slane %v299, %v303
    %v306 = vmul.f32 %v283, %v304
    %v307 = vmul.f32 %v284, %v304
    %v308 = vmul.f32 %v285, %v304
    %v309 = vmul.f32 %v286, %v304
    %v310 = vmul.f32 %v287, %v304
    %v311 = vmul.f32 %v288, %v304
    %v312 = vmul.f32 %v289, %v304
    %v313 = vmul.f32 %v290, %v304
    %v314 = vmul.f32 %v291, %v304
    %v315 = vmul.f32 %v292, %v304
    %v316 = vmul.f32 %v293, %v304
    %v317 = vmul.f32 %v294, %v304
    %v318 = vmul.f32 %v295, %v304
    %v319 = vmul.f32 %v296, %v304
    %v320 = vmul.f32 %v297, %v304
    %v321 = vmul.f32 %v298, %v304
    %v322 = vld [vmem:[%s3] sm:$0x1]
    %v324 = vlaneseq
    %v325 = vshrl.u32 %v324, 7
    %v326 = vsub.s32 0, %v325
    %v327 = vrot.slane %v322, %v326
    %v329 = vadd.f32 %v306, %v327
    %v330 = vadd.f32 %v307, %v327
    %v331 = vadd.f32 %v308, %v327
    %v332 = vadd.f32 %v309, %v327
    %v333 = vadd.f32 %v310, %v327
    %v334 = vadd.f32 %v311, %v327
    %v335 = vadd.f32 %v312, %v327
    %v336 = vadd.f32 %v313, %v327
    %v337 = vadd.f32 %v314, %v327
    %v338 = vadd.f32 %v315, %v327
    %v339 = vadd.f32 %v316, %v327
    %v340 = vadd.f32 %v317, %v327
    %v341 = vadd.f32 %v318, %v327
    %v342 = vadd.f32 %v319, %v327
    %v343 = vadd.f32 %v320, %v327
    %v344 = vadd.f32 %v321, %v327
    %v345 = vpack.c.bf16 %v330, %v329
    %v346 = vpack.c.bf16 %v332, %v331
    %v347 = vpack.c.bf16 %v334, %v333
    %v348 = vpack.c.bf16 %v336, %v335
    %v349 = vpack.c.bf16 %v338, %v337
    %v350 = vpack.c.bf16 %v340, %v339
    %v351 = vpack.c.bf16 %v342, %v341
    %v352 = vpack.c.bf16 %v344, %v343
    %v361 = vunpack.c.l.b16 %v345
    %v362 = vunpack.c.h.b16 %v345
    %v363 = vunpack.c.l.b16 %v346
    %v364 = vunpack.c.h.b16 %v346
    %v365 = vunpack.c.l.b16 %v347
    %v366 = vunpack.c.h.b16 %v347
    %v367 = vunpack.c.l.b16 %v348
    %v368 = vunpack.c.h.b16 %v348
    %v369 = vunpack.c.l.b16 %v349
    %v370 = vunpack.c.h.b16 %v349
    %v371 = vunpack.c.l.b16 %v350
    %v372 = vunpack.c.h.b16 %v350
    %v373 = vunpack.c.l.b16 %v351
    %v374 = vunpack.c.h.b16 %v351
    %v375 = vunpack.c.l.b16 %v352
    %v376 = vunpack.c.h.b16 %v352
    %v377 = vpack.c.b16 %v361, %v361
    %v378 = vpack.c.b16 %v362, %v362
    %v379 = vpack.c.b16 %v363, %v363
    %v380 = vpack.c.b16 %v364, %v364
    %v381 = vpack.c.b16 %v365, %v365
    %v382 = vpack.c.b16 %v366, %v366
    %v383 = vpack.c.b16 %v367, %v367
    %v384 = vpack.c.b16 %v368, %v368
    %v385 = vpack.c.b16 %v369, %v369
    %v386 = vpack.c.b16 %v370, %v370
    %v387 = vpack.c.b16 %v371, %v371
    %v388 = vpack.c.b16 %v372, %v372
    %v389 = vpack.c.b16 %v373, %v373
    %v390 = vpack.c.b16 %v374, %v374
    %v391 = vpack.c.b16 %v375, %v375
    %v392 = vpack.c.b16 %v376, %v376
    %409 = vst [vmem:[%s4] sm:$0xf] %v377
    %410 = vst [vmem:[%s4 + $0x4] sm:$0xf] %v378
    %411 = vst [vmem:[%s4 + $0x8] sm:$0xf] %v379
    %412 = vst [vmem:[%s4 + $0xc] sm:$0xf] %v380
    %413 = vst [vmem:[%s4 + $0x10] sm:$0xf] %v381
    %414 = vst [vmem:[%s4 + $0x14] sm:$0xf] %v382
    %415 = vst [vmem:[%s4 + $0x18] sm:$0xf] %v383
    %416 = vst [vmem:[%s4 + $0x1c] sm:$0xf] %v384
    %417 = vst [vmem:[%s4 + $0x20] sm:$0xf] %v385
    %418 = vst [vmem:[%s4 + $0x24] sm:$0xf] %v386
    %419 = vst [vmem:[%s4 + $0x28] sm:$0xf] %v387
    %420 = vst [vmem:[%s4 + $0x2c] sm:$0xf] %v388
    %421 = vst [vmem:[%s4 + $0x30] sm:$0xf] %v389
    %422 = vst [vmem:[%s4 + $0x34] sm:$0xf] %v390
    %423 = vst [vmem:[%s4 + $0x38] sm:$0xf] %v391
    %424 = vst [vmem:[%s4 + $0x3c] sm:$0xf] %v392
  $region25: #{bottleneck_forward.6} parent=0 // pred_fallthru
    _
  // Predicated region
  $region26: #{bottleneck_forward.6} parent=0 // pred_check
    _
  $region27: #{bottleneck_forward.6} parent=0 // pred_check_branch
    %426 = sbr.rel (0) target = $region29
  $region28: #{bottleneck_forward.6} parent=0 // pred_region
    _
  $region29: #{bottleneck_forward.6} parent=0 // pred_fallthru
    _
  // Predicated region
  $region30: #{bottleneck_forward.6} parent=0 // pred_check
    _
  $region31: #{bottleneck_forward.6} parent=0 // pred_check_branch
    %428 = sbr.rel (0) target = $region33
  $region32: #{bottleneck_forward.6} parent=0 // pred_region
    _
  $region33: #{bottleneck_forward.6} parent=0 // pred_fallthru
    _

// kernel: bottleneck_forward.7
$region0: #{bottleneck_forward.7}
  #allocation0 [shape = 'u32[]', space=smem, size = 0x4, offset = 0x4, fixed_abs, tag = 'smem constant byte address 0x4 - core index']
  #allocation1 [shape = 'u32[144,128]{1,0:T(1,128)}', space=vmem, size = 0x12000, scoped, tag = 'internal scratch']
  #allocation2 [shape = 'f32[128,128]{1,0:T(8,128)}', space=vmem, size = 0x10000, scoped, tag = 'scratch operand']
  %s0 = inlined_call_operand.vmem [shape: bf16[128,16], index: 0, kind: input, shape index: {}]
  %s1 = inlined_call_operand.vmem [shape: bf16[16,128], index: 1, kind: input, shape index: {}]
  %s2 = inlined_call_operand.vmem [shape: f32[1,128], index: 2, kind: input, shape index: {}]
  %s3 = inlined_call_operand.vmem [shape: f32[1,128], index: 3, kind: input, shape index: {}]
  %s4 = inlined_call_operand.vmem [shape: bf16[128,128], index: 4, kind: input, shape index: {}]
  %s5 = inlined_call_operand.hbm [shape: f32[128,128], index: 5, kind: output, shape index: {}]
  %s6 = sld [smem:[#allocation0]]
  $region38: #{bottleneck_forward.7} parent=0
    _
  %s8 = ssub.s32 1, %s6
  %s9 = scalar_select 0, %s8, %s6
  $region1: #{bottleneck_forward.7} parent=0
    #allocation3 [shape = 'u8[65536]{0}', space=vmem, size = 0x10000, scoped, tag = 'output window, operand 0, single buffered']
    #allocation4 [shape = 's32[1]{0}', space=sflag, size = 0x4, scoped, tag = 'scoped memory for bottleneck_forward.7']
    %10 = vsyncpa [#allocation4], 0
    // Predicated region
    $region2: #{bottleneck_forward.7} parent=1 // pred_check
      _
    $region3: #{bottleneck_forward.7} parent=1 // pred_check_branch
      %12 = sbr.rel (0) target = $region5
    $region4: #{bottleneck_forward.7} parent=1 // pred_region
      _
    $region5: #{bottleneck_forward.7} parent=1 // pred_fallthru
      _
    // Predicated region
    $region6: #{bottleneck_forward.7} parent=1 // pred_check
      _
    $region7: #{bottleneck_forward.7} parent=1 // pred_check_branch
      %14 = sbr.rel (0) target = $region9
    $region8: #{bottleneck_forward.7} parent=1 // pred_region
      _
    $region9: #{bottleneck_forward.7} parent=1 // pred_fallthru
      _
    // Predicated region
    $region10: #{bottleneck_forward.7} parent=1 // pred_check
      _
    $region11: #{bottleneck_forward.7} parent=1 // pred_check_branch
      %16 = sbr.rel (0) target = $region13
    $region12: #{bottleneck_forward.7} parent=1 // pred_region
      _
    $region13: #{bottleneck_forward.7} parent=1 // pred_fallthru
      _
    // Predicated region
    $region14: #{bottleneck_forward.7} parent=1 // pred_check
      _
    $region15: #{bottleneck_forward.7} parent=1 // pred_check_branch
      %18 = sbr.rel (0) target = $region17
    $region16: #{bottleneck_forward.7} parent=1 // pred_region
      _
    $region17: #{bottleneck_forward.7} parent=1 // pred_fallthru
      _
    // Predicated region
    $region18: #{bottleneck_forward.7} parent=1 // pred_check
      _
    $region19: #{bottleneck_forward.7} parent=1 // pred_check_branch
      %20 = sbr.rel (0) target = $region21
    $region20: #{bottleneck_forward.7} parent=1 // pred_region
      _
    $region21: #{bottleneck_forward.7} parent=1 // pred_fallthru
      _
    %p22 = scmp.eq.s32.totalorder 0, 0
    // Predicated region
    $region22: #{bottleneck_forward.7} parent=1 // pred_check
      %p23 = pneg %p22
    $region23: #{bottleneck_forward.7} parent=1 // pred_check_branch
      %25 = sbr.rel (%p23) target = $region25
    $region24: #{bottleneck_forward.7} parent=1 // pred_region
      %26 = vst [vmem:[#allocation2] sm:$0xff] 0.0
      %27 = vst [vmem:[#allocation2 + $0x8] sm:$0xff] 0.0
      %28 = vst [vmem:[#allocation2 + $0x10] sm:$0xff] 0.0
      %29 = vst [vmem:[#allocation2 + $0x18] sm:$0xff] 0.0
      %30 = vst [vmem:[#allocation2 + $0x20] sm:$0xff] 0.0
      %31 = vst [vmem:[#allocation2 + $0x28] sm:$0xff] 0.0
      %32 = vst [vmem:[#allocation2 + $0x30] sm:$0xff] 0.0
      %33 = vst [vmem:[#allocation2 + $0x38] sm:$0xff] 0.0
      %34 = vst [vmem:[#allocation2 + $0x40] sm:$0xff] 0.0
      %35 = vst [vmem:[#allocation2 + $0x48] sm:$0xff] 0.0
      %36 = vst [vmem:[#allocation2 + $0x50] sm:$0xff] 0.0
      %37 = vst [vmem:[#allocation2 + $0x58] sm:$0xff] 0.0
      %38 = vst [vmem:[#allocation2 + $0x60] sm:$0xff] 0.0
      %39 = vst [vmem:[#allocation2 + $0x68] sm:$0xff] 0.0
      %40 = vst [vmem:[#allocation2 + $0x70] sm:$0xff] 0.0
      %41 = vst [vmem:[#allocation2 + $0x78] sm:$0xff] 0.0
    $region25: #{bottleneck_forward.7} parent=1 // pred_fallthru
      _
    %v42 = vld [vmem:[#allocation2] sm:$0xff]
    %v43 = vld [vmem:[#allocation2 + $0x8] sm:$0xff]
    %v44 = vld [vmem:[#allocation2 + $0x10] sm:$0xff]
    %v45 = vld [vmem:[#allocation2 + $0x18] sm:$0xff]
    %v46 = vld [vmem:[#allocation2 + $0x20] sm:$0xff]
    %v47 = vld [vmem:[#allocation2 + $0x28] sm:$0xff]
    %v48 = vld [vmem:[#allocation2 + $0x30] sm:$0xff]
    %v49 = vld [vmem:[#allocation2 + $0x38] sm:$0xff]
    %v50 = vld [vmem:[#allocation2 + $0x40] sm:$0xff]
    %v51 = vld [vmem:[#allocation2 + $0x48] sm:$0xff]
    %v52 = vld [vmem:[#allocation2 + $0x50] sm:$0xff]
    %v53 = vld [vmem:[#allocation2 + $0x58] sm:$0xff]
    %v54 = vld [vmem:[#allocation2 + $0x60] sm:$0xff]
    %v55 = vld [vmem:[#allocation2 + $0x68] sm:$0xff]
    %v56 = vld [vmem:[#allocation2 + $0x70] sm:$0xff]
    %v57 = vld [vmem:[#allocation2 + $0x78] sm:$0xff]
    %v58 = vld [vmem:[%s0] sm:$0xf]
    %v59 = vld [vmem:[%s0 + $0x4] sm:$0xf]
    %v60 = vld [vmem:[%s0 + $0x8] sm:$0xf]
    %v61 = vld [vmem:[%s0 + $0xc] sm:$0xf]
    %v62 = vld [vmem:[%s0 + $0x10] sm:$0xf]
    %v63 = vld [vmem:[%s0 + $0x14] sm:$0xf]
    %v64 = vld [vmem:[%s0 + $0x18] sm:$0xf]
    %v65 = vld [vmem:[%s0 + $0x1c] sm:$0xf]
    %v66 = vld [vmem:[%s0 + $0x20] sm:$0xf]
    %v67 = vld [vmem:[%s0 + $0x24] sm:$0xf]
    %v68 = vld [vmem:[%s0 + $0x28] sm:$0xf]
    %v69 = vld [vmem:[%s0 + $0x2c] sm:$0xf]
    %v70 = vld [vmem:[%s0 + $0x30] sm:$0xf]
    %v71 = vld [vmem:[%s0 + $0x34] sm:$0xf]
    %v72 = vld [vmem:[%s0 + $0x38] sm:$0xf]
    %v73 = vld [vmem:[%s0 + $0x3c] sm:$0xf]
    %v74 = vld [vmem:[%s1] sm:$0xf]
    %v75 = vld [vmem:[%s1 + $0x4] sm:$0xf]
    %v92 = vunpack.c.l.b16 %v58
    %v93 = vunpack.c.l.b16 %v59
    %v94 = vunpack.c.l.b16 %v60
    %v95 = vunpack.c.l.b16 %v61
    %v96 = vunpack.c.l.b16 %v62
    %v97 = vunpack.c.l.b16 %v63
    %v98 = vunpack.c.l.b16 %v64
    %v99 = vunpack.c.l.b16 %v65
    %v100 = vunpack.c.l.b16 %v66
    %v101 = vunpack.c.l.b16 %v67
    %v102 = vunpack.c.l.b16 %v68
    %v103 = vunpack.c.l.b16 %v69
    %v104 = vunpack.c.l.b16 %v70
    %v105 = vunpack.c.l.b16 %v71
    %v106 = vunpack.c.l.b16 %v72
    %v107 = vunpack.c.l.b16 %v73
    %v108 = vpack.c.b16 %v93, %v92
    %v109 = vpack.c.b16 %v95, %v94
    %v110 = vpack.c.b16 %v97, %v96
    %v111 = vpack.c.b16 %v99, %v98
    %v112 = vpack.c.b16 %v101, %v100
    %v113 = vpack.c.b16 %v103, %v102
    %v114 = vpack.c.b16 %v105, %v104
    %v115 = vpack.c.b16 %v107, %v106
    %v118 = vunpack.c.l.b16 %v74
    %v119 = vunpack.c.l.b16 %v75
    %v120 = vpack.c.b16 %v119, %v118
    %vm122 = vcmask 130048
    %v124 = vsel %vm122, %v108, 0
    %v127 = vsel %vm122, %v109, 0
    %v130 = vsel %vm122, %v110, 0
    %v133 = vsel %vm122, %v111, 0
    %v136 = vsel %vm122, %v112, 0
    %v139 = vsel %vm122, %v113, 0
    %v142 = vsel %vm122, %v114, 0
    %v145 = vsel %vm122, %v115, 0
    %147 = vmatprep.subr.bf16.mxu0 0
    %148 = vmatpush1.bf16.msra.mxu0 0
    %149 = vmatprep.subr.bf16.mxu0 0
    %150 = vmatpush1.bf16.msra.mxu0 0
    %151 = vmatprep.subr.bf16.mxu0 0
    %152 = vmatpush1.bf16.msra.mxu0 0
    %153 = vmatprep.subr.bf16.mxu0 0
    %154 = vmatpush1.bf16.msra.mxu0 0
    %155 = vmatprep.subr.bf16.mxu0 0
    %156 = vmatpush1.bf16.msra.mxu0 0
    %157 = vmatprep.subr.bf16.mxu0 0
    %158 = vmatpush1.bf16.msra.mxu0 0
    %159 = vmatprep.subr.bf16.mxu0 0
    %160 = vmatpush1.bf16.msra.mxu0 0
    %161 = vmatprep.subr.bf16.mxu0 0
    %162 = vmatpush1.bf16.msra.mxu0 %v120
    %163 = vmatprep.subr.bf16.mxu0 0
    %164 = vmatpush2.bf16.msra.mxu0 0
    %165 = vmatprep.subr.bf16.mxu0 0
    %166 = vmatpush2.bf16.msra.mxu0 0
    %167 = vmatprep.subr.bf16.mxu0 0
    %168 = vmatpush2.bf16.msra.mxu0 0
    %169 = vmatprep.subr.bf16.mxu0 0
    %170 = vmatpush2.bf16.msra.mxu0 0
    %171 = vmatprep.subr.bf16.mxu0 0
    %172 = vmatpush2.bf16.msra.mxu0 0
    %173 = vmatprep.subr.bf16.mxu0 0
    %174 = vmatpush2.bf16.msra.mxu0 0
    %175 = vmatprep.subr.bf16.mxu0 0
    %176 = vmatpush2.bf16.msra.mxu0 0
    %177 = vmatprep.subr.bf16.mxu0 0
    %178 = vmatpush2.bf16.msra.mxu0 0
    %179 = vmatprep.mubr.bf16.mxu0 0
    %180 = vmatmul.mubr.bf16.gmra.mxu0 %v124
    %v181 = vpop.f32.mrf.mxu0
    %v182 = vadd.f32 0.0, %v181
    %v183 = vpop.f32.mrf.mxu0
    %v184 = vpop.f32.mrf.mxu0
    %v185 = vadd.f32 0.0, %v184
    %v186 = vpop.f32.mrf.mxu0
    %187 = vmatprep.mubr.bf16.mxu0 0
    %188 = vmatmul.mubr.bf16.gmra.mxu0 %v127
    %v189 = vpop.f32.mrf.mxu0
    %v190 = vadd.f32 0.0, %v189
    %v191 = vpop.f32.mrf.mxu0
    %v192 = vpop.f32.mrf.mxu0
    %v193 = vadd.f32 0.0, %v192
    %v194 = vpop.f32.mrf.mxu0
    %195 = vmatprep.mubr.bf16.mxu0 0
    %196 = vmatmul.mubr.bf16.gmra.mxu0 %v130
    %v197 = vpop.f32.mrf.mxu0
    %v198 = vadd.f32 0.0, %v197
    %v199 = vpop.f32.mrf.mxu0
    %v200 = vpop.f32.mrf.mxu0
    %v201 = vadd.f32 0.0, %v200
    %v202 = vpop.f32.mrf.mxu0
    %203 = vmatprep.mubr.bf16.mxu0 0
    %204 = vmatmul.mubr.bf16.gmra.mxu0 %v133
    %v205 = vpop.f32.mrf.mxu0
    %v206 = vadd.f32 0.0, %v205
    %v207 = vpop.f32.mrf.mxu0
    %v208 = vpop.f32.mrf.mxu0
    %v209 = vadd.f32 0.0, %v208
    %v210 = vpop.f32.mrf.mxu0
    %211 = vmatprep.mubr.bf16.mxu0 0
    %212 = vmatmul.mubr.bf16.gmra.mxu0 %v136
    %v213 = vpop.f32.mrf.mxu0
    %v214 = vadd.f32 0.0, %v213
    %v215 = vpop.f32.mrf.mxu0
    %v216 = vpop.f32.mrf.mxu0
    %v217 = vadd.f32 0.0, %v216
    %v218 = vpop.f32.mrf.mxu0
    %219 = vmatprep.mubr.bf16.mxu0 0
    %220 = vmatmul.mubr.bf16.gmra.mxu0 %v139
    %v221 = vpop.f32.mrf.mxu0
    %v222 = vadd.f32 0.0, %v221
    %v223 = vpop.f32.mrf.mxu0
    %v224 = vpop.f32.mrf.mxu0
    %v225 = vadd.f32 0.0, %v224
    %v226 = vpop.f32.mrf.mxu0
    %227 = vmatprep.mubr.bf16.mxu0 0
    %228 = vmatmul.mubr.bf16.gmra.mxu0 %v142
    %v229 = vpop.f32.mrf.mxu0
    %v230 = vadd.f32 0.0, %v229
    %v231 = vpop.f32.mrf.mxu0
    %v232 = vpop.f32.mrf.mxu0
    %v233 = vadd.f32 0.0, %v232
    %v234 = vpop.f32.mrf.mxu0
    %235 = vmatprep.mubr.bf16.mxu0 0
    %236 = vmatmul.mubr.bf16.gmra.mxu0 %v145
    %v237 = vpop.f32.mrf.mxu0
    %v238 = vadd.f32 0.0, %v237
    %v239 = vpop.f32.mrf.mxu0
    %v240 = vpop.f32.mrf.mxu0
    %v241 = vadd.f32 0.0, %v240
    %v242 = vpop.f32.mrf.mxu0
    %243 = vdwg.mxu0
    %v244 = vadd.f32 %v42, %v182
    %v245 = vadd.f32 %v43, %v185
    %v246 = vadd.f32 %v44, %v190
    %v247 = vadd.f32 %v45, %v193
    %v248 = vadd.f32 %v46, %v198
    %v249 = vadd.f32 %v47, %v201
    %v250 = vadd.f32 %v48, %v206
    %v251 = vadd.f32 %v49, %v209
    %v252 = vadd.f32 %v50, %v214
    %v253 = vadd.f32 %v51, %v217
    %v254 = vadd.f32 %v52, %v222
    %v255 = vadd.f32 %v53, %v225
    %v256 = vadd.f32 %v54, %v230
    %v257 = vadd.f32 %v55, %v233
    %v258 = vadd.f32 %v56, %v238
    %v259 = vadd.f32 %v57, %v241
    %260 = vst [vmem:[#allocation2] sm:$0xff] %v244
    %261 = vst [vmem:[#allocation2 + $0x8] sm:$0xff] %v245
    %262 = vst [vmem:[#allocation2 + $0x10] sm:$0xff] %v246
    %263 = vst [vmem:[#allocation2 + $0x18] sm:$0xff] %v247
    %264 = vst [vmem:[#allocation2 + $0x20] sm:$0xff] %v248
    %265 = vst [vmem:[#allocation2 + $0x28] sm:$0xff] %v249
    %266 = vst [vmem:[#allocation2 + $0x30] sm:$0xff] %v250
    %267 = vst [vmem:[#allocation2 + $0x38] sm:$0xff] %v251
    %268 = vst [vmem:[#allocation2 + $0x40] sm:$0xff] %v252
    %269 = vst [vmem:[#allocation2 + $0x48] sm:$0xff] %v253
    %270 = vst [vmem:[#allocation2 + $0x50] sm:$0xff] %v254
    %271 = vst [vmem:[#allocation2 + $0x58] sm:$0xff] %v255
    %272 = vst [vmem:[#allocation2 + $0x60] sm:$0xff] %v256
    %273 = vst [vmem:[#allocation2 + $0x68] sm:$0xff] %v257
    %274 = vst [vmem:[#allocation2 + $0x70] sm:$0xff] %v258
    %275 = vst [vmem:[#allocation2 + $0x78] sm:$0xff] %v259
    // Predicated region
    $region26: #{bottleneck_forward.7} parent=1 // pred_check
      %p276 = pneg %p22
    $region27: #{bottleneck_forward.7} parent=1 // pred_check_branch
      %278 = sbr.rel (%p276) target = $region29
    $region28: #{bottleneck_forward.7} parent=1 // pred_region
      %v279 = vld [vmem:[#allocation2] sm:$0xff]
      %v280 = vld [vmem:[#allocation2 + $0x8] sm:$0xff]
      %v281 = vld [vmem:[#allocation2 + $0x10] sm:$0xff]
      %v282 = vld [vmem:[#allocation2 + $0x18] sm:$0xff]
      %v283 = vld [vmem:[#allocation2 + $0x20] sm:$0xff]
      %v284 = vld [vmem:[#allocation2 + $0x28] sm:$0xff]
      %v285 = vld [vmem:[#allocation2 + $0x30] sm:$0xff]
      %v286 = vld [vmem:[#allocation2 + $0x38] sm:$0xff]
      %v287 = vld [vmem:[#allocation2 + $0x40] sm:$0xff]
      %v288 = vld [vmem:[#allocation2 + $0x48] sm:$0xff]
      %v289 = vld [vmem:[#allocation2 + $0x50] sm:$0xff]
      %v290 = vld [vmem:[#allocation2 + $0x58] sm:$0xff]
      %v291 = vld [vmem:[#allocation2 + $0x60] sm:$0xff]
      %v292 = vld [vmem:[#allocation2 + $0x68] sm:$0xff]
      %v293 = vld [vmem:[#allocation2 + $0x70] sm:$0xff]
      %v294 = vld [vmem:[#allocation2 + $0x78] sm:$0xff]
      %v295 = vld [vmem:[%s2] sm:$0x1]
      %v297 = vlaneseq
      %v298 = vshrl.u32 %v297, 7
      %v299 = vsub.s32 0, %v298
      %v300 = vrot.slane %v295, %v299
      %v302 = vmul.f32 %v279, %v300
      %v303 = vmul.f32 %v280, %v300
      %v304 = vmul.f32 %v281, %v300
      %v305 = vmul.f32 %v282, %v300
      %v306 = vmul.f32 %v283, %v300
      %v307 = vmul.f32 %v284, %v300
      %v308 = vmul.f32 %v285, %v300
      %v309 = vmul.f32 %v286, %v300
      %v310 = vmul.f32 %v287, %v300
      %v311 = vmul.f32 %v288, %v300
      %v312 = vmul.f32 %v289, %v300
      %v313 = vmul.f32 %v290, %v300
      %v314 = vmul.f32 %v291, %v300
      %v315 = vmul.f32 %v292, %v300
      %v316 = vmul.f32 %v293, %v300
      %v317 = vmul.f32 %v294, %v300
      %v318 = vld [vmem:[%s3] sm:$0x1]
      %v320 = vlaneseq
      %v321 = vshrl.u32 %v320, 7
      %v322 = vsub.s32 0, %v321
      %v323 = vrot.slane %v318, %v322
      %v325 = vadd.f32 %v302, %v323
      %v326 = vadd.f32 %v303, %v323
      %v327 = vadd.f32 %v304, %v323
      %v328 = vadd.f32 %v305, %v323
      %v329 = vadd.f32 %v306, %v323
      %v330 = vadd.f32 %v307, %v323
      %v331 = vadd.f32 %v308, %v323
      %v332 = vadd.f32 %v309, %v323
      %v333 = vadd.f32 %v310, %v323
      %v334 = vadd.f32 %v311, %v323
      %v335 = vadd.f32 %v312, %v323
      %v336 = vadd.f32 %v313, %v323
      %v337 = vadd.f32 %v314, %v323
      %v338 = vadd.f32 %v315, %v323
      %v339 = vadd.f32 %v316, %v323
      %v340 = vadd.f32 %v317, %v323
      %v341 = vld [vmem:[%s4] sm:$0xf]
      %v342 = vld [vmem:[%s4 + $0x4] sm:$0xf]
      %v343 = vld [vmem:[%s4 + $0x8] sm:$0xf]
      %v344 = vld [vmem:[%s4 + $0xc] sm:$0xf]
      %v345 = vld [vmem:[%s4 + $0x10] sm:$0xf]
      %v346 = vld [vmem:[%s4 + $0x14] sm:$0xf]
      %v347 = vld [vmem:[%s4 + $0x18] sm:$0xf]
      %v348 = vld [vmem:[%s4 + $0x1c] sm:$0xf]
      %v349 = vld [vmem:[%s4 + $0x20] sm:$0xf]
      %v350 = vld [vmem:[%s4 + $0x24] sm:$0xf]
      %v351 = vld [vmem:[%s4 + $0x28] sm:$0xf]
      %v352 = vld [vmem:[%s4 + $0x2c] sm:$0xf]
      %v353 = vld [vmem:[%s4 + $0x30] sm:$0xf]
      %v354 = vld [vmem:[%s4 + $0x34] sm:$0xf]
      %v355 = vld [vmem:[%s4 + $0x38] sm:$0xf]
      %v356 = vld [vmem:[%s4 + $0x3c] sm:$0xf]
      %v357 = vunpack.c.l.bf16 %v341
      %v358 = vunpack.c.l.bf16 %v342
      %v359 = vunpack.c.l.bf16 %v343
      %v360 = vunpack.c.l.bf16 %v344
      %v361 = vunpack.c.l.bf16 %v345
      %v362 = vunpack.c.l.bf16 %v346
      %v363 = vunpack.c.l.bf16 %v347
      %v364 = vunpack.c.l.bf16 %v348
      %v365 = vunpack.c.l.bf16 %v349
      %v366 = vunpack.c.l.bf16 %v350
      %v367 = vunpack.c.l.bf16 %v351
      %v368 = vunpack.c.l.bf16 %v352
      %v369 = vunpack.c.l.bf16 %v353
      %v370 = vunpack.c.l.bf16 %v354
      %v371 = vunpack.c.l.bf16 %v355
      %v372 = vunpack.c.l.bf16 %v356
      %v373 = vadd.f32 %v325, %v357
      %v374 = vadd.f32 %v326, %v358
      %v375 = vadd.f32 %v327, %v359
      %v376 = vadd.f32 %v328, %v360
      %v377 = vadd.f32 %v329, %v361
      %v378 = vadd.f32 %v330, %v362
      %v379 = vadd.f32 %v331, %v363
      %v380 = vadd.f32 %v332, %v364
      %v381 = vadd.f32 %v333, %v365
      %v382 = vadd.f32 %v334, %v366
      %v383 = vadd.f32 %v335, %v367
      %v384 = vadd.f32 %v336, %v368
      %v385 = vadd.f32 %v337, %v369
      %v386 = vadd.f32 %v338, %v370
      %v387 = vadd.f32 %v339, %v371
      %v388 = vadd.f32 %v340, %v372
      %v389 = vmax.f32 %v373, 0.0
      %v390 = vmax.f32 %v374, 0.0
      %v391 = vmax.f32 %v375, 0.0
      %v392 = vmax.f32 %v376, 0.0
      %v393 = vmax.f32 %v377, 0.0
      %v394 = vmax.f32 %v378, 0.0
      %v395 = vmax.f32 %v379, 0.0
      %v396 = vmax.f32 %v380, 0.0
      %v397 = vmax.f32 %v381, 0.0
      %v398 = vmax.f32 %v382, 0.0
      %v399 = vmax.f32 %v383, 0.0
      %v400 = vmax.f32 %v384, 0.0
      %v401 = vmax.f32 %v385, 0.0
      %v402 = vmax.f32 %v386, 0.0
      %v403 = vmax.f32 %v387, 0.0
      %v404 = vmax.f32 %v388, 0.0
      %405 = vst [vmem:[#allocation3] sm:$0xff] %v389
      %406 = vst [vmem:[#allocation3 + $0x8] sm:$0xff] %v390
      %407 = vst [vmem:[#allocation3 + $0x10] sm:$0xff] %v391
      %408 = vst [vmem:[#allocation3 + $0x18] sm:$0xff] %v392
      %409 = vst [vmem:[#allocation3 + $0x20] sm:$0xff] %v393
      %410 = vst [vmem:[#allocation3 + $0x28] sm:$0xff] %v394
      %411 = vst [vmem:[#allocation3 + $0x30] sm:$0xff] %v395
      %412 = vst [vmem:[#allocation3 + $0x38] sm:$0xff] %v396
      %413 = vst [vmem:[#allocation3 + $0x40] sm:$0xff] %v397
      %414 = vst [vmem:[#allocation3 + $0x48] sm:$0xff] %v398
      %415 = vst [vmem:[#allocation3 + $0x50] sm:$0xff] %v399
      %416 = vst [vmem:[#allocation3 + $0x58] sm:$0xff] %v400
      %417 = vst [vmem:[#allocation3 + $0x60] sm:$0xff] %v401
      %418 = vst [vmem:[#allocation3 + $0x68] sm:$0xff] %v402
      %419 = vst [vmem:[#allocation3 + $0x70] sm:$0xff] %v403
      %420 = vst [vmem:[#allocation3 + $0x78] sm:$0xff] %v404
    $region29: #{bottleneck_forward.7} parent=1 // pred_fallthru
      _
    // Predicated region
    $region30: #{bottleneck_forward.7} parent=1 // pred_check
      _
    $region31: #{bottleneck_forward.7} parent=1 // pred_check_branch
      %422 = sbr.rel (0) target = $region33
    $region32: #{bottleneck_forward.7} parent=1 // pred_region
      %s424 = ssub.s32 2048, 2048
      %425 = vsyncadd [#allocation4], %s424
      %s426 = sshll.u32 [#allocation3], 4
      %s427 = int_to_ptr.vmem [resolvable:$true] %s426
      %432 = dma.vmem_to_hbm [thread:$0]  %s427, 2048, %s5, [#allocation4], 128, 128, 8
    $region33: #{bottleneck_forward.7} parent=1 // pred_fallthru
      _
    // Predicated region
    $region34: #{bottleneck_forward.7} parent=1 // pred_check
      _
    $region35: #{bottleneck_forward.7} parent=1 // pred_check_branch
      %434 = sbr.rel (0) target = $region37
    $region36: #{bottleneck_forward.7} parent=1 // pred_region
      %435 = dma.done [#allocation4], 2048
    $region37: #{bottleneck_forward.7} parent=1 // pred_fallthru
      _
    %436 = vsyncpa [#allocation4], 1

</llo_original>
